<compile_context>
chip_gen: v6e
topology: v6e:2x2x1
jax: 0.10.0
libtpu: 0.0.40
codegen_flags: <defaults>
</compile_context>

<pallas_src>
import functools

import jax
import jax.numpy as jnp
from jax import lax
from jax.experimental import pallas as pl
from jax.experimental.pallas import tpu as pltpu


def _round_up(x, m):
    return (x + m - 1) // m * m


def _vmem_limit_bytes(cin_p, lpad, cout, tm, compute_dtype, out_dtype):
    """Per-step VMEM footprint + margin, capped well under v7x's 64 MiB."""
    cb = jnp.dtype(compute_dtype).itemsize
    ob = jnp.dtype(out_dtype).itemsize
    ring = 4 * cin_p * lpad * cb                       # manual-DMA plane ring
    weights = 2 * 27 * max(cout, 8) * 128 * cb         # lane-padded, 2-buffered
    affine = 4 * max(cout, 8) * 128 * 4                # scale + shift
    out_buf = 2 * cout * tm * ob                       # double-buffered out tile
    work = 4 * cout * tm * 4 + 8 * cin_p * (tm + 512) * cb   # acc + window temps
    total = ring + weights + affine + out_buf + work
    return int(min(32 * 1024 * 1024,
                   max(16 * 1024 * 1024, 2 * total + 4 * 1024 * 1024)))


def _conv_bn_lrelu_kernel(x_hbm, w_ref, scale_ref, shift_ref, o_ref,
                          planes, sem, *, Wp2, TM, TMW, n_depth, n_mtiles,
                          neg_slope):
    """One grid step = one (batch n, output depth d, spatial tile m).

    x_hbm:     (N, D+2, Cin_p, Lpad)  zero-padded input, raw HBM ref (pl.ANY)
    w_ref:     (27, Cout, Cin_p)      unscaled conv weights, tap-major (kd,kh,kw)
    scale_ref: (Cout, 1) f32          folded BN scale  gamma / sqrt(var + eps)
    shift_ref: (Cout, 1) f32          folded BN shift  beta - mean * scale
    o_ref:     (1, 1, Cout, TM)       lane-dense output tile; column j = h*(W+2)+w
    planes:    (4, Cin_p, Lpad) VMEM  ring buffer of padded depth planes
    sem:       (4,) DMA semaphores    one per ring slot
    """
    n = pl.program_id(0)
    d = pl.program_id(1)
    m = pl.program_id(2)

    def plane_copy(plane_idx, slot):
        return pltpu.make_async_copy(x_hbm.at[n, plane_idx], planes.at[slot],
                                     sem.at[slot])

    at_head = m == 0

    # ---- ring-buffer management: runs once per (n, d), at m == 0 ------------
    @pl.when(jnp.logical_and(d == 0, at_head))
    def _prime():
        # New batch: (re)load the first three padded planes, prefetch the 4th.
        for p in range(3):
            plane_copy(p, p).start()
        for p in range(3):
            plane_copy(p, p).wait()
        if n_depth > 1:
            plane_copy(3, 3).start()

    @pl.when(jnp.logical_and(d > 0, at_head))
    def _advance():
        # Plane d+2 was started one depth step ago into slot (d+2) % 4.
        plane_copy(d + 2, lax.rem(d + 2, 4)).wait()

    @pl.when(jnp.logical_and(jnp.logical_and(d > 0, d < n_depth - 1), at_head))
    def _prefetch():
        # Overwrite the slot of the no-longer-needed plane d-1 with plane d+3;
        # the DMA overlaps the compute of depth d and is waited at depth d+1.
        plane_copy(d + 3, lax.rem(d + 3, 4)).start()

    # ---- compute: 27 per-tap MXU dots, f32 accumulation, no im2col concat ----
    cout = o_ref.shape[2]
    if n_mtiles == 1:
        base = 0                                   # fully static window (small M)
    else:
        base = pl.multiple_of(m * TM, 128)         # 128-aligned dynamic start
    acc = jnp.zeros((cout, TM), jnp.float32)
    for kd in range(3):
        slot = lax.rem(d + kd, 4)
        # One aligned window load per plane; the 9 (kh, kw) taps are cheap static
        # slices of this value (lane shifts), fed straight into the MXU.
        win = planes[slot, :, pl.ds(base, TMW)]    # (Cin_p, TM + halo)
        for kh in range(3):
            for kw in range(3):
                off = kh * Wp2 + kw
                tap = win[:, off:off + TM]         # (Cin_p, TM)
                acc = acc + jnp.dot(w_ref[kd * 9 + kh * 3 + kw], tap,
                                    preferred_element_type=jnp.float32)

    y = acc * scale_ref[...] + shift_ref[...]      # f32 BN affine epilogue
    y = jnp.where(y >= 0, y, neg_slope * y)        # LeakyReLU(0.01) (InPlaceABN)
    o_ref[0, 0, :, :] = y.astype(o_ref.dtype)


def conv_bn_relu_3d(x_ncdhw, weight_oidhw, gamma, beta, running_mean, running_var,
                    eps=1e-5, compute_dtype=jnp.bfloat16, out_dtype=jnp.float32,
                    neg_slope=0.01, max_tm=2048):
    """Forward pass of ConvBnReLU3D (eval-mode InPlaceABN).

    x_ncdhw:       (N, Cin, D, H, W)      PyTorch layout
    weight_oidhw:  (Cout, Cin, 3, 3, 3)   PyTorch Conv3d weight layout
    returns:       (N, Cout, D, H, W)     out_dtype
    """
    N, Cin, D, H, W = x_ncdhw.shape
    Cout = weight_oidhw.shape[0]
    Hp2, Wp2 = H + 2, W + 2

    # Channel padding to the sublane pack of the compute dtype (8 f32 / 16 bf16).
    pack = 8 * (4 // jnp.dtype(compute_dtype).itemsize)
    Cin_p = _round_up(Cin, pack)

    # Spatial tiling of the flattened padded plane.  Output column j = h*(W+2)+w
    # (columns with w >= W are garbage and cropped in glue).  TM is sized so the
    # (Cout, TM) f32 accumulator stays within a few vregs.
    M = H * Wp2
    tm_budget = max(256, min(max_tm, (65536 // (Cout * 4)) // 128 * 128))
    if M <= tm_budget:
        TM, MT = _round_up(M, 128), 1
    else:
        TM, MT = tm_budget, pl.cdiv(M, tm_budget)
    Mp = MT * TM
    halo = _round_up(2 * Wp2 + 2, 128)     # covers the largest tap offset (kh=kw=2)
    TMW = TM + halo                        # per-plane window loaded per tile
    Lpad = Mp + halo                       # flat padded-plane length

    # --- eval-mode BN folded to per-channel f32 scale/shift (NOT folded into the
    #     compute-dtype weights, to keep weight mantissa bits) ---
    scale_vec = (gamma / jnp.sqrt(running_var + eps)).astype(jnp.float32)
    shift_vec = (beta - running_mean * scale_vec).astype(jnp.float32)
    scale = scale_vec.reshape(Cout, 1)
    shift = shift_vec.reshape(Cout, 1)

    # --- weights: (Cout,Cin,3,3,3) -> (27, Cout, Cin_p), tap-major (kd,kh,kw) ---
    w = jnp.transpose(weight_oidhw.astype(jnp.float32), (2, 3, 4, 0, 1))
    w = jnp.pad(w, ((0, 0),) * 4 + ((0, Cin_p - Cin),))
    w_taps = w.reshape(27, Cout, Cin_p).astype(compute_dtype)

    # --- input: NCDHW -> (N, D+2, Cin_p, Lpad): zero-pad depth/channels/spatial,
    #     flatten each padded plane.
    # TODO(synk): fold this pad/transpose (and the crop/transpose below) into the
    #             kernel / chain layers in this layout to drop the extra HBM passes.
    x = jnp.transpose(x_ncdhw, (0, 2, 1, 3, 4))                          # (N,D,Cin,H,W)
    x = jnp.pad(x, ((0, 0), (1, 1), (0, Cin_p - Cin), (1, 1), (1, 1)))   # (N,D+2,Cin_p,Hp2,Wp2)
    x = x.reshape(N, D + 2, Cin_p, Hp2 * Wp2)
    x = jnp.pad(x, ((0, 0), (0, 0), (0, 0), (0, Lpad - Hp2 * Wp2)))
    x_flat = x.astype(compute_dtype)

    kernel = functools.partial(
        _conv_bn_lrelu_kernel, Wp2=Wp2, TM=TM, TMW=TMW,
        n_depth=D, n_mtiles=MT, neg_slope=neg_slope)

    out_flat = pl.pallas_call(
        kernel,
        out_shape=jax.ShapeDtypeStruct((N, D, Cout, Mp), out_dtype),
        grid_spec=pltpu.PrefetchScalarGridSpec(
            num_scalar_prefetch=0,
            grid=(N, D, MT),
            in_specs=[
                # Raw HBM ref; planes are DMA'd manually into the ring buffer
                # (single HBM read of the input instead of a 3x halo re-read).
                pl.BlockSpec(memory_space=pl.ANY),
                # Constant, grid-resident weights / BN affine (index maps never
                # change, so Pallas copies them in once; single-buffering them via
                # pipeline_mode would only save ~100 KB).
                pl.BlockSpec((27, Cout, Cin_p), lambda n, d, m: (0, 0, 0)),
                pl.BlockSpec((Cout, 1), lambda n, d, m: (0, 0)),
                pl.BlockSpec((Cout, 1), lambda n, d, m: (0, 0)),
            ],
            out_specs=pl.BlockSpec((1, 1, Cout, TM), lambda n, d, m: (n, d, 0, m)),
            scratch_shapes=[
                pltpu.VMEM((4, Cin_p, Lpad), compute_dtype),   # plane ring buffer
                pltpu.SemaphoreType.DMA((4,)),                 # one sem per slot
            ]),
        compiler_params=pltpu.CompilerParams(
            # Depth (ring reuse) and spatial tiles are sequential; only the batch
            # axis may be split across TensorCores.
            dimension_semantics=("parallel", "arbitrary", "arbitrary"),
            vmem_limit_bytes=_vmem_limit_bytes(Cin_p, Lpad, Cout, TM,
                                               compute_dtype, out_dtype)),
    )(x_flat, w_taps, scale, shift)

    # --- glue: drop garbage columns (w >= W) / Mp tail, back to NCDHW layout ---
    out = out_flat[..., :M].reshape(N, D, Cout, H, Wp2)[..., :W]         # (N,D,Cout,H,W)
    return jnp.transpose(out, (0, 2, 1, 3, 4))                           # (N,Cout,D,H,W)


def _reference(x_ncdhw, weight, gamma, beta, running_mean, running_var, eps=1e-5):
    y = jax.lax.conv_general_dilated(
        x_ncdhw, weight,
        window_strides=(1, 1, 1),
        padding=((1, 1), (1, 1), (1, 1)),
        dimension_numbers=("NCDHW", "OIDHW", "NCDHW"),
        precision=jax.lax.Precision.HIGHEST)
    scale = gamma / jnp.sqrt(running_var + eps)
    shift = beta - running_mean * scale
    y = y * scale[None, :, None, None, None] + shift[None, :, None, None, None]
    return jnp.where(y >= 0, y, 0.01 * y)


if __name__ == "__main__":
    # Small deterministic problem: N=2, Cin=4, Cout=8, D=8, H=W=16 (H, W multiples
    # of 8, as CostRegNet's forward expects).
    N, Cin, Cout, D, H, W = 2, 4, 8, 8, 16, 16
    key = jax.random.PRNGKey(0)
    kx, kw, kg, kb, km, kv = jax.random.split(key, 6)

    x = jax.random.normal(kx, (N, Cin, D, H, W), dtype=jnp.float32)
    weight = jax.random.normal(kw, (Cout, Cin, 3, 3, 3), dtype=jnp.float32) * 0.1
    gamma = 1.0 + 0.1 * jax.random.normal(kg, (Cout,), dtype=jnp.float32)
    beta = 0.1 * jax.random.normal(kb, (Cout,), dtype=jnp.float32)
    running_mean = 0.1 * jax.random.normal(km, (Cout,), dtype=jnp.float32)
    running_var = 0.5 + jnp.abs(jax.random.normal(kv, (Cout,), dtype=jnp.float32))

    ref = _reference(x, weight, gamma, beta, running_mean, running_var)

    # Exact path (f32 MXU operands, f32 output) — tight check vs. the reference.
    out_f32 = conv_bn_relu_3d(x, weight, gamma, beta, running_mean, running_var,
                              compute_dtype=jnp.float32, out_dtype=jnp.float32)
    out_f32 = jax.block_until_ready(out_f32)
    assert out_f32.shape == (N, Cout, D, H, W)
    assert jnp.allclose(out_f32, ref, atol=1e-3, rtol=1e-3), \
        "f32 kernel mismatch vs reference"

    # Fast path (bf16 MXU operands, f32 accumulation, bf16 output for chaining).
    out_bf16 = conv_bn_relu_3d(x, weight, gamma, beta, running_mean, running_var,
                               compute_dtype=jnp.bfloat16, out_dtype=jnp.bfloat16)
    out_bf16 = jax.block_until_ready(out_bf16)
    assert out_bf16.shape == (N, Cout, D, H, W)
    assert jnp.allclose(out_bf16.astype(jnp.float32), ref, atol=5e-2, rtol=5e-2), \
        "bf16 kernel mismatch vs reference"

    print("KERNEL_OK")
</pallas_src>

<mosaic_0001>
module attributes {stable_mosaic.version = 11 : i64} {
  func.func @_conv_bn_lrelu_kernel(%arg0: i32, %arg1: i32, %arg2: i32, %arg3: memref<2x10x8x512xf32, #tpu.memory_space<any>>, %arg4: memref<27x8x8xf32, #tpu.memory_space<vmem>>, %arg5: memref<8x1xf32, #tpu.memory_space<vmem>>, %arg6: memref<8x1xf32, #tpu.memory_space<vmem>>, %arg7: memref<1x1x8x384xf32, #tpu.memory_space<vmem>>, %arg8: memref<4x8x512xf32, #tpu.memory_space<vmem>>, %arg9: memref<4x!tpu.dma_semaphore, #tpu.memory_space<semaphore_mem>>) attributes {dimension_semantics = [#tpu.dimension_semantics<parallel>, #tpu.dimension_semantics<arbitrary>, #tpu.dimension_semantics<arbitrary>], iteration_bounds = array<i64: 2, 8, 1>, scalar_prefetch = 0 : i64, scratch_operands = 2 : i64, tpu.core_type = #tpu.core_type<tc>, window_params = [{}, {pipeline_mode = #tpu.pipeline_mode<synchronous>, transform_indices = @transform_1, window_bounds = array<i64: 27, 8, 8>}, {pipeline_mode = #tpu.pipeline_mode<synchronous>, transform_indices = @transform_2, window_bounds = array<i64: 8, 1>}, {pipeline_mode = #tpu.pipeline_mode<synchronous>, transform_indices = @transform_3, window_bounds = array<i64: 8, 1>}, {transform_indices = @transform_4, window_bounds = array<i64: 1, 1, 8, 384>}]} {
    %c0_i32 = arith.constant 0 : i32
    %0 = arith.cmpi eq, %arg2, %c0_i32 : i32
    %c0_i32_0 = arith.constant 0 : i32
    %1 = arith.cmpi eq, %arg1, %c0_i32_0 : i32
    %2 = arith.andi %1, %0 : i1
    %3 = arith.extui %2 : i1 to i32
    %c0_i32_1 = arith.constant 0 : i32
    %4 = arith.cmpi ne, %3, %c0_i32_1 : i32
    scf.if %4 {
      %c0_i32_106 = arith.constant 0 : i32
      %c0_i32_107 = arith.constant 0 : i32
      %c0_i32_108 = arith.constant 0 : i32
      %c0_i32_109 = arith.constant 0 : i32
      %c0_i32_110 = arith.constant 0 : i32
      %180 = tpu.memref_slice %arg3[%arg0, %c0_i32_106, %c0_i32_109, %c0_i32_110] : memref<2x10x8x512xf32, #tpu.memory_space<any>> -> memref<1x1x8x512xf32, #tpu.memory_space<any>>
      %181 = tpu.memref_squeeze %180 : memref<1x1x8x512xf32, #tpu.memory_space<any>> -> memref<8x512xf32, #tpu.memory_space<any>>
      %c0_i32_111 = arith.constant 0 : i32
      %c0_i32_112 = arith.constant 0 : i32
      %182 = tpu.memref_slice %arg8[%c0_i32_107, %c0_i32_111, %c0_i32_112] : memref<4x8x512xf32, #tpu.memory_space<vmem>> -> memref<1x8x512xf32, #tpu.memory_space<vmem>>
      %183 = tpu.memref_squeeze %182 : memref<1x8x512xf32, #tpu.memory_space<vmem>> -> memref<8x512xf32, #tpu.memory_space<vmem>>
      %184 = tpu.memref_slice %arg9[%c0_i32_108] : memref<4x!tpu.dma_semaphore, #tpu.memory_space<semaphore_mem>> -> memref<1x!tpu.dma_semaphore, #tpu.memory_space<semaphore_mem>>
      %185 = tpu.memref_squeeze %184 : memref<1x!tpu.dma_semaphore, #tpu.memory_space<semaphore_mem>> -> memref<!tpu.dma_semaphore, #tpu.memory_space<semaphore_mem>>
      tpu.enqueue_dma source(%181 : memref<8x512xf32, #tpu.memory_space<any>>) target(%183 : memref<8x512xf32, #tpu.memory_space<vmem>>) target_semaphore(%185 : memref<!tpu.dma_semaphore, #tpu.memory_space<semaphore_mem>>)
      %c1_i32_113 = arith.constant 1 : i32
      %c1_i32_114 = arith.constant 1 : i32
      %c1_i32_115 = arith.constant 1 : i32
      %c0_i32_116 = arith.constant 0 : i32
      %c0_i32_117 = arith.constant 0 : i32
      %186 = tpu.memref_slice %arg3[%arg0, %c1_i32_113, %c0_i32_116, %c0_i32_117] : memref<2x10x8x512xf32, #tpu.memory_space<any>> -> memref<1x1x8x512xf32, #tpu.memory_space<any>>
      %187 = tpu.memref_squeeze %186 : memref<1x1x8x512xf32, #tpu.memory_space<any>> -> memref<8x512xf32, #tpu.memory_space<any>>
      %c0_i32_118 = arith.constant 0 : i32
      %c0_i32_119 = arith.constant 0 : i32
      %188 = tpu.memref_slice %arg8[%c1_i32_114, %c0_i32_118, %c0_i32_119] : memref<4x8x512xf32, #tpu.memory_space<vmem>> -> memref<1x8x512xf32, #tpu.memory_space<vmem>>
      %189 = tpu.memref_squeeze %188 : memref<1x8x512xf32, #tpu.memory_space<vmem>> -> memref<8x512xf32, #tpu.memory_space<vmem>>
      %190 = tpu.memref_slice %arg9[%c1_i32_115] : memref<4x!tpu.dma_semaphore, #tpu.memory_space<semaphore_mem>> -> memref<1x!tpu.dma_semaphore, #tpu.memory_space<semaphore_mem>>
      %191 = tpu.memref_squeeze %190 : memref<1x!tpu.dma_semaphore, #tpu.memory_space<semaphore_mem>> -> memref<!tpu.dma_semaphore, #tpu.memory_space<semaphore_mem>>
      tpu.enqueue_dma source(%187 : memref<8x512xf32, #tpu.memory_space<any>>) target(%189 : memref<8x512xf32, #tpu.memory_space<vmem>>) target_semaphore(%191 : memref<!tpu.dma_semaphore, #tpu.memory_space<semaphore_mem>>)
      %c2_i32_120 = arith.constant 2 : i32
      %c2_i32_121 = arith.constant 2 : i32
      %c2_i32_122 = arith.constant 2 : i32
      %c0_i32_123 = arith.constant 0 : i32
      %c0_i32_124 = arith.constant 0 : i32
      %192 = tpu.memref_slice %arg3[%arg0, %c2_i32_120, %c0_i32_123, %c0_i32_124] : memref<2x10x8x512xf32, #tpu.memory_space<any>> -> memref<1x1x8x512xf32, #tpu.memory_space<any>>
      %193 = tpu.memref_squeeze %192 : memref<1x1x8x512xf32, #tpu.memory_space<any>> -> memref<8x512xf32, #tpu.memory_space<any>>
      %c0_i32_125 = arith.constant 0 : i32
      %c0_i32_126 = arith.constant 0 : i32
      %194 = tpu.memref_slice %arg8[%c2_i32_121, %c0_i32_125, %c0_i32_126] : memref<4x8x512xf32, #tpu.memory_space<vmem>> -> memref<1x8x512xf32, #tpu.memory_space<vmem>>
      %195 = tpu.memref_squeeze %194 : memref<1x8x512xf32, #tpu.memory_space<vmem>> -> memref<8x512xf32, #tpu.memory_space<vmem>>
      %196 = tpu.memref_slice %arg9[%c2_i32_122] : memref<4x!tpu.dma_semaphore, #tpu.memory_space<semaphore_mem>> -> memref<1x!tpu.dma_semaphore, #tpu.memory_space<semaphore_mem>>
      %197 = tpu.memref_squeeze %196 : memref<1x!tpu.dma_semaphore, #tpu.memory_space<semaphore_mem>> -> memref<!tpu.dma_semaphore, #tpu.memory_space<semaphore_mem>>
      tpu.enqueue_dma source(%193 : memref<8x512xf32, #tpu.memory_space<any>>) target(%195 : memref<8x512xf32, #tpu.memory_space<vmem>>) target_semaphore(%197 : memref<!tpu.dma_semaphore, #tpu.memory_space<semaphore_mem>>)
      %c0_i32_127 = arith.constant 0 : i32
      %c0_i32_128 = arith.constant 0 : i32
      %c0_i32_129 = arith.constant 0 : i32
      %c0_i32_130 = arith.constant 0 : i32
      %c0_i32_131 = arith.constant 0 : i32
      %198 = tpu.memref_slice %arg3[%arg0, %c0_i32_127, %c0_i32_130, %c0_i32_131] : memref<2x10x8x512xf32, #tpu.memory_space<any>> -> memref<1x1x8x512xf32, #tpu.memory_space<any>>
      %199 = tpu.memref_squeeze %198 : memref<1x1x8x512xf32, #tpu.memory_space<any>> -> memref<8x512xf32, #tpu.memory_space<any>>
      %c0_i32_132 = arith.constant 0 : i32
      %c0_i32_133 = arith.constant 0 : i32
      %200 = tpu.memref_slice %arg8[%c0_i32_128, %c0_i32_132, %c0_i32_133] : memref<4x8x512xf32, #tpu.memory_space<vmem>> -> memref<1x8x512xf32, #tpu.memory_space<vmem>>
      %201 = tpu.memref_squeeze %200 : memref<1x8x512xf32, #tpu.memory_space<vmem>> -> memref<8x512xf32, #tpu.memory_space<vmem>>
      %202 = tpu.memref_slice %arg9[%c0_i32_129] : memref<4x!tpu.dma_semaphore, #tpu.memory_space<semaphore_mem>> -> memref<1x!tpu.dma_semaphore, #tpu.memory_space<semaphore_mem>>
      %203 = tpu.memref_squeeze %202 : memref<1x!tpu.dma_semaphore, #tpu.memory_space<semaphore_mem>> -> memref<!tpu.dma_semaphore, #tpu.memory_space<semaphore_mem>>
      tpu.wait_dma2 semaphore(%203 : memref<!tpu.dma_semaphore, #tpu.memory_space<semaphore_mem>>) src(%199 : memref<8x512xf32, #tpu.memory_space<any>>) dst(%201 : memref<8x512xf32, #tpu.memory_space<vmem>>)
      %c1_i32_134 = arith.constant 1 : i32
      %c1_i32_135 = arith.constant 1 : i32
      %c1_i32_136 = arith.constant 1 : i32
      %c0_i32_137 = arith.constant 0 : i32
      %c0_i32_138 = arith.constant 0 : i32
      %204 = tpu.memref_slice %arg3[%arg0, %c1_i32_134, %c0_i32_137, %c0_i32_138] : memref<2x10x8x512xf32, #tpu.memory_space<any>> -> memref<1x1x8x512xf32, #tpu.memory_space<any>>
      %205 = tpu.memref_squeeze %204 : memref<1x1x8x512xf32, #tpu.memory_space<any>> -> memref<8x512xf32, #tpu.memory_space<any>>
      %c0_i32_139 = arith.constant 0 : i32
      %c0_i32_140 = arith.constant 0 : i32
      %206 = tpu.memref_slice %arg8[%c1_i32_135, %c0_i32_139, %c0_i32_140] : memref<4x8x512xf32, #tpu.memory_space<vmem>> -> memref<1x8x512xf32, #tpu.memory_space<vmem>>
      %207 = tpu.memref_squeeze %206 : memref<1x8x512xf32, #tpu.memory_space<vmem>> -> memref<8x512xf32, #tpu.memory_space<vmem>>
      %208 = tpu.memref_slice %arg9[%c1_i32_136] : memref<4x!tpu.dma_semaphore, #tpu.memory_space<semaphore_mem>> -> memref<1x!tpu.dma_semaphore, #tpu.memory_space<semaphore_mem>>
      %209 = tpu.memref_squeeze %208 : memref<1x!tpu.dma_semaphore, #tpu.memory_space<semaphore_mem>> -> memref<!tpu.dma_semaphore, #tpu.memory_space<semaphore_mem>>
      tpu.wait_dma2 semaphore(%209 : memref<!tpu.dma_semaphore, #tpu.memory_space<semaphore_mem>>) src(%205 : memref<8x512xf32, #tpu.memory_space<any>>) dst(%207 : memref<8x512xf32, #tpu.memory_space<vmem>>)
      %c2_i32_141 = arith.constant 2 : i32
      %c2_i32_142 = arith.constant 2 : i32
      %c2_i32_143 = arith.constant 2 : i32
      %c0_i32_144 = arith.constant 0 : i32
      %c0_i32_145 = arith.constant 0 : i32
      %210 = tpu.memref_slice %arg3[%arg0, %c2_i32_141, %c0_i32_144, %c0_i32_145] : memref<2x10x8x512xf32, #tpu.memory_space<any>> -> memref<1x1x8x512xf32, #tpu.memory_space<any>>
      %211 = tpu.memref_squeeze %210 : memref<1x1x8x512xf32, #tpu.memory_space<any>> -> memref<8x512xf32, #tpu.memory_space<any>>
      %c0_i32_146 = arith.constant 0 : i32
      %c0_i32_147 = arith.constant 0 : i32
      %212 = tpu.memref_slice %arg8[%c2_i32_142, %c0_i32_146, %c0_i32_147] : memref<4x8x512xf32, #tpu.memory_space<vmem>> -> memref<1x8x512xf32, #tpu.memory_space<vmem>>
      %213 = tpu.memref_squeeze %212 : memref<1x8x512xf32, #tpu.memory_space<vmem>> -> memref<8x512xf32, #tpu.memory_space<vmem>>
      %214 = tpu.memref_slice %arg9[%c2_i32_143] : memref<4x!tpu.dma_semaphore, #tpu.memory_space<semaphore_mem>> -> memref<1x!tpu.dma_semaphore, #tpu.memory_space<semaphore_mem>>
      %215 = tpu.memref_squeeze %214 : memref<1x!tpu.dma_semaphore, #tpu.memory_space<semaphore_mem>> -> memref<!tpu.dma_semaphore, #tpu.memory_space<semaphore_mem>>
      tpu.wait_dma2 semaphore(%215 : memref<!tpu.dma_semaphore, #tpu.memory_space<semaphore_mem>>) src(%211 : memref<8x512xf32, #tpu.memory_space<any>>) dst(%213 : memref<8x512xf32, #tpu.memory_space<vmem>>)
      %c3_i32 = arith.constant 3 : i32
      %c3_i32_148 = arith.constant 3 : i32
      %c3_i32_149 = arith.constant 3 : i32
      %c0_i32_150 = arith.constant 0 : i32
      %c0_i32_151 = arith.constant 0 : i32
      %216 = tpu.memref_slice %arg3[%arg0, %c3_i32, %c0_i32_150, %c0_i32_151] : memref<2x10x8x512xf32, #tpu.memory_space<any>> -> memref<1x1x8x512xf32, #tpu.memory_space<any>>
      %217 = tpu.memref_squeeze %216 : memref<1x1x8x512xf32, #tpu.memory_space<any>> -> memref<8x512xf32, #tpu.memory_space<any>>
      %c0_i32_152 = arith.constant 0 : i32
      %c0_i32_153 = arith.constant 0 : i32
      %218 = tpu.memref_slice %arg8[%c3_i32_148, %c0_i32_152, %c0_i32_153] : memref<4x8x512xf32, #tpu.memory_space<vmem>> -> memref<1x8x512xf32, #tpu.memory_space<vmem>>
      %219 = tpu.memref_squeeze %218 : memref<1x8x512xf32, #tpu.memory_space<vmem>> -> memref<8x512xf32, #tpu.memory_space<vmem>>
      %220 = tpu.memref_slice %arg9[%c3_i32_149] : memref<4x!tpu.dma_semaphore, #tpu.memory_space<semaphore_mem>> -> memref<1x!tpu.dma_semaphore, #tpu.memory_space<semaphore_mem>>
      %221 = tpu.memref_squeeze %220 : memref<1x!tpu.dma_semaphore, #tpu.memory_space<semaphore_mem>> -> memref<!tpu.dma_semaphore, #tpu.memory_space<semaphore_mem>>
      tpu.enqueue_dma source(%217 : memref<8x512xf32, #tpu.memory_space<any>>) target(%219 : memref<8x512xf32, #tpu.memory_space<vmem>>) target_semaphore(%221 : memref<!tpu.dma_semaphore, #tpu.memory_space<semaphore_mem>>)
    } else {
    }
    %c0_i32_2 = arith.constant 0 : i32
    %5 = arith.cmpi sgt, %arg1, %c0_i32_2 : i32
    %6 = arith.andi %5, %0 : i1
    %7 = arith.extui %6 : i1 to i32
    %c0_i32_3 = arith.constant 0 : i32
    %8 = arith.cmpi ne, %7, %c0_i32_3 : i32
    scf.if %8 {
      %c2_i32_106 = arith.constant 2 : i32
      %180 = arith.addi %arg1, %c2_i32_106 : i32
      %c2_i32_107 = arith.constant 2 : i32
      %181 = arith.addi %arg1, %c2_i32_107 : i32
      %c4_i32_108 = arith.constant 4 : i32
      %182 = arith.remsi %181, %c4_i32_108 : i32
      %c0_i32_109 = arith.constant 0 : i32
      %c0_i32_110 = arith.constant 0 : i32
      %183 = tpu.memref_slice %arg3[%arg0, %180, %c0_i32_109, %c0_i32_110] : memref<2x10x8x512xf32, #tpu.memory_space<any>> -> memref<1x1x8x512xf32, #tpu.memory_space<any>>
      %184 = tpu.memref_squeeze %183 : memref<1x1x8x512xf32, #tpu.memory_space<any>> -> memref<8x512xf32, #tpu.memory_space<any>>
      %c0_i32_111 = arith.constant 0 : i32
      %c0_i32_112 = arith.constant 0 : i32
      %185 = tpu.memref_slice %arg8[%182, %c0_i32_111, %c0_i32_112] : memref<4x8x512xf32, #tpu.memory_space<vmem>> -> memref<1x8x512xf32, #tpu.memory_space<vmem>>
      %186 = tpu.memref_squeeze %185 : memref<1x8x512xf32, #tpu.memory_space<vmem>> -> memref<8x512xf32, #tpu.memory_space<vmem>>
      %187 = tpu.memref_slice %arg9[%182] : memref<4x!tpu.dma_semaphore, #tpu.memory_space<semaphore_mem>> -> memref<1x!tpu.dma_semaphore, #tpu.memory_space<semaphore_mem>>
      %188 = tpu.memref_squeeze %187 : memref<1x!tpu.dma_semaphore, #tpu.memory_space<semaphore_mem>> -> memref<!tpu.dma_semaphore, #tpu.memory_space<semaphore_mem>>
      tpu.wait_dma2 semaphore(%188 : memref<!tpu.dma_semaphore, #tpu.memory_space<semaphore_mem>>) src(%184 : memref<8x512xf32, #tpu.memory_space<any>>) dst(%186 : memref<8x512xf32, #tpu.memory_space<vmem>>)
    } else {
    }
    %c0_i32_4 = arith.constant 0 : i32
    %9 = arith.cmpi sgt, %arg1, %c0_i32_4 : i32
    %c7_i32 = arith.constant 7 : i32
    %10 = arith.cmpi slt, %arg1, %c7_i32 : i32
    %11 = arith.andi %9, %10 : i1
    %12 = arith.andi %11, %0 : i1
    %13 = arith.extui %12 : i1 to i32
    %c0_i32_5 = arith.constant 0 : i32
    %14 = arith.cmpi ne, %13, %c0_i32_5 : i32
    scf.if %14 {
      %c3_i32 = arith.constant 3 : i32
      %180 = arith.addi %arg1, %c3_i32 : i32
      %c3_i32_106 = arith.constant 3 : i32
      %181 = arith.addi %arg1, %c3_i32_106 : i32
      %c4_i32_107 = arith.constant 4 : i32
      %182 = arith.remsi %181, %c4_i32_107 : i32
      %c0_i32_108 = arith.constant 0 : i32
      %c0_i32_109 = arith.constant 0 : i32
      %183 = tpu.memref_slice %arg3[%arg0, %180, %c0_i32_108, %c0_i32_109] : memref<2x10x8x512xf32, #tpu.memory_space<any>> -> memref<1x1x8x512xf32, #tpu.memory_space<any>>
      %184 = tpu.memref_squeeze %183 : memref<1x1x8x512xf32, #tpu.memory_space<any>> -> memref<8x512xf32, #tpu.memory_space<any>>
      %c0_i32_110 = arith.constant 0 : i32
      %c0_i32_111 = arith.constant 0 : i32
      %185 = tpu.memref_slice %arg8[%182, %c0_i32_110, %c0_i32_111] : memref<4x8x512xf32, #tpu.memory_space<vmem>> -> memref<1x8x512xf32, #tpu.memory_space<vmem>>
      %186 = tpu.memref_squeeze %185 : memref<1x8x512xf32, #tpu.memory_space<vmem>> -> memref<8x512xf32, #tpu.memory_space<vmem>>
      %187 = tpu.memref_slice %arg9[%182] : memref<4x!tpu.dma_semaphore, #tpu.memory_space<semaphore_mem>> -> memref<1x!tpu.dma_semaphore, #tpu.memory_space<semaphore_mem>>
      %188 = tpu.memref_squeeze %187 : memref<1x!tpu.dma_semaphore, #tpu.memory_space<semaphore_mem>> -> memref<!tpu.dma_semaphore, #tpu.memory_space<semaphore_mem>>
      tpu.enqueue_dma source(%184 : memref<8x512xf32, #tpu.memory_space<any>>) target(%186 : memref<8x512xf32, #tpu.memory_space<vmem>>) target_semaphore(%188 : memref<!tpu.dma_semaphore, #tpu.memory_space<semaphore_mem>>)
    } else {
    }
    %cst = arith.constant 0.000000e+00 : f32
    %15 = vector.broadcast %cst : f32 to vector<8x384xf32>
    %c0_i32_6 = arith.constant 0 : i32
    %16 = arith.addi %arg1, %c0_i32_6 : i32
    %c4_i32 = arith.constant 4 : i32
    %17 = arith.remsi %16, %c4_i32 : i32
    %18 = arith.index_cast %17 : i32 to index
    %c0 = arith.constant 0 : index
    %c0_7 = arith.constant 0 : index
    %19 = vector.load %arg8[%18, %c0, %c0_7] : memref<4x8x512xf32, #tpu.memory_space<vmem>>, vector<1x8x512xf32>
    %20 = vector.shape_cast %19 : vector<1x8x512xf32> to vector<8x512xf32>
    %21 = vector.extract_strided_slice %20 {offsets = [0, 0], sizes = [8, 384], strides = [1, 1]} : vector<8x512xf32> to vector<8x384xf32>
    %c0_8 = arith.constant 0 : index
    %c0_9 = arith.constant 0 : index
    %c0_10 = arith.constant 0 : index
    %22 = vector.load %arg4[%c0_8, %c0_9, %c0_10] : memref<27x8x8xf32, #tpu.memory_space<vmem>>, vector<1x8x8xf32>
    %23 = vector.shape_cast %22 : vector<1x8x8xf32> to vector<8x8xf32>
    %cst_11 = arith.constant dense<0.000000e+00> : vector<8x384xf32>
    %24 = tpu.matmul %23, %21, %cst_11 {dimension_numbers = #tpu.dot_dimension_numbers<[1], [0], [0], [1], [0, 0, 1, 1], [], []>} : vector<8x8xf32>, vector<8x384xf32>, vector<8x384xf32> -> vector<8x384xf32>
    %25 = arith.addf %15, %24 : vector<8x384xf32>
    %26 = vector.extract_strided_slice %20 {offsets = [0, 1], sizes = [8, 384], strides = [1, 1]} : vector<8x512xf32> to vector<8x384xf32>
    %c1 = arith.constant 1 : index
    %c0_12 = arith.constant 0 : index
    %c0_13 = arith.constant 0 : index
    %27 = vector.load %arg4[%c1, %c0_12, %c0_13] : memref<27x8x8xf32, #tpu.memory_space<vmem>>, vector<1x8x8xf32>
    %28 = vector.shape_cast %27 : vector<1x8x8xf32> to vector<8x8xf32>
    %cst_14 = arith.constant dense<0.000000e+00> : vector<8x384xf32>
    %29 = tpu.matmul %28, %26, %cst_14 {dimension_numbers = #tpu.dot_dimension_numbers<[1], [0], [0], [1], [0, 0, 1, 1], [], []>} : vector<8x8xf32>, vector<8x384xf32>, vector<8x384xf32> -> vector<8x384xf32>
    %30 = arith.addf %25, %29 : vector<8x384xf32>
    %31 = vector.extract_strided_slice %20 {offsets = [0, 2], sizes = [8, 384], strides = [1, 1]} : vector<8x512xf32> to vector<8x384xf32>
    %c2 = arith.constant 2 : index
    %c0_15 = arith.constant 0 : index
    %c0_16 = arith.constant 0 : index
    %32 = vector.load %arg4[%c2, %c0_15, %c0_16] : memref<27x8x8xf32, #tpu.memory_space<vmem>>, vector<1x8x8xf32>
    %33 = vector.shape_cast %32 : vector<1x8x8xf32> to vector<8x8xf32>
    %cst_17 = arith.constant dense<0.000000e+00> : vector<8x384xf32>
    %34 = tpu.matmul %33, %31, %cst_17 {dimension_numbers = #tpu.dot_dimension_numbers<[1], [0], [0], [1], [0, 0, 1, 1], [], []>} : vector<8x8xf32>, vector<8x384xf32>, vector<8x384xf32> -> vector<8x384xf32>
    %35 = arith.addf %30, %34 : vector<8x384xf32>
    %36 = vector.extract_strided_slice %20 {offsets = [0, 18], sizes = [8, 384], strides = [1, 1]} : vector<8x512xf32> to vector<8x384xf32>
    %c3 = arith.constant 3 : index
    %c0_18 = arith.constant 0 : index
    %c0_19 = arith.constant 0 : index
    %37 = vector.load %arg4[%c3, %c0_18, %c0_19] : memref<27x8x8xf32, #tpu.memory_space<vmem>>, vector<1x8x8xf32>
    %38 = vector.shape_cast %37 : vector<1x8x8xf32> to vector<8x8xf32>
    %cst_20 = arith.constant dense<0.000000e+00> : vector<8x384xf32>
    %39 = tpu.matmul %38, %36, %cst_20 {dimension_numbers = #tpu.dot_dimension_numbers<[1], [0], [0], [1], [0, 0, 1, 1], [], []>} : vector<8x8xf32>, vector<8x384xf32>, vector<8x384xf32> -> vector<8x384xf32>
    %40 = arith.addf %35, %39 : vector<8x384xf32>
    %41 = vector.extract_strided_slice %20 {offsets = [0, 19], sizes = [8, 384], strides = [1, 1]} : vector<8x512xf32> to vector<8x384xf32>
    %c4 = arith.constant 4 : index
    %c0_21 = arith.constant 0 : index
    %c0_22 = arith.constant 0 : index
    %42 = vector.load %arg4[%c4, %c0_21, %c0_22] : memref<27x8x8xf32, #tpu.memory_space<vmem>>, vector<1x8x8xf32>
    %43 = vector.shape_cast %42 : vector<1x8x8xf32> to vector<8x8xf32>
    %cst_23 = arith.constant dense<0.000000e+00> : vector<8x384xf32>
    %44 = tpu.matmul %43, %41, %cst_23 {dimension_numbers = #tpu.dot_dimension_numbers<[1], [0], [0], [1], [0, 0, 1, 1], [], []>} : vector<8x8xf32>, vector<8x384xf32>, vector<8x384xf32> -> vector<8x384xf32>
    %45 = arith.addf %40, %44 : vector<8x384xf32>
    %46 = vector.extract_strided_slice %20 {offsets = [0, 20], sizes = [8, 384], strides = [1, 1]} : vector<8x512xf32> to vector<8x384xf32>
    %c5 = arith.constant 5 : index
    %c0_24 = arith.constant 0 : index
    %c0_25 = arith.constant 0 : index
    %47 = vector.load %arg4[%c5, %c0_24, %c0_25] : memref<27x8x8xf32, #tpu.memory_space<vmem>>, vector<1x8x8xf32>
    %48 = vector.shape_cast %47 : vector<1x8x8xf32> to vector<8x8xf32>
    %cst_26 = arith.constant dense<0.000000e+00> : vector<8x384xf32>
    %49 = tpu.matmul %48, %46, %cst_26 {dimension_numbers = #tpu.dot_dimension_numbers<[1], [0], [0], [1], [0, 0, 1, 1], [], []>} : vector<8x8xf32>, vector<8x384xf32>, vector<8x384xf32> -> vector<8x384xf32>
    %50 = arith.addf %45, %49 : vector<8x384xf32>
    %51 = vector.extract_strided_slice %20 {offsets = [0, 36], sizes = [8, 384], strides = [1, 1]} : vector<8x512xf32> to vector<8x384xf32>
    %c6 = arith.constant 6 : index
    %c0_27 = arith.constant 0 : index
    %c0_28 = arith.constant 0 : index
    %52 = vector.load %arg4[%c6, %c0_27, %c0_28] : memref<27x8x8xf32, #tpu.memory_space<vmem>>, vector<1x8x8xf32>
    %53 = vector.shape_cast %52 : vector<1x8x8xf32> to vector<8x8xf32>
    %cst_29 = arith.constant dense<0.000000e+00> : vector<8x384xf32>
    %54 = tpu.matmul %53, %51, %cst_29 {dimension_numbers = #tpu.dot_dimension_numbers<[1], [0], [0], [1], [0, 0, 1, 1], [], []>} : vector<8x8xf32>, vector<8x384xf32>, vector<8x384xf32> -> vector<8x384xf32>
    %55 = arith.addf %50, %54 : vector<8x384xf32>
    %56 = vector.extract_strided_slice %20 {offsets = [0, 37], sizes = [8, 384], strides = [1, 1]} : vector<8x512xf32> to vector<8x384xf32>
    %c7 = arith.constant 7 : index
    %c0_30 = arith.constant 0 : index
    %c0_31 = arith.constant 0 : index
    %57 = vector.load %arg4[%c7, %c0_30, %c0_31] : memref<27x8x8xf32, #tpu.memory_space<vmem>>, vector<1x8x8xf32>
    %58 = vector.shape_cast %57 : vector<1x8x8xf32> to vector<8x8xf32>
    %cst_32 = arith.constant dense<0.000000e+00> : vector<8x384xf32>
    %59 = tpu.matmul %58, %56, %cst_32 {dimension_numbers = #tpu.dot_dimension_numbers<[1], [0], [0], [1], [0, 0, 1, 1], [], []>} : vector<8x8xf32>, vector<8x384xf32>, vector<8x384xf32> -> vector<8x384xf32>
    %60 = arith.addf %55, %59 : vector<8x384xf32>
    %61 = vector.extract_strided_slice %20 {offsets = [0, 38], sizes = [8, 384], strides = [1, 1]} : vector<8x512xf32> to vector<8x384xf32>
    %c8 = arith.constant 8 : index
    %c0_33 = arith.constant 0 : index
    %c0_34 = arith.constant 0 : index
    %62 = vector.load %arg4[%c8, %c0_33, %c0_34] : memref<27x8x8xf32, #tpu.memory_space<vmem>>, vector<1x8x8xf32>
    %63 = vector.shape_cast %62 : vector<1x8x8xf32> to vector<8x8xf32>
    %cst_35 = arith.constant dense<0.000000e+00> : vector<8x384xf32>
    %64 = tpu.matmul %63, %61, %cst_35 {dimension_numbers = #tpu.dot_dimension_numbers<[1], [0], [0], [1], [0, 0, 1, 1], [], []>} : vector<8x8xf32>, vector<8x384xf32>, vector<8x384xf32> -> vector<8x384xf32>
    %65 = arith.addf %60, %64 : vector<8x384xf32>
    %c1_i32 = arith.constant 1 : i32
    %66 = arith.addi %arg1, %c1_i32 : i32
    %c4_i32_36 = arith.constant 4 : i32
    %67 = arith.remsi %66, %c4_i32_36 : i32
    %68 = arith.index_cast %67 : i32 to index
    %c0_37 = arith.constant 0 : index
    %c0_38 = arith.constant 0 : index
    %69 = vector.load %arg8[%68, %c0_37, %c0_38] : memref<4x8x512xf32, #tpu.memory_space<vmem>>, vector<1x8x512xf32>
    %70 = vector.shape_cast %69 : vector<1x8x512xf32> to vector<8x512xf32>
    %71 = vector.extract_strided_slice %70 {offsets = [0, 0], sizes = [8, 384], strides = [1, 1]} : vector<8x512xf32> to vector<8x384xf32>
    %c9 = arith.constant 9 : index
    %c0_39 = arith.constant 0 : index
    %c0_40 = arith.constant 0 : index
    %72 = vector.load %arg4[%c9, %c0_39, %c0_40] : memref<27x8x8xf32, #tpu.memory_space<vmem>>, vector<1x8x8xf32>
    %73 = vector.shape_cast %72 : vector<1x8x8xf32> to vector<8x8xf32>
    %cst_41 = arith.constant dense<0.000000e+00> : vector<8x384xf32>
    %74 = tpu.matmul %73, %71, %cst_41 {dimension_numbers = #tpu.dot_dimension_numbers<[1], [0], [0], [1], [0, 0, 1, 1], [], []>} : vector<8x8xf32>, vector<8x384xf32>, vector<8x384xf32> -> vector<8x384xf32>
    %75 = arith.addf %65, %74 : vector<8x384xf32>
    %76 = vector.extract_strided_slice %70 {offsets = [0, 1], sizes = [8, 384], strides = [1, 1]} : vector<8x512xf32> to vector<8x384xf32>
    %c10 = arith.constant 10 : index
    %c0_42 = arith.constant 0 : index
    %c0_43 = arith.constant 0 : index
    %77 = vector.load %arg4[%c10, %c0_42, %c0_43] : memref<27x8x8xf32, #tpu.memory_space<vmem>>, vector<1x8x8xf32>
    %78 = vector.shape_cast %77 : vector<1x8x8xf32> to vector<8x8xf32>
    %cst_44 = arith.constant dense<0.000000e+00> : vector<8x384xf32>
    %79 = tpu.matmul %78, %76, %cst_44 {dimension_numbers = #tpu.dot_dimension_numbers<[1], [0], [0], [1], [0, 0, 1, 1], [], []>} : vector<8x8xf32>, vector<8x384xf32>, vector<8x384xf32> -> vector<8x384xf32>
    %80 = arith.addf %75, %79 : vector<8x384xf32>
    %81 = vector.extract_strided_slice %70 {offsets = [0, 2], sizes = [8, 384], strides = [1, 1]} : vector<8x512xf32> to vector<8x384xf32>
    %c11 = arith.constant 11 : index
    %c0_45 = arith.constant 0 : index
    %c0_46 = arith.constant 0 : index
    %82 = vector.load %arg4[%c11, %c0_45, %c0_46] : memref<27x8x8xf32, #tpu.memory_space<vmem>>, vector<1x8x8xf32>
    %83 = vector.shape_cast %82 : vector<1x8x8xf32> to vector<8x8xf32>
    %cst_47 = arith.constant dense<0.000000e+00> : vector<8x384xf32>
    %84 = tpu.matmul %83, %81, %cst_47 {dimension_numbers = #tpu.dot_dimension_numbers<[1], [0], [0], [1], [0, 0, 1, 1], [], []>} : vector<8x8xf32>, vector<8x384xf32>, vector<8x384xf32> -> vector<8x384xf32>
    %85 = arith.addf %80, %84 : vector<8x384xf32>
    %86 = vector.extract_strided_slice %70 {offsets = [0, 18], sizes = [8, 384], strides = [1, 1]} : vector<8x512xf32> to vector<8x384xf32>
    %c12 = arith.constant 12 : index
    %c0_48 = arith.constant 0 : index
    %c0_49 = arith.constant 0 : index
    %87 = vector.load %arg4[%c12, %c0_48, %c0_49] : memref<27x8x8xf32, #tpu.memory_space<vmem>>, vector<1x8x8xf32>
    %88 = vector.shape_cast %87 : vector<1x8x8xf32> to vector<8x8xf32>
    %cst_50 = arith.constant dense<0.000000e+00> : vector<8x384xf32>
    %89 = tpu.matmul %88, %86, %cst_50 {dimension_numbers = #tpu.dot_dimension_numbers<[1], [0], [0], [1], [0, 0, 1, 1], [], []>} : vector<8x8xf32>, vector<8x384xf32>, vector<8x384xf32> -> vector<8x384xf32>
    %90 = arith.addf %85, %89 : vector<8x384xf32>
    %91 = vector.extract_strided_slice %70 {offsets = [0, 19], sizes = [8, 384], strides = [1, 1]} : vector<8x512xf32> to vector<8x384xf32>
    %c13 = arith.constant 13 : index
    %c0_51 = arith.constant 0 : index
    %c0_52 = arith.constant 0 : index
    %92 = vector.load %arg4[%c13, %c0_51, %c0_52] : memref<27x8x8xf32, #tpu.memory_space<vmem>>, vector<1x8x8xf32>
    %93 = vector.shape_cast %92 : vector<1x8x8xf32> to vector<8x8xf32>
    %cst_53 = arith.constant dense<0.000000e+00> : vector<8x384xf32>
    %94 = tpu.matmul %93, %91, %cst_53 {dimension_numbers = #tpu.dot_dimension_numbers<[1], [0], [0], [1], [0, 0, 1, 1], [], []>} : vector<8x8xf32>, vector<8x384xf32>, vector<8x384xf32> -> vector<8x384xf32>
    %95 = arith.addf %90, %94 : vector<8x384xf32>
    %96 = vector.extract_strided_slice %70 {offsets = [0, 20], sizes = [8, 384], strides = [1, 1]} : vector<8x512xf32> to vector<8x384xf32>
    %c14 = arith.constant 14 : index
    %c0_54 = arith.constant 0 : index
    %c0_55 = arith.constant 0 : index
    %97 = vector.load %arg4[%c14, %c0_54, %c0_55] : memref<27x8x8xf32, #tpu.memory_space<vmem>>, vector<1x8x8xf32>
    %98 = vector.shape_cast %97 : vector<1x8x8xf32> to vector<8x8xf32>
    %cst_56 = arith.constant dense<0.000000e+00> : vector<8x384xf32>
    %99 = tpu.matmul %98, %96, %cst_56 {dimension_numbers = #tpu.dot_dimension_numbers<[1], [0], [0], [1], [0, 0, 1, 1], [], []>} : vector<8x8xf32>, vector<8x384xf32>, vector<8x384xf32> -> vector<8x384xf32>
    %100 = arith.addf %95, %99 : vector<8x384xf32>
    %101 = vector.extract_strided_slice %70 {offsets = [0, 36], sizes = [8, 384], strides = [1, 1]} : vector<8x512xf32> to vector<8x384xf32>
    %c15 = arith.constant 15 : index
    %c0_57 = arith.constant 0 : index
    %c0_58 = arith.constant 0 : index
    %102 = vector.load %arg4[%c15, %c0_57, %c0_58] : memref<27x8x8xf32, #tpu.memory_space<vmem>>, vector<1x8x8xf32>
    %103 = vector.shape_cast %102 : vector<1x8x8xf32> to vector<8x8xf32>
    %cst_59 = arith.constant dense<0.000000e+00> : vector<8x384xf32>
    %104 = tpu.matmul %103, %101, %cst_59 {dimension_numbers = #tpu.dot_dimension_numbers<[1], [0], [0], [1], [0, 0, 1, 1], [], []>} : vector<8x8xf32>, vector<8x384xf32>, vector<8x384xf32> -> vector<8x384xf32>
    %105 = arith.addf %100, %104 : vector<8x384xf32>
    %106 = vector.extract_strided_slice %70 {offsets = [0, 37], sizes = [8, 384], strides = [1, 1]} : vector<8x512xf32> to vector<8x384xf32>
    %c16 = arith.constant 16 : index
    %c0_60 = arith.constant 0 : index
    %c0_61 = arith.constant 0 : index
    %107 = vector.load %arg4[%c16, %c0_60, %c0_61] : memref<27x8x8xf32, #tpu.memory_space<vmem>>, vector<1x8x8xf32>
    %108 = vector.shape_cast %107 : vector<1x8x8xf32> to vector<8x8xf32>
    %cst_62 = arith.constant dense<0.000000e+00> : vector<8x384xf32>
    %109 = tpu.matmul %108, %106, %cst_62 {dimension_numbers = #tpu.dot_dimension_numbers<[1], [0], [0], [1], [0, 0, 1, 1], [], []>} : vector<8x8xf32>, vector<8x384xf32>, vector<8x384xf32> -> vector<8x384xf32>
    %110 = arith.addf %105, %109 : vector<8x384xf32>
    %111 = vector.extract_strided_slice %70 {offsets = [0, 38], sizes = [8, 384], strides = [1, 1]} : vector<8x512xf32> to vector<8x384xf32>
    %c17 = arith.constant 17 : index
    %c0_63 = arith.constant 0 : index
    %c0_64 = arith.constant 0 : index
    %112 = vector.load %arg4[%c17, %c0_63, %c0_64] : memref<27x8x8xf32, #tpu.memory_space<vmem>>, vector<1x8x8xf32>
    %113 = vector.shape_cast %112 : vector<1x8x8xf32> to vector<8x8xf32>
    %cst_65 = arith.constant dense<0.000000e+00> : vector<8x384xf32>
    %114 = tpu.matmul %113, %111, %cst_65 {dimension_numbers = #tpu.dot_dimension_numbers<[1], [0], [0], [1], [0, 0, 1, 1], [], []>} : vector<8x8xf32>, vector<8x384xf32>, vector<8x384xf32> -> vector<8x384xf32>
    %115 = arith.addf %110, %114 : vector<8x384xf32>
    %c2_i32 = arith.constant 2 : i32
    %116 = arith.addi %arg1, %c2_i32 : i32
    %c4_i32_66 = arith.constant 4 : i32
    %117 = arith.remsi %116, %c4_i32_66 : i32
    %118 = arith.index_cast %117 : i32 to index
    %c0_67 = arith.constant 0 : index
    %c0_68 = arith.constant 0 : index
    %119 = vector.load %arg8[%118, %c0_67, %c0_68] : memref<4x8x512xf32, #tpu.memory_space<vmem>>, vector<1x8x512xf32>
    %120 = vector.shape_cast %119 : vector<1x8x512xf32> to vector<8x512xf32>
    %121 = vector.extract_strided_slice %120 {offsets = [0, 0], sizes = [8, 384], strides = [1, 1]} : vector<8x512xf32> to vector<8x384xf32>
    %c18 = arith.constant 18 : index
    %c0_69 = arith.constant 0 : index
    %c0_70 = arith.constant 0 : index
    %122 = vector.load %arg4[%c18, %c0_69, %c0_70] : memref<27x8x8xf32, #tpu.memory_space<vmem>>, vector<1x8x8xf32>
    %123 = vector.shape_cast %122 : vector<1x8x8xf32> to vector<8x8xf32>
    %cst_71 = arith.constant dense<0.000000e+00> : vector<8x384xf32>
    %124 = tpu.matmul %123, %121, %cst_71 {dimension_numbers = #tpu.dot_dimension_numbers<[1], [0], [0], [1], [0, 0, 1, 1], [], []>} : vector<8x8xf32>, vector<8x384xf32>, vector<8x384xf32> -> vector<8x384xf32>
    %125 = arith.addf %115, %124 : vector<8x384xf32>
    %126 = vector.extract_strided_slice %120 {offsets = [0, 1], sizes = [8, 384], strides = [1, 1]} : vector<8x512xf32> to vector<8x384xf32>
    %c19 = arith.constant 19 : index
    %c0_72 = arith.constant 0 : index
    %c0_73 = arith.constant 0 : index
    %127 = vector.load %arg4[%c19, %c0_72, %c0_73] : memref<27x8x8xf32, #tpu.memory_space<vmem>>, vector<1x8x8xf32>
    %128 = vector.shape_cast %127 : vector<1x8x8xf32> to vector<8x8xf32>
    %cst_74 = arith.constant dense<0.000000e+00> : vector<8x384xf32>
    %129 = tpu.matmul %128, %126, %cst_74 {dimension_numbers = #tpu.dot_dimension_numbers<[1], [0], [0], [1], [0, 0, 1, 1], [], []>} : vector<8x8xf32>, vector<8x384xf32>, vector<8x384xf32> -> vector<8x384xf32>
    %130 = arith.addf %125, %129 : vector<8x384xf32>
    %131 = vector.extract_strided_slice %120 {offsets = [0, 2], sizes = [8, 384], strides = [1, 1]} : vector<8x512xf32> to vector<8x384xf32>
    %c20 = arith.constant 20 : index
    %c0_75 = arith.constant 0 : index
    %c0_76 = arith.constant 0 : index
    %132 = vector.load %arg4[%c20, %c0_75, %c0_76] : memref<27x8x8xf32, #tpu.memory_space<vmem>>, vector<1x8x8xf32>
    %133 = vector.shape_cast %132 : vector<1x8x8xf32> to vector<8x8xf32>
    %cst_77 = arith.constant dense<0.000000e+00> : vector<8x384xf32>
    %134 = tpu.matmul %133, %131, %cst_77 {dimension_numbers = #tpu.dot_dimension_numbers<[1], [0], [0], [1], [0, 0, 1, 1], [], []>} : vector<8x8xf32>, vector<8x384xf32>, vector<8x384xf32> -> vector<8x384xf32>
    %135 = arith.addf %130, %134 : vector<8x384xf32>
    %136 = vector.extract_strided_slice %120 {offsets = [0, 18], sizes = [8, 384], strides = [1, 1]} : vector<8x512xf32> to vector<8x384xf32>
    %c21 = arith.constant 21 : index
    %c0_78 = arith.constant 0 : index
    %c0_79 = arith.constant 0 : index
    %137 = vector.load %arg4[%c21, %c0_78, %c0_79] : memref<27x8x8xf32, #tpu.memory_space<vmem>>, vector<1x8x8xf32>
    %138 = vector.shape_cast %137 : vector<1x8x8xf32> to vector<8x8xf32>
    %cst_80 = arith.constant dense<0.000000e+00> : vector<8x384xf32>
    %139 = tpu.matmul %138, %136, %cst_80 {dimension_numbers = #tpu.dot_dimension_numbers<[1], [0], [0], [1], [0, 0, 1, 1], [], []>} : vector<8x8xf32>, vector<8x384xf32>, vector<8x384xf32> -> vector<8x384xf32>
    %140 = arith.addf %135, %139 : vector<8x384xf32>
    %141 = vector.extract_strided_slice %120 {offsets = [0, 19], sizes = [8, 384], strides = [1, 1]} : vector<8x512xf32> to vector<8x384xf32>
    %c22 = arith.constant 22 : index
    %c0_81 = arith.constant 0 : index
    %c0_82 = arith.constant 0 : index
    %142 = vector.load %arg4[%c22, %c0_81, %c0_82] : memref<27x8x8xf32, #tpu.memory_space<vmem>>, vector<1x8x8xf32>
    %143 = vector.shape_cast %142 : vector<1x8x8xf32> to vector<8x8xf32>
    %cst_83 = arith.constant dense<0.000000e+00> : vector<8x384xf32>
    %144 = tpu.matmul %143, %141, %cst_83 {dimension_numbers = #tpu.dot_dimension_numbers<[1], [0], [0], [1], [0, 0, 1, 1], [], []>} : vector<8x8xf32>, vector<8x384xf32>, vector<8x384xf32> -> vector<8x384xf32>
    %145 = arith.addf %140, %144 : vector<8x384xf32>
    %146 = vector.extract_strided_slice %120 {offsets = [0, 20], sizes = [8, 384], strides = [1, 1]} : vector<8x512xf32> to vector<8x384xf32>
    %c23 = arith.constant 23 : index
    %c0_84 = arith.constant 0 : index
    %c0_85 = arith.constant 0 : index
    %147 = vector.load %arg4[%c23, %c0_84, %c0_85] : memref<27x8x8xf32, #tpu.memory_space<vmem>>, vector<1x8x8xf32>
    %148 = vector.shape_cast %147 : vector<1x8x8xf32> to vector<8x8xf32>
    %cst_86 = arith.constant dense<0.000000e+00> : vector<8x384xf32>
    %149 = tpu.matmul %148, %146, %cst_86 {dimension_numbers = #tpu.dot_dimension_numbers<[1], [0], [0], [1], [0, 0, 1, 1], [], []>} : vector<8x8xf32>, vector<8x384xf32>, vector<8x384xf32> -> vector<8x384xf32>
    %150 = arith.addf %145, %149 : vector<8x384xf32>
    %151 = vector.extract_strided_slice %120 {offsets = [0, 36], sizes = [8, 384], strides = [1, 1]} : vector<8x512xf32> to vector<8x384xf32>
    %c24 = arith.constant 24 : index
    %c0_87 = arith.constant 0 : index
    %c0_88 = arith.constant 0 : index
    %152 = vector.load %arg4[%c24, %c0_87, %c0_88] : memref<27x8x8xf32, #tpu.memory_space<vmem>>, vector<1x8x8xf32>
    %153 = vector.shape_cast %152 : vector<1x8x8xf32> to vector<8x8xf32>
    %cst_89 = arith.constant dense<0.000000e+00> : vector<8x384xf32>
    %154 = tpu.matmul %153, %151, %cst_89 {dimension_numbers = #tpu.dot_dimension_numbers<[1], [0], [0], [1], [0, 0, 1, 1], [], []>} : vector<8x8xf32>, vector<8x384xf32>, vector<8x384xf32> -> vector<8x384xf32>
    %155 = arith.addf %150, %154 : vector<8x384xf32>
    %156 = vector.extract_strided_slice %120 {offsets = [0, 37], sizes = [8, 384], strides = [1, 1]} : vector<8x512xf32> to vector<8x384xf32>
    %c25 = arith.constant 25 : index
    %c0_90 = arith.constant 0 : index
    %c0_91 = arith.constant 0 : index
    %157 = vector.load %arg4[%c25, %c0_90, %c0_91] : memref<27x8x8xf32, #tpu.memory_space<vmem>>, vector<1x8x8xf32>
    %158 = vector.shape_cast %157 : vector<1x8x8xf32> to vector<8x8xf32>
    %cst_92 = arith.constant dense<0.000000e+00> : vector<8x384xf32>
    %159 = tpu.matmul %158, %156, %cst_92 {dimension_numbers = #tpu.dot_dimension_numbers<[1], [0], [0], [1], [0, 0, 1, 1], [], []>} : vector<8x8xf32>, vector<8x384xf32>, vector<8x384xf32> -> vector<8x384xf32>
    %160 = arith.addf %155, %159 : vector<8x384xf32>
    %161 = vector.extract_strided_slice %120 {offsets = [0, 38], sizes = [8, 384], strides = [1, 1]} : vector<8x512xf32> to vector<8x384xf32>
    %c26 = arith.constant 26 : index
    %c0_93 = arith.constant 0 : index
    %c0_94 = arith.constant 0 : index
    %162 = vector.load %arg4[%c26, %c0_93, %c0_94] : memref<27x8x8xf32, #tpu.memory_space<vmem>>, vector<1x8x8xf32>
    %163 = vector.shape_cast %162 : vector<1x8x8xf32> to vector<8x8xf32>
    %cst_95 = arith.constant dense<0.000000e+00> : vector<8x384xf32>
    %164 = tpu.matmul %163, %161, %cst_95 {dimension_numbers = #tpu.dot_dimension_numbers<[1], [0], [0], [1], [0, 0, 1, 1], [], []>} : vector<8x8xf32>, vector<8x384xf32>, vector<8x384xf32> -> vector<8x384xf32>
    %165 = arith.addf %160, %164 : vector<8x384xf32>
    %c0_96 = arith.constant 0 : index
    %c0_97 = arith.constant 0 : index
    %166 = vector.load %arg5[%c0_96, %c0_97] : memref<8x1xf32, #tpu.memory_space<vmem>>, vector<8x1xf32>
    %167 = vector.broadcast %166 : vector<8x1xf32> to vector<8x384xf32>
    %168 = arith.mulf %165, %167 : vector<8x384xf32>
    %c0_98 = arith.constant 0 : index
    %c0_99 = arith.constant 0 : index
    %169 = vector.load %arg6[%c0_98, %c0_99] : memref<8x1xf32, #tpu.memory_space<vmem>>, vector<8x1xf32>
    %170 = vector.broadcast %169 : vector<8x1xf32> to vector<8x384xf32>
    %171 = arith.addf %168, %170 : vector<8x384xf32>
    %cst_100 = arith.constant 0.000000e+00 : f32
    %172 = vector.broadcast %cst_100 : f32 to vector<8x384xf32>
    %173 = arith.cmpf oge, %171, %172 : vector<8x384xf32>
    %cst_101 = arith.constant 0.00999999977 : f32
    %174 = vector.broadcast %cst_101 : f32 to vector<8x384xf32>
    %175 = arith.mulf %174, %171 : vector<8x384xf32>
    %176 = arith.select %173, %171, %175 : vector<8x384xi1>, vector<8x384xf32>
    %c0_102 = arith.constant 0 : index
    %c0_103 = arith.constant 0 : index
    %c0_104 = arith.constant 0 : index
    %c0_105 = arith.constant 0 : index
    %177 = vector.load %arg7[%c0_102, %c0_103, %c0_104, %c0_105] : memref<1x1x8x384xf32, #tpu.memory_space<vmem>>, vector<1x1x8x384xf32>
    %178 = vector.shape_cast %177 : vector<1x1x8x384xf32> to vector<8x384xf32>
    %179 = vector.shape_cast %176 : vector<8x384xf32> to vector<1x1x8x384xf32>
    tpu.vector_store %arg7[%c0_102, %c0_103, %c0_104, %c0_105], %179 {strides = array<i32>} : memref<1x1x8x384xf32, #tpu.memory_space<vmem>>, vector<1x1x8x384xf32>,
    return
  }
  func.func @transform_1(%arg0: i32, %arg1: i32, %arg2: i32) -> (i32, i32, i32) {
    %c0_i32 = arith.constant 0 : i32
    %c0_i32_0 = arith.constant 0 : i32
    %c0_i32_1 = arith.constant 0 : i32
    %c0_i32_2 = arith.constant 0 : i32
    return %c0_i32, %c0_i32_0, %c0_i32_1 : i32, i32, i32
  }
  func.func @transform_2(%arg0: i32, %arg1: i32, %arg2: i32) -> (i32, i32) {
    %c0_i32 = arith.constant 0 : i32
    %c0_i32_0 = arith.constant 0 : i32
    %c0_i32_1 = arith.constant 0 : i32
    return %c0_i32, %c0_i32_0 : i32, i32
  }
  func.func @transform_3(%arg0: i32, %arg1: i32, %arg2: i32) -> (i32, i32) {
    %c0_i32 = arith.constant 0 : i32
    %c0_i32_0 = arith.constant 0 : i32
    %c0_i32_1 = arith.constant 0 : i32
    return %c0_i32, %c0_i32_0 : i32, i32
  }
  func.func @transform_4(%arg0: i32, %arg1: i32, %arg2: i32) -> (i32, i32, i32, i32) {
    %c0_i32 = arith.constant 0 : i32
    %c0_i32_0 = arith.constant 0 : i32
    return %arg0, %arg1, %c0_i32, %arg2 : i32, i32, i32, i32
  }
}

</mosaic_0001>

<llo_original>
// kernel: tpu_custom_call.1
$region0: #{tpu_custom_call.1}
  #allocation0 [shape = 'u32[]', space=smem, size = 0x4, offset = 0x4, fixed_abs, tag = 'smem constant byte address 0x4 - core index']
  #allocation1 [shape = 'u32[144,128]{1,0:T(1,128)}', space=vmem, size = 0x12000, scoped, tag = 'internal scratch']
  #allocation2 [shape = 'f32[4,8,512]{2,1,0:T(8,128)}', space=vmem, size = 0x10000, scoped, tag = 'scratch operand']
  #allocation3 [shape = 's32[4]{0}', space=sflag, size = 0x10, scoped, tag = 'scratch operand']
  #allocation6 [shape = 's32[]', space=sflag, size = 0x4, offset = 0, fixed_abs, tag = 'sflag constant byte address 0x0 - dummy sync flag']
  #allocation7 [shape = 's32[]', space=sflag, size = 0x4, offset = 0, fixed_abs, tag = 'sflag constant byte address 0x0 - dummy sync flag']
  #allocation8 [shape = 'u32[]', space=smem, size = 0x4, offset = 0x44, fixed_abs, tag = 'smem constant byte address 0x44 - assertion arg 0']
  #allocation9 [shape = 'u32[]', space=smem, size = 0x4, offset = 0x48, fixed_abs, tag = 'smem constant byte address 0x48 - assertion arg 1']
  #allocation10 [shape = 's32[]', space=sflag, size = 0x4, offset = 0, fixed_abs, tag = 'sflag constant byte address 0x0 - dummy sync flag']
  #allocation11 [shape = 's32[]', space=sflag, size = 0x4, offset = 0, fixed_abs, tag = 'sflag constant byte address 0x0 - dummy sync flag']
  #allocation12 [shape = 's32[]', space=sflag, size = 0x4, offset = 0, fixed_abs, tag = 'sflag constant byte address 0x0 - dummy sync flag']
  #allocation13 [shape = 's32[]', space=sflag, size = 0x4, offset = 0, fixed_abs, tag = 'sflag constant byte address 0x0 - dummy sync flag']
  #allocation14 [shape = 's32[]', space=sflag, size = 0x4, offset = 0, fixed_abs, tag = 'sflag constant byte address 0x0 - dummy sync flag']
  #allocation15 [shape = 's32[]', space=sflag, size = 0x4, offset = 0, fixed_abs, tag = 'sflag constant byte address 0x0 - dummy sync flag']
  #allocation16 [shape = 's32[]', space=sflag, size = 0x4, offset = 0, fixed_abs, tag = 'sflag constant byte address 0x0 - dummy sync flag']
  #allocation17 [shape = 's32[]', space=sflag, size = 0x4, offset = 0, fixed_abs, tag = 'sflag constant byte address 0x0 - dummy sync flag']
  %s0 = inlined_call_operand.hbm [shape: f32[2,10,8,512], index: 0, kind: input, shape index: {}]
  %s1 = inlined_call_operand.vmem [shape: f32[27,8,8], index: 1, kind: input, shape index: {}]
  %s2 = inlined_call_operand.vmem [shape: f32[8,1], index: 2, kind: input, shape index: {}]
  %s3 = inlined_call_operand.vmem [shape: f32[8,1], index: 3, kind: input, shape index: {}]
  %s4 = inlined_call_operand.hbm [shape: f32[2,8,8,384], index: 4, kind: output, shape index: {}]
  %s5 = sld [smem:[#allocation0]]
  $region77: #{tpu_custom_call.1} parent=0
    _
  %s7 = ssub.s32 1, %s5
  %s8 = scalar_select 0, %s7, %s5
  $region1: #{tpu_custom_call.1} parent=0
    #allocation4 [shape = 'u8[24576]{0}', space=vmem, size = 0x6000, scoped, tag = 'output window, operand 0']
    #allocation5 [shape = 's32[2]{0}', space=sflag, size = 0x8, scoped, tag = 'scoped memory for tpu_custom_call.1']
    %9 = vsyncpa [#allocation5], 0
    %s10 = scalar_lea.sflag [#allocation5], 1
    %11 = vsyncpa %s10, 0
    loop: start=0, step=1, limit=18
    $region2: #{tpu_custom_call.1} parent=1 // loop_pre_header
      _
    $region3: #{tpu_custom_call.1} parent=1 // loop_header
      %s13 = sphi 0, %s17
      %p14 = scmp.ge.s32.totalorder %s13, 18
      %s20 = sphi 0, %s39
      %s21 = sphi 0, %s35
      %s22 = sphi 0, %s31
      %s23 = sphi 0, %s20
      %s24 = sphi 0, %s21
      %s25 = sphi 0, %s22
      %s26 = sphi 0, %s23
      %s27 = sphi 0, %s24
      %s28 = sphi 0, %s25
      %s40 = sphi 0, %s40
      %s42 = sphi 0, %s40
      %s43 = sphi 0, %s42
      %s57 = sphi 0, %s43
      %s61 = sphi 0, %s61
      %s63 = sphi 0, %s61
      %s64 = sphi 0, %s63
      %s78 = sphi 0, %s64
      %s82 = sphi 0, %s82
      %s84 = sphi 0, %s82
      %s85 = sphi 0, %s84
      %s99 = sphi 0, %s85
      %s109 = sphi 0, %s111
      %s112 = sphi 0, %s109
      %s113 = sphi 0, %s112
      %s129 = sphi 0, %s113
    $region4: #{tpu_custom_call.1} parent=1 // loop_header_branch
      %16 = sbr.rel (%p14) target = $region8
    $region5: #{tpu_custom_call.1} parent=1 // loop_body
      %s18 = ssub.s32 %s13, 1
      %s19 = ssub.s32 %s13, 2
      %s29 = sadd.s32 1, %s22
      %p30 = scmp.ge.s32.totalorder %s29, 1
      %s31 = scalar_select %p30, 0, %s29
      %s32 = sadd.s32 1, %s21
      %s33 = scalar_select %p30, %s32, %s21
      %p34 = scmp.ge.s32.totalorder %s33, 8
      %s35 = scalar_select %p34, 0, %s33
      %s36 = sadd.s32 1, %s20
      %s37 = scalar_select %p34, %s36, %s20
      %p38 = scmp.ge.s32.totalorder %s37, 2
      %s39 = scalar_select %p38, 0, %s37
      %s41 = sadd.s32 %s40, 1
      %p44 = scmp.eq.s32.totalorder %s13, 15
      %p45 = scmp.ne.s32.totalorder %s40, %s42
      %p46 = scmp.eq.s32.totalorder %s13, 0
      %p47 = por %p45, %p46
      %p48 = scmp.ne.s32.totalorder %s40, %s42
      %p49 = scmp.eq.s32.totalorder %s18, 15
      %p50 = por %p48, %p49
      %p51 = scmp.ne.s32.totalorder %s42, %s43
      %p52 = scmp.eq.s32.totalorder %s18, 0
      %p53 = por %p51, %p52
      %p54 = scmp.ne.s32.totalorder %s42, %s43
      %p55 = scmp.eq.s32.totalorder %s19, 15
      %p56 = por %p54, %p55
      %p58 = scmp.ne.s32.totalorder %s43, %s57
      %p59 = scmp.eq.s32.totalorder %s19, 0
      %p60 = por %p58, %p59
      %s62 = sadd.s32 %s61, 1
      %p65 = scmp.eq.s32.totalorder %s13, 15
      %p66 = scmp.ne.s32.totalorder %s61, %s63
      %p67 = scmp.eq.s32.totalorder %s13, 0
      %p68 = por %p66, %p67
      %p69 = scmp.ne.s32.totalorder %s61, %s63
      %p70 = scmp.eq.s32.totalorder %s18, 15
      %p71 = por %p69, %p70
      %p72 = scmp.ne.s32.totalorder %s63, %s64
      %p73 = scmp.eq.s32.totalorder %s18, 0
      %p74 = por %p72, %p73
      %p75 = scmp.ne.s32.totalorder %s63, %s64
      %p76 = scmp.eq.s32.totalorder %s19, 15
      %p77 = por %p75, %p76
      %p79 = scmp.ne.s32.totalorder %s64, %s78
      %p80 = scmp.eq.s32.totalorder %s19, 0
      %p81 = por %p79, %p80
      %s83 = sadd.s32 %s82, 1
      %p86 = scmp.eq.s32.totalorder %s13, 15
      %p87 = scmp.ne.s32.totalorder %s82, %s84
      %p88 = scmp.eq.s32.totalorder %s13, 0
      %p89 = por %p87, %p88
      %p90 = scmp.ne.s32.totalorder %s82, %s84
      %p91 = scmp.eq.s32.totalorder %s18, 15
      %p92 = por %p90, %p91
      %p93 = scmp.ne.s32.totalorder %s84, %s85
      %p94 = scmp.eq.s32.totalorder %s18, 0
      %p95 = por %p93, %p94
      %p96 = scmp.ne.s32.totalorder %s84, %s85
      %p97 = scmp.eq.s32.totalorder %s19, 15
      %p98 = por %p96, %p97
      %p100 = scmp.ne.s32.totalorder %s85, %s99
      %p101 = scmp.eq.s32.totalorder %s19, 0
      %p102 = por %p100, %p101
      %s103 = ssub.s32 %s20, %s39
      %s104 = ssub.s32 %s21, %s35
      %s105 = sor.u32 %s103, %s104
      %s106 = ssub.s32 %s22, %s31
      %s107 = sor.u32 %s105, %s106
      %p108 = scmp.eq.s32.totalorder %s107, 0
      %s110 = sadd.s32 %s109, 1
      %s111 = scalar_select %p108, %s109, %s110
      %p114 = pneg %p108
      %p115 = scmp.eq.s32.totalorder %s13, 15
      %p116 = por %p114, %p115
      %p117 = scmp.ne.s32.totalorder %s109, %s112
      %p118 = scmp.eq.s32.totalorder %s13, 0
      %p119 = por %p117, %p118
      %p120 = scmp.ne.s32.totalorder %s109, %s112
      %p121 = scmp.eq.s32.totalorder %s18, 15
      %p122 = por %p120, %p121
      %p123 = scmp.ne.s32.totalorder %s112, %s113
      %p124 = scmp.eq.s32.totalorder %s18, 0
      %p125 = por %p123, %p124
      %p126 = scmp.ne.s32.totalorder %s112, %s113
      %p127 = scmp.eq.s32.totalorder %s19, 15
      %p128 = por %p126, %p127
      %p130 = scmp.ne.s32.totalorder %s113, %s129
      %p131 = scmp.eq.s32.totalorder %s19, 0
      %p132 = por %p130, %p131
      %p133 = scmp.le.s32.totalorder 1, %s13
      %p134 = scmp.lt.s32.totalorder %s13, 17
      %p135 = pnand %p133, %p134
      %p136 = pneg %p135
      // Predicated region
      $region9: #{tpu_custom_call.1} parent=5 // pred_check
        _
      $region10: #{tpu_custom_call.1} parent=5 // pred_check_branch
        %138 = sbr.rel (%p135) target = $region12
      $region11: #{tpu_custom_call.1} parent=5 // pred_region
        %s139 = ssub.s32 %s13, 1
        // Predicated region
        $region13: #{tpu_custom_call.1} parent=11 // pred_check
          %p140 = pneg %p53
        $region14: #{tpu_custom_call.1} parent=11 // pred_check_branch
          %142 = sbr.rel (%p140) target = $region16
        $region15: #{tpu_custom_call.1} parent=11 // pred_region
          _
        $region16: #{tpu_custom_call.1} parent=11 // pred_fallthru
          _
        // Predicated region
        $region17: #{tpu_custom_call.1} parent=11 // pred_check
          %p143 = pneg %p74
        $region18: #{tpu_custom_call.1} parent=11 // pred_check_branch
          %145 = sbr.rel (%p143) target = $region20
        $region19: #{tpu_custom_call.1} parent=11 // pred_region
          _
        $region20: #{tpu_custom_call.1} parent=11 // pred_fallthru
          _
        // Predicated region
        $region21: #{tpu_custom_call.1} parent=11 // pred_check
          %p146 = pneg %p95
        $region22: #{tpu_custom_call.1} parent=11 // pred_check_branch
          %148 = sbr.rel (%p146) target = $region24
        $region23: #{tpu_custom_call.1} parent=11 // pred_region
          _
        $region24: #{tpu_custom_call.1} parent=11 // pred_fallthru
          _
      $region12: #{tpu_custom_call.1} parent=5 // pred_fallthru
        _
      %p149 = scmp.lt.s32.totalorder %s13, 16
      // Predicated region
      $region25: #{tpu_custom_call.1} parent=5 // pred_check
        %p150 = pneg %p149
      $region26: #{tpu_custom_call.1} parent=5 // pred_check_branch
        %152 = sbr.rel (%p150) target = $region28
      $region27: #{tpu_custom_call.1} parent=5 // pred_region
        _
      $region28: #{tpu_custom_call.1} parent=5 // pred_fallthru
        _
      %p153 = scmp.le.s32.totalorder 1, %s13
      %p154 = scmp.lt.s32.totalorder %s13, 17
      %p155 = pnand %p153, %p154
      %p156 = pneg %p155
      // Predicated region
      $region29: #{tpu_custom_call.1} parent=5 // pred_check
        _
      $region30: #{tpu_custom_call.1} parent=5 // pred_check_branch
        %158 = sbr.rel (%p155) target = $region32
      $region31: #{tpu_custom_call.1} parent=5 // pred_region
        %s159 = ssub.s32 %s13, 1
        %p160 = pneg %p53
        %p161 = pneg %p50
        %p162 = pneg %p74
        %p163 = pneg %p71
        %p164 = pneg %p95
        %p165 = pneg %p92
        %p166 = pneg %p125
        %p167 = pneg %p122
        %s168 = sand.u32 %s112, 1
        %s169 = scalar_lea.sflag [#allocation5], %s168
        %s170 = sand.u32 %s112, 1
        %s171 = smul.addr %s170, 24
        %s172 = scalar_lea.vmem [#allocation4], %s171
        %s173 = smul.u32 3, %s25
        %p174 = scmp.eq.s32.totalorder %s25, 0
        %p175 = scmp.eq.s32.totalorder %s24, 0
        %p176 = pnand %p175, %p174
        %p177 = pneg %p176
        // Predicated region
        $region33: #{tpu_custom_call.1} parent=31 // pred_check
          _
        $region34: #{tpu_custom_call.1} parent=31 // pred_check_branch
          %179 = sbr.rel (%p176) target = $region36
        $region35: #{tpu_custom_call.1} parent=31 // pred_region
          %s180 = smul.u32 %s23, 40
          %s181 = smul.addr %s180, 128
          %s182 = scalar_lea.hbm %s0, %s181
          // Predicated region
          $region37: #{tpu_custom_call.1} parent=35 // pred_check
            _
          $region38: #{tpu_custom_call.1} parent=35 // pred_check_branch
            %184 = sbr.rel target = $region40
          $region39: #{tpu_custom_call.1} parent=35 // pred_region
            %185 = sst [smem:[#allocation8]] [#allocation7]
            %186 = sst [smem:[#allocation9]] [#allocation6]
          $region40: #{tpu_custom_call.1} parent=35 // pred_fallthru
            _
          %188 = shalt.err (0)
          %s190 = sshll.u32 [#allocation2], 4
          %s191 = int_to_ptr.vmem [resolvable:$true] %s190
          %193 = dma.hbm_to_vmem [thread:$0]  %s182, 512, %s191, [#allocation3]
          %s194 = sadd.s32 4, %s180
          %s195 = smul.addr %s194, 128
          %s196 = scalar_lea.hbm %s0, %s195
          %s197 = scalar_lea.vmem [#allocation2], 32
          %s198 = scalar_lea.sflag [#allocation3], 1
          // Predicated region
          $region41: #{tpu_custom_call.1} parent=35 // pred_check
            _
          $region42: #{tpu_custom_call.1} parent=35 // pred_check_branch
            %200 = sbr.rel target = $region44
          $region43: #{tpu_custom_call.1} parent=35 // pred_region
            %201 = sst [smem:[#allocation8]] [#allocation11]
            %202 = sst [smem:[#allocation9]] [#allocation10]
          $region44: #{tpu_custom_call.1} parent=35 // pred_fallthru
            _
          %204 = shalt.err (0)
          %s206 = sshll.u32 %s197, 4
          %s207 = int_to_ptr.vmem [resolvable:$true] %s206
          %209 = dma.hbm_to_vmem [thread:$0]  %s196, 512, %s207, %s198
          %s210 = sadd.s32 8, %s180
          %s211 = smul.addr %s210, 128
          %s212 = scalar_lea.hbm %s0, %s211
          %s213 = scalar_lea.vmem [#allocation2], 64
          %s214 = scalar_lea.sflag [#allocation3], 2
          // Predicated region
          $region45: #{tpu_custom_call.1} parent=35 // pred_check
            _
          $region46: #{tpu_custom_call.1} parent=35 // pred_check_branch
            %216 = sbr.rel target = $region48
          $region47: #{tpu_custom_call.1} parent=35 // pred_region
            %217 = sst [smem:[#allocation8]] [#allocation13]
            %218 = sst [smem:[#allocation9]] [#allocation12]
          $region48: #{tpu_custom_call.1} parent=35 // pred_fallthru
            _
          %220 = shalt.err (0)
          %s222 = sshll.u32 %s213, 4
          %s223 = int_to_ptr.vmem [resolvable:$true] %s222
          %225 = dma.hbm_to_vmem [thread:$0]  %s212, 512, %s223, %s214
          %s226 = smul.u32 8, 1
          %s227 = smul.u32 %s226, 4
          %s228 = sshll.u32 %s227, 4
          %229 = dma.done [#allocation3], %s228
          %s230 = sshll.u32 %s227, 4
          %231 = dma.done %s198, %s230
          %s232 = sshll.u32 %s227, 4
          %233 = dma.done %s214, %s232
          %s234 = sadd.s32 12, %s180
          %s235 = smul.addr %s234, 128
          %s236 = scalar_lea.hbm %s0, %s235
          %s237 = scalar_lea.vmem [#allocation2], 96
          %s238 = scalar_lea.sflag [#allocation3], 3
          // Predicated region
          $region49: #{tpu_custom_call.1} parent=35 // pred_check
            _
          $region50: #{tpu_custom_call.1} parent=35 // pred_check_branch
            %240 = sbr.rel target = $region52
          $region51: #{tpu_custom_call.1} parent=35 // pred_region
            %241 = sst [smem:[#allocation8]] [#allocation15]
            %242 = sst [smem:[#allocation9]] [#allocation14]
          $region52: #{tpu_custom_call.1} parent=35 // pred_fallthru
            _
          %244 = shalt.err (0)
          %s246 = sshll.u32 %s237, 4
          %s247 = int_to_ptr.vmem [resolvable:$true] %s246
          %249 = dma.hbm_to_vmem [thread:$0]  %s236, 512, %s247, %s238
        $region36: #{tpu_custom_call.1} parent=31 // pred_fallthru
          _
        %p250 = scmp.gt.s32.totalorder %s24, 0
        %p251 = pnand %p250, %p174
        %p252 = pneg %p251
        // Predicated region
        $region53: #{tpu_custom_call.1} parent=31 // pred_check
          _
        $region54: #{tpu_custom_call.1} parent=31 // pred_check_branch
          %254 = sbr.rel (%p251) target = $region56
        $region55: #{tpu_custom_call.1} parent=31 // pred_region
          %s255 = sadd.s32 %s24, 2
          %p256 = scmp.lt.s32.totalorder %s255, 0
          %s257 = ssub.s32 0, %s255
          %s258 = scalar_select %p256, %s257, %s255
          %s259 = sand.u32 %s258, 3
          %s260 = ssub.s32 0, %s259
          %s261 = scalar_select %p256, %s260, %s259
          %s262 = scalar_lea.sflag [#allocation3], %s261
          %s263 = smul.u32 8, 1
          %s264 = smul.u32 %s263, 4
          %s265 = sshll.u32 %s264, 4
          %266 = dma.done %s262, %s265
        $region56: #{tpu_custom_call.1} parent=31 // pred_fallthru
          _
        %p267 = scmp.lt.s32.totalorder %s24, 7
        %p268 = pnand %p250, %p267
        %p269 = pneg %p268
        %p270 = pnand %p269, %p174
        %p271 = pneg %p270
        // Predicated region
        $region57: #{tpu_custom_call.1} parent=31 // pred_check
          _
        $region58: #{tpu_custom_call.1} parent=31 // pred_check_branch
          %273 = sbr.rel (%p270) target = $region60
        $region59: #{tpu_custom_call.1} parent=31 // pred_region
          %s274 = sadd.s32 %s24, 3
          %p275 = scmp.lt.s32.totalorder %s274, 0
          %s276 = ssub.s32 0, %s274
          %s277 = scalar_select %p275, %s276, %s274
          %s278 = sand.u32 %s277, 3
          %s279 = ssub.s32 0, %s278
          %s280 = scalar_select %p275, %s279, %s278
          %s281 = smul.u32 %s274, 4
          %s282 = smul.u32 %s23, 40
          %s283 = sadd.s32 %s281, %s282
          %s284 = smul.addr %s283, 128
          %s285 = scalar_lea.hbm %s0, %s284
          %s286 = smul.u32 %s280, 4
          %s287 = smul.addr %s286, 8
          %s288 = scalar_lea.vmem [#allocation2], %s287
          %s289 = scalar_lea.sflag [#allocation3], %s280
          // Predicated region
          $region61: #{tpu_custom_call.1} parent=59 // pred_check
            _
          $region62: #{tpu_custom_call.1} parent=59 // pred_check_branch
            %291 = sbr.rel target = $region64
          $region63: #{tpu_custom_call.1} parent=59 // pred_region
            %292 = sst [smem:[#allocation8]] [#allocation17]
            %293 = sst [smem:[#allocation9]] [#allocation16]
          $region64: #{tpu_custom_call.1} parent=59 // pred_fallthru
            _
          %295 = shalt.err (0)
          %s297 = sshll.u32 %s288, 4
          %s298 = int_to_ptr.vmem [resolvable:$true] %s297
          %300 = dma.hbm_to_vmem [thread:$0]  %s285, 512, %s298, %s289
        $region60: #{tpu_custom_call.1} parent=31 // pred_fallthru
          _
        %p301 = scmp.lt.s32.totalorder %s24, 0
        %s302 = ssub.s32 0, %s24
        %s303 = scalar_select %p301, %s302, %s24
        %s304 = sand.u32 %s303, 3
        %s305 = ssub.s32 0, %s304
        %s306 = scalar_select %p301, %s305, %s304
        %s307 = smul.u32 %s306, 4
        %s308 = smul.addr %s307, 8
        %s309 = scalar_lea.vmem [#allocation2], %s308
        %v310 = vld [vmem:[%s309] sm:$0xff]
        %v311 = vld [vmem:[%s309 + $0x8] sm:$0xff]
        %v312 = vld [vmem:[%s309 + $0x10] sm:$0xff]
        %v313 = vld [vmem:[%s309 + $0x18] sm:$0xff]
        %v314 = vld [vmem:[%s1] sm:$0xff]
        %s315 = scalar_lea.vmem %s1, 8
        %v316 = vld [vmem:[%s315] sm:$0xff]
        %321 = vrot.lane.b32.xlu0 %v310, 127
        %v322 = vpop.permute.xlu0 %321
        %323 = vrot.lane.b32.xlu0 %v311, 127
        %v324 = vpop.permute.xlu0 %323
        %325 = vrot.lane.b32.xlu0 %v312, 127
        %v326 = vpop.permute.xlu0 %325
        %327 = vrot.lane.b32.xlu0 %v313, 127
        %v328 = vpop.permute.xlu0 %327
        %vm329 = vcmask 1039360
        %v330 = vsel %vm329, %v322, %v324
        %v331 = vsel %vm329, %v324, %v326
        %v332 = vsel %vm329, %v326, %v328
        %vm336 = vcmask 64512
        %v338 = vsel %vm336, %v316, 0
        %340 = vmatprep.subr.mxu0 0.0
        %341 = vmatpush1.msra.mxu0 0.0
        %342 = vmatprep.subr.mxu0 0.0
        %343 = vmatpush1.msra.mxu0 0.0
        %344 = vmatprep.subr.mxu0 0.0
        %345 = vmatpush1.msra.mxu0 0.0
        %346 = vmatprep.subr.mxu0 0.0
        %347 = vmatpush1.msra.mxu0 0.0
        %348 = vmatprep.subr.mxu0 0.0
        %349 = vmatpush1.msra.mxu0 0.0
        %350 = vmatprep.subr.mxu0 0.0
        %351 = vmatpush1.msra.mxu0 0.0
        %352 = vmatprep.subr.mxu0 0.0
        %353 = vmatpush1.msra.mxu0 0.0
        %354 = vmatprep.subr.mxu0 0.0
        %355 = vmatpush1.msra.mxu0 0.0
        %356 = vmatprep.subr.mxu0 0.0
        %357 = vmatpush1.msra.mxu0 0.0
        %358 = vmatprep.subr.mxu0 0.0
        %359 = vmatpush1.msra.mxu0 0.0
        %360 = vmatprep.subr.mxu0 0.0
        %361 = vmatpush1.msra.mxu0 0.0
        %362 = vmatprep.subr.mxu0 0.0
        %363 = vmatpush1.msra.mxu0 0.0
        %364 = vmatprep.subr.mxu0 0.0
        %365 = vmatpush1.msra.mxu0 0.0
        %366 = vmatprep.subr.mxu0 0.0
        %367 = vmatpush1.msra.mxu0 0.0
        %368 = vmatprep.subr.mxu0 0.0
        %369 = vmatpush1.msra.mxu0 0.0
        %370 = vmatprep.subr.mxu0 %v331
        %371 = vmatpush1.msra.mxu0 %v330
        %372 = vmatprep.subr.mxu0 0.0
        %373 = vmatpush2.msra.mxu0 0.0
        %374 = vmatprep.subr.mxu0 0.0
        %375 = vmatpush2.msra.mxu0 0.0
        %376 = vmatprep.subr.mxu0 0.0
        %377 = vmatpush2.msra.mxu0 0.0
        %378 = vmatprep.subr.mxu0 0.0
        %379 = vmatpush2.msra.mxu0 0.0
        %380 = vmatprep.subr.mxu0 0.0
        %381 = vmatpush2.msra.mxu0 0.0
        %382 = vmatprep.subr.mxu0 0.0
        %383 = vmatpush2.msra.mxu0 0.0
        %384 = vmatprep.subr.mxu0 0.0
        %385 = vmatpush2.msra.mxu0 0.0
        %386 = vmatprep.subr.mxu0 0.0
        %387 = vmatpush2.msra.mxu0 0.0
        %388 = vmatprep.subr.mxu0 0.0
        %389 = vmatpush2.msra.mxu0 0.0
        %390 = vmatprep.subr.mxu0 0.0
        %391 = vmatpush2.msra.mxu0 0.0
        %392 = vmatprep.subr.mxu0 0.0
        %393 = vmatpush2.msra.mxu0 0.0
        %394 = vmatprep.subr.mxu0 0.0
        %395 = vmatpush2.msra.mxu0 0.0
        %396 = vmatprep.subr.mxu0 0.0
        %397 = vmatpush2.msra.mxu0 0.0
        %398 = vmatprep.subr.mxu0 0.0
        %399 = vmatpush2.msra.mxu0 0.0
        %400 = vmatprep.subr.mxu0 0.0
        %401 = vmatpush2.msra.mxu0 0.0
        %402 = vmatprep.subr.mxu0 0.0
        %403 = vmatpush2.msra.mxu0 0.0
        %404 = vmatprep.mubr.f32.mxu0 0.0
        %405 = vmatmul.mubr.f32.gmra.mxu0 %v338
        %v406 = vpop.f32.mrf.mxu0
        %v407 = vadd.f32 0.0, %v406
        %v408 = vpop.f32.mrf.mxu0
        %v409 = vadd.f32 0.0, %v408
        %410 = vdwg.mxu0
        %411 = vmatprep.subr.mxu0 0.0
        %412 = vmatpush1.msra.mxu0 0.0
        %413 = vmatprep.subr.mxu0 0.0
        %414 = vmatpush1.msra.mxu0 0.0
        %415 = vmatprep.subr.mxu0 0.0
        %416 = vmatpush1.msra.mxu0 0.0
        %417 = vmatprep.subr.mxu0 0.0
        %418 = vmatpush1.msra.mxu0 0.0
        %419 = vmatprep.subr.mxu0 0.0
        %420 = vmatpush1.msra.mxu0 0.0
        %421 = vmatprep.subr.mxu0 0.0
        %422 = vmatpush1.msra.mxu0 0.0
        %423 = vmatprep.subr.mxu0 0.0
        %424 = vmatpush1.msra.mxu0 0.0
        %425 = vmatprep.subr.mxu0 0.0
        %426 = vmatpush1.msra.mxu0 0.0
        %427 = vmatprep.subr.mxu0 0.0
        %428 = vmatpush1.msra.mxu0 0.0
        %429 = vmatprep.subr.mxu0 0.0
        %430 = vmatpush1.msra.mxu0 0.0
        %431 = vmatprep.subr.mxu0 0.0
        %432 = vmatpush1.msra.mxu0 0.0
        %433 = vmatprep.subr.mxu0 0.0
        %434 = vmatpush1.msra.mxu0 0.0
        %435 = vmatprep.subr.mxu0 0.0
        %436 = vmatpush1.msra.mxu0 0.0
        %437 = vmatprep.subr.mxu0 0.0
        %438 = vmatpush1.msra.mxu0 0.0
        %439 = vmatprep.subr.mxu0 0.0
        %440 = vmatpush1.msra.mxu0 0.0
        %441 = vmatprep.subr.mxu0 0.0
        %442 = vmatpush1.msra.mxu0 %v332
        %443 = vmatprep.subr.mxu0 0.0
        %444 = vmatpush2.msra.mxu0 0.0
        %445 = vmatprep.subr.mxu0 0.0
        %446 = vmatpush2.msra.mxu0 0.0
        %447 = vmatprep.subr.mxu0 0.0
        %448 = vmatpush2.msra.mxu0 0.0
        %449 = vmatprep.subr.mxu0 0.0
        %450 = vmatpush2.msra.mxu0 0.0
        %451 = vmatprep.subr.mxu0 0.0
        %452 = vmatpush2.msra.mxu0 0.0
        %453 = vmatprep.subr.mxu0 0.0
        %454 = vmatpush2.msra.mxu0 0.0
        %455 = vmatprep.subr.mxu0 0.0
        %456 = vmatpush2.msra.mxu0 0.0
        %457 = vmatprep.subr.mxu0 0.0
        %458 = vmatpush2.msra.mxu0 0.0
        %459 = vmatprep.subr.mxu0 0.0
        %460 = vmatpush2.msra.mxu0 0.0
        %461 = vmatprep.subr.mxu0 0.0
        %462 = vmatpush2.msra.mxu0 0.0
        %463 = vmatprep.subr.mxu0 0.0
        %464 = vmatpush2.msra.mxu0 0.0
        %465 = vmatprep.subr.mxu0 0.0
        %466 = vmatpush2.msra.mxu0 0.0
        %467 = vmatprep.subr.mxu0 0.0
        %468 = vmatpush2.msra.mxu0 0.0
        %469 = vmatprep.subr.mxu0 0.0
        %470 = vmatpush2.msra.mxu0 0.0
        %471 = vmatprep.subr.mxu0 0.0
        %472 = vmatpush2.msra.mxu0 0.0
        %473 = vmatprep.subr.mxu0 0.0
        %474 = vmatpush2.msra.mxu0 0.0
        %475 = vmatprep.mubr.f32.mxu0 0.0
        %476 = vmatmul.mubr.f32.gmra.mxu0 %v338
        %v477 = vpop.f32.mrf.mxu0
        %v478 = vadd.f32 0.0, %v477
        %v479 = vpop.f32.mrf.mxu0
        %480 = vdwg.mxu0
        %v482 = vsel %vm336, %v314, 0
        %484 = vmatprep.subr.mxu0 0.0
        %485 = vmatpush1.msra.mxu0 0.0
        %486 = vmatprep.subr.mxu0 0.0
        %487 = vmatpush1.msra.mxu0 0.0
        %488 = vmatprep.subr.mxu0 0.0
        %489 = vmatpush1.msra.mxu0 0.0
        %490 = vmatprep.subr.mxu0 0.0
        %491 = vmatpush1.msra.mxu0 0.0
        %492 = vmatprep.subr.mxu0 0.0
        %493 = vmatpush1.msra.mxu0 0.0
        %494 = vmatprep.subr.mxu0 0.0
        %495 = vmatpush1.msra.mxu0 0.0
        %496 = vmatprep.subr.mxu0 0.0
        %497 = vmatpush1.msra.mxu0 0.0
        %498 = vmatprep.subr.mxu0 0.0
        %499 = vmatpush1.msra.mxu0 0.0
        %500 = vmatprep.subr.mxu0 0.0
        %501 = vmatpush1.msra.mxu0 0.0
        %502 = vmatprep.subr.mxu0 0.0
        %503 = vmatpush1.msra.mxu0 0.0
        %504 = vmatprep.subr.mxu0 0.0
        %505 = vmatpush1.msra.mxu0 0.0
        %506 = vmatprep.subr.mxu0 0.0
        %507 = vmatpush1.msra.mxu0 0.0
        %508 = vmatprep.subr.mxu0 0.0
        %509 = vmatpush1.msra.mxu0 0.0
        %510 = vmatprep.subr.mxu0 0.0
        %511 = vmatpush1.msra.mxu0 0.0
        %512 = vmatprep.subr.mxu0 0.0
        %513 = vmatpush1.msra.mxu0 0.0
        %514 = vmatprep.subr.mxu0 %v311
        %515 = vmatpush1.msra.mxu0 %v310
        %516 = vmatprep.subr.mxu0 0.0
        %517 = vmatpush2.msra.mxu0 0.0
        %518 = vmatprep.subr.mxu0 0.0
        %519 = vmatpush2.msra.mxu0 0.0
        %520 = vmatprep.subr.mxu0 0.0
        %521 = vmatpush2.msra.mxu0 0.0
        %522 = vmatprep.subr.mxu0 0.0
        %523 = vmatpush2.msra.mxu0 0.0
        %524 = vmatprep.subr.mxu0 0.0
        %525 = vmatpush2.msra.mxu0 0.0
        %526 = vmatprep.subr.mxu0 0.0
        %527 = vmatpush2.msra.mxu0 0.0
        %528 = vmatprep.subr.mxu0 0.0
        %529 = vmatpush2.msra.mxu0 0.0
        %530 = vmatprep.subr.mxu0 0.0
        %531 = vmatpush2.msra.mxu0 0.0
        %532 = vmatprep.subr.mxu0 0.0
        %533 = vmatpush2.msra.mxu0 0.0
        %534 = vmatprep.subr.mxu0 0.0
        %535 = vmatpush2.msra.mxu0 0.0
        %536 = vmatprep.subr.mxu0 0.0
        %537 = vmatpush2.msra.mxu0 0.0
        %538 = vmatprep.subr.mxu0 0.0
        %539 = vmatpush2.msra.mxu0 0.0
        %540 = vmatprep.subr.mxu0 0.0
        %541 = vmatpush2.msra.mxu0 0.0
        %542 = vmatprep.subr.mxu0 0.0
        %543 = vmatpush2.msra.mxu0 0.0
        %544 = vmatprep.subr.mxu0 0.0
        %545 = vmatpush2.msra.mxu0 0.0
        %546 = vmatprep.subr.mxu0 0.0
        %547 = vmatpush2.msra.mxu0 0.0
        %548 = vmatprep.mubr.f32.mxu0 0.0
        %549 = vmatmul.mubr.f32.gmra.mxu0 %v482
        %v550 = vpop.f32.mrf.mxu0
        %v551 = vadd.f32 %v407, %v550
        %v552 = vpop.f32.mrf.mxu0
        %v553 = vadd.f32 %v409, %v552
        %554 = vdwg.mxu0
        %555 = vmatprep.subr.mxu0 0.0
        %556 = vmatpush1.msra.mxu0 0.0
        %557 = vmatprep.subr.mxu0 0.0
        %558 = vmatpush1.msra.mxu0 0.0
        %559 = vmatprep.subr.mxu0 0.0
        %560 = vmatpush1.msra.mxu0 0.0
        %561 = vmatprep.subr.mxu0 0.0
        %562 = vmatpush1.msra.mxu0 0.0
        %563 = vmatprep.subr.mxu0 0.0
        %564 = vmatpush1.msra.mxu0 0.0
        %565 = vmatprep.subr.mxu0 0.0
        %566 = vmatpush1.msra.mxu0 0.0
        %567 = vmatprep.subr.mxu0 0.0
        %568 = vmatpush1.msra.mxu0 0.0
        %569 = vmatprep.subr.mxu0 0.0
        %570 = vmatpush1.msra.mxu0 0.0
        %571 = vmatprep.subr.mxu0 0.0
        %572 = vmatpush1.msra.mxu0 0.0
        %573 = vmatprep.subr.mxu0 0.0
        %574 = vmatpush1.msra.mxu0 0.0
        %575 = vmatprep.subr.mxu0 0.0
        %576 = vmatpush1.msra.mxu0 0.0
        %577 = vmatprep.subr.mxu0 0.0
        %578 = vmatpush1.msra.mxu0 0.0
        %579 = vmatprep.subr.mxu0 0.0
        %580 = vmatpush1.msra.mxu0 0.0
        %581 = vmatprep.subr.mxu0 0.0
        %582 = vmatpush1.msra.mxu0 0.0
        %583 = vmatprep.subr.mxu0 0.0
        %584 = vmatpush1.msra.mxu0 0.0
        %585 = vmatprep.subr.mxu0 0.0
        %586 = vmatpush1.msra.mxu0 %v312
        %587 = vmatprep.subr.mxu0 0.0
        %588 = vmatpush2.msra.mxu0 0.0
        %589 = vmatprep.subr.mxu0 0.0
        %590 = vmatpush2.msra.mxu0 0.0
        %591 = vmatprep.subr.mxu0 0.0
        %592 = vmatpush2.msra.mxu0 0.0
        %593 = vmatprep.subr.mxu0 0.0
        %594 = vmatpush2.msra.mxu0 0.0
        %595 = vmatprep.subr.mxu0 0.0
        %596 = vmatpush2.msra.mxu0 0.0
        %597 = vmatprep.subr.mxu0 0.0
        %598 = vmatpush2.msra.mxu0 0.0
        %599 = vmatprep.subr.mxu0 0.0
        %600 = vmatpush2.msra.mxu0 0.0
        %601 = vmatprep.subr.mxu0 0.0
        %602 = vmatpush2.msra.mxu0 0.0
        %603 = vmatprep.subr.mxu0 0.0
        %604 = vmatpush2.msra.mxu0 0.0
        %605 = vmatprep.subr.mxu0 0.0
        %606 = vmatpush2.msra.mxu0 0.0
        %607 = vmatprep.subr.mxu0 0.0
        %608 = vmatpush2.msra.mxu0 0.0
        %609 = vmatprep.subr.mxu0 0.0
        %610 = vmatpush2.msra.mxu0 0.0
        %611 = vmatprep.subr.mxu0 0.0
        %612 = vmatpush2.msra.mxu0 0.0
        %613 = vmatprep.subr.mxu0 0.0
        %614 = vmatpush2.msra.mxu0 0.0
        %615 = vmatprep.subr.mxu0 0.0
        %616 = vmatpush2.msra.mxu0 0.0
        %617 = vmatprep.subr.mxu0 0.0
        %618 = vmatpush2.msra.mxu0 0.0
        %619 = vmatprep.mubr.f32.mxu0 0.0
        %620 = vmatmul.mubr.f32.gmra.mxu0 %v482
        %v621 = vpop.f32.mrf.mxu0
        %v622 = vadd.f32 %v478, %v621
        %v623 = vpop.f32.mrf.mxu0
        %624 = vdwg.mxu0
        %s625 = scalar_lea.vmem %s1, 16
        %v626 = vld [vmem:[%s625] sm:$0xff]
        %627 = vrot.lane.b32.xlu0 %v310, 126
        %v628 = vpop.permute.xlu0 %627
        %629 = vrot.lane.b32.xlu0 %v311, 126
        %v630 = vpop.permute.xlu0 %629
        %631 = vrot.lane.b32.xlu0 %v312, 126
        %v632 = vpop.permute.xlu0 %631
        %633 = vrot.lane.b32.xlu0 %v313, 126
        %v634 = vpop.permute.xlu0 %633
        %vm635 = vcmask 1031168
        %v636 = vsel %vm635, %v628, %v630
        %v637 = vsel %vm635, %v630, %v632
        %v638 = vsel %vm635, %v632, %v634
        %v643 = vsel %vm336, %v626, 0
        %645 = vmatprep.subr.mxu0 0.0
        %646 = vmatpush1.msra.mxu0 0.0
        %647 = vmatprep.subr.mxu0 0.0
        %648 = vmatpush1.msra.mxu0 0.0
        %649 = vmatprep.subr.mxu0 0.0
        %650 = vmatpush1.msra.mxu0 0.0
        %651 = vmatprep.subr.mxu0 0.0
        %652 = vmatpush1.msra.mxu0 0.0
        %653 = vmatprep.subr.mxu0 0.0
        %654 = vmatpush1.msra.mxu0 0.0
        %655 = vmatprep.subr.mxu0 0.0
        %656 = vmatpush1.msra.mxu0 0.0
        %657 = vmatprep.subr.mxu0 0.0
        %658 = vmatpush1.msra.mxu0 0.0
        %659 = vmatprep.subr.mxu0 0.0
        %660 = vmatpush1.msra.mxu0 0.0
        %661 = vmatprep.subr.mxu0 0.0
        %662 = vmatpush1.msra.mxu0 0.0
        %663 = vmatprep.subr.mxu0 0.0
        %664 = vmatpush1.msra.mxu0 0.0
        %665 = vmatprep.subr.mxu0 0.0
        %666 = vmatpush1.msra.mxu0 0.0
        %667 = vmatprep.subr.mxu0 0.0
        %668 = vmatpush1.msra.mxu0 0.0
        %669 = vmatprep.subr.mxu0 0.0
        %670 = vmatpush1.msra.mxu0 0.0
        %671 = vmatprep.subr.mxu0 0.0
        %672 = vmatpush1.msra.mxu0 0.0
        %673 = vmatprep.subr.mxu0 0.0
        %674 = vmatpush1.msra.mxu0 0.0
        %675 = vmatprep.subr.mxu0 %v637
        %676 = vmatpush1.msra.mxu0 %v636
        %677 = vmatprep.subr.mxu0 0.0
        %678 = vmatpush2.msra.mxu0 0.0
        %679 = vmatprep.subr.mxu0 0.0
        %680 = vmatpush2.msra.mxu0 0.0
        %681 = vmatprep.subr.mxu0 0.0
        %682 = vmatpush2.msra.mxu0 0.0
        %683 = vmatprep.subr.mxu0 0.0
        %684 = vmatpush2.msra.mxu0 0.0
        %685 = vmatprep.subr.mxu0 0.0
        %686 = vmatpush2.msra.mxu0 0.0
        %687 = vmatprep.subr.mxu0 0.0
        %688 = vmatpush2.msra.mxu0 0.0
        %689 = vmatprep.subr.mxu0 0.0
        %690 = vmatpush2.msra.mxu0 0.0
        %691 = vmatprep.subr.mxu0 0.0
        %692 = vmatpush2.msra.mxu0 0.0
        %693 = vmatprep.subr.mxu0 0.0
        %694 = vmatpush2.msra.mxu0 0.0
        %695 = vmatprep.subr.mxu0 0.0
        %696 = vmatpush2.msra.mxu0 0.0
        %697 = vmatprep.subr.mxu0 0.0
        %698 = vmatpush2.msra.mxu0 0.0
        %699 = vmatprep.subr.mxu0 0.0
        %700 = vmatpush2.msra.mxu0 0.0
        %701 = vmatprep.subr.mxu0 0.0
        %702 = vmatpush2.msra.mxu0 0.0
        %703 = vmatprep.subr.mxu0 0.0
        %704 = vmatpush2.msra.mxu0 0.0
        %705 = vmatprep.subr.mxu0 0.0
        %706 = vmatpush2.msra.mxu0 0.0
        %707 = vmatprep.subr.mxu0 0.0
        %708 = vmatpush2.msra.mxu0 0.0
        %709 = vmatprep.mubr.f32.mxu0 0.0
        %710 = vmatmul.mubr.f32.gmra.mxu0 %v643
        %v711 = vpop.f32.mrf.mxu0
        %v712 = vadd.f32 0.0, %v711
        %v713 = vpop.f32.mrf.mxu0
        %v714 = vadd.f32 0.0, %v713
        %715 = vdwg.mxu0
        %716 = vmatprep.subr.mxu0 0.0
        %717 = vmatpush1.msra.mxu0 0.0
        %718 = vmatprep.subr.mxu0 0.0
        %719 = vmatpush1.msra.mxu0 0.0
        %720 = vmatprep.subr.mxu0 0.0
        %721 = vmatpush1.msra.mxu0 0.0
        %722 = vmatprep.subr.mxu0 0.0
        %723 = vmatpush1.msra.mxu0 0.0
        %724 = vmatprep.subr.mxu0 0.0
        %725 = vmatpush1.msra.mxu0 0.0
        %726 = vmatprep.subr.mxu0 0.0
        %727 = vmatpush1.msra.mxu0 0.0
        %728 = vmatprep.subr.mxu0 0.0
        %729 = vmatpush1.msra.mxu0 0.0
        %730 = vmatprep.subr.mxu0 0.0
        %731 = vmatpush1.msra.mxu0 0.0
        %732 = vmatprep.subr.mxu0 0.0
        %733 = vmatpush1.msra.mxu0 0.0
        %734 = vmatprep.subr.mxu0 0.0
        %735 = vmatpush1.msra.mxu0 0.0
        %736 = vmatprep.subr.mxu0 0.0
        %737 = vmatpush1.msra.mxu0 0.0
        %738 = vmatprep.subr.mxu0 0.0
        %739 = vmatpush1.msra.mxu0 0.0
        %740 = vmatprep.subr.mxu0 0.0
        %741 = vmatpush1.msra.mxu0 0.0
        %742 = vmatprep.subr.mxu0 0.0
        %743 = vmatpush1.msra.mxu0 0.0
        %744 = vmatprep.subr.mxu0 0.0
        %745 = vmatpush1.msra.mxu0 0.0
        %746 = vmatprep.subr.mxu0 0.0
        %747 = vmatpush1.msra.mxu0 %v638
        %748 = vmatprep.subr.mxu0 0.0
        %749 = vmatpush2.msra.mxu0 0.0
        %750 = vmatprep.subr.mxu0 0.0
        %751 = vmatpush2.msra.mxu0 0.0
        %752 = vmatprep.subr.mxu0 0.0
        %753 = vmatpush2.msra.mxu0 0.0
        %754 = vmatprep.subr.mxu0 0.0
        %755 = vmatpush2.msra.mxu0 0.0
        %756 = vmatprep.subr.mxu0 0.0
        %757 = vmatpush2.msra.mxu0 0.0
        %758 = vmatprep.subr.mxu0 0.0
        %759 = vmatpush2.msra.mxu0 0.0
        %760 = vmatprep.subr.mxu0 0.0
        %761 = vmatpush2.msra.mxu0 0.0
        %762 = vmatprep.subr.mxu0 0.0
        %763 = vmatpush2.msra.mxu0 0.0
        %764 = vmatprep.subr.mxu0 0.0
        %765 = vmatpush2.msra.mxu0 0.0
        %766 = vmatprep.subr.mxu0 0.0
        %767 = vmatpush2.msra.mxu0 0.0
        %768 = vmatprep.subr.mxu0 0.0
        %769 = vmatpush2.msra.mxu0 0.0
        %770 = vmatprep.subr.mxu0 0.0
        %771 = vmatpush2.msra.mxu0 0.0
        %772 = vmatprep.subr.mxu0 0.0
        %773 = vmatpush2.msra.mxu0 0.0
        %774 = vmatprep.subr.mxu0 0.0
        %775 = vmatpush2.msra.mxu0 0.0
        %776 = vmatprep.subr.mxu0 0.0
        %777 = vmatpush2.msra.mxu0 0.0
        %778 = vmatprep.subr.mxu0 0.0
        %779 = vmatpush2.msra.mxu0 0.0
        %780 = vmatprep.mubr.f32.mxu0 0.0
        %781 = vmatmul.mubr.f32.gmra.mxu0 %v643
        %v782 = vpop.f32.mrf.mxu0
        %v783 = vadd.f32 0.0, %v782
        %v784 = vpop.f32.mrf.mxu0
        %785 = vdwg.mxu0
        %v786 = vadd.f32 %v551, %v712
        %v787 = vadd.f32 %v553, %v714
        %v788 = vadd.f32 %v622, %v783
        %s789 = scalar_lea.vmem %s1, 24
        %v790 = vld [vmem:[%s789] sm:$0xff]
        %791 = vrot.lane.b32.xlu0 %v310, 110
        %v792 = vpop.permute.xlu0 %791
        %793 = vrot.lane.b32.xlu0 %v311, 110
        %v794 = vpop.permute.xlu0 %793
        %795 = vrot.lane.b32.xlu0 %v312, 110
        %v796 = vpop.permute.xlu0 %795
        %797 = vrot.lane.b32.xlu0 %v313, 110
        %v798 = vpop.permute.xlu0 %797
        %vm799 = vcmask 900096
        %v800 = vsel %vm799, %v792, %v794
        %v801 = vsel %vm799, %v794, %v796
        %v802 = vsel %vm799, %v796, %v798
        %v807 = vsel %vm336, %v790, 0
        %809 = vmatprep.subr.mxu0 0.0
        %810 = vmatpush1.msra.mxu0 0.0
        %811 = vmatprep.subr.mxu0 0.0
        %812 = vmatpush1.msra.mxu0 0.0
        %813 = vmatprep.subr.mxu0 0.0
        %814 = vmatpush1.msra.mxu0 0.0
        %815 = vmatprep.subr.mxu0 0.0
        %816 = vmatpush1.msra.mxu0 0.0
        %817 = vmatprep.subr.mxu0 0.0
        %818 = vmatpush1.msra.mxu0 0.0
        %819 = vmatprep.subr.mxu0 0.0
        %820 = vmatpush1.msra.mxu0 0.0
        %821 = vmatprep.subr.mxu0 0.0
        %822 = vmatpush1.msra.mxu0 0.0
        %823 = vmatprep.subr.mxu0 0.0
        %824 = vmatpush1.msra.mxu0 0.0
        %825 = vmatprep.subr.mxu0 0.0
        %826 = vmatpush1.msra.mxu0 0.0
        %827 = vmatprep.subr.mxu0 0.0
        %828 = vmatpush1.msra.mxu0 0.0
        %829 = vmatprep.subr.mxu0 0.0
        %830 = vmatpush1.msra.mxu0 0.0
        %831 = vmatprep.subr.mxu0 0.0
        %832 = vmatpush1.msra.mxu0 0.0
        %833 = vmatprep.subr.mxu0 0.0
        %834 = vmatpush1.msra.mxu0 0.0
        %835 = vmatprep.subr.mxu0 0.0
        %836 = vmatpush1.msra.mxu0 0.0
        %837 = vmatprep.subr.mxu0 0.0
        %838 = vmatpush1.msra.mxu0 0.0
        %839 = vmatprep.subr.mxu0 %v801
        %840 = vmatpush1.msra.mxu0 %v800
        %841 = vmatprep.subr.mxu0 0.0
        %842 = vmatpush2.msra.mxu0 0.0
        %843 = vmatprep.subr.mxu0 0.0
        %844 = vmatpush2.msra.mxu0 0.0
        %845 = vmatprep.subr.mxu0 0.0
        %846 = vmatpush2.msra.mxu0 0.0
        %847 = vmatprep.subr.mxu0 0.0
        %848 = vmatpush2.msra.mxu0 0.0
        %849 = vmatprep.subr.mxu0 0.0
        %850 = vmatpush2.msra.mxu0 0.0
        %851 = vmatprep.subr.mxu0 0.0
        %852 = vmatpush2.msra.mxu0 0.0
        %853 = vmatprep.subr.mxu0 0.0
        %854 = vmatpush2.msra.mxu0 0.0
        %855 = vmatprep.subr.mxu0 0.0
        %856 = vmatpush2.msra.mxu0 0.0
        %857 = vmatprep.subr.mxu0 0.0
        %858 = vmatpush2.msra.mxu0 0.0
        %859 = vmatprep.subr.mxu0 0.0
        %860 = vmatpush2.msra.mxu0 0.0
        %861 = vmatprep.subr.mxu0 0.0
        %862 = vmatpush2.msra.mxu0 0.0
        %863 = vmatprep.subr.mxu0 0.0
        %864 = vmatpush2.msra.mxu0 0.0
        %865 = vmatprep.subr.mxu0 0.0
        %866 = vmatpush2.msra.mxu0 0.0
        %867 = vmatprep.subr.mxu0 0.0
        %868 = vmatpush2.msra.mxu0 0.0
        %869 = vmatprep.subr.mxu0 0.0
        %870 = vmatpush2.msra.mxu0 0.0
        %871 = vmatprep.subr.mxu0 0.0
        %872 = vmatpush2.msra.mxu0 0.0
        %873 = vmatprep.mubr.f32.mxu0 0.0
        %874 = vmatmul.mubr.f32.gmra.mxu0 %v807
        %v875 = vpop.f32.mrf.mxu0
        %v876 = vadd.f32 0.0, %v875
        %v877 = vpop.f32.mrf.mxu0
        %v878 = vadd.f32 0.0, %v877
        %879 = vdwg.mxu0
        %880 = vmatprep.subr.mxu0 0.0
        %881 = vmatpush1.msra.mxu0 0.0
        %882 = vmatprep.subr.mxu0 0.0
        %883 = vmatpush1.msra.mxu0 0.0
        %884 = vmatprep.subr.mxu0 0.0
        %885 = vmatpush1.msra.mxu0 0.0
        %886 = vmatprep.subr.mxu0 0.0
        %887 = vmatpush1.msra.mxu0 0.0
        %888 = vmatprep.subr.mxu0 0.0
        %889 = vmatpush1.msra.mxu0 0.0
        %890 = vmatprep.subr.mxu0 0.0
        %891 = vmatpush1.msra.mxu0 0.0
        %892 = vmatprep.subr.mxu0 0.0
        %893 = vmatpush1.msra.mxu0 0.0
        %894 = vmatprep.subr.mxu0 0.0
        %895 = vmatpush1.msra.mxu0 0.0
        %896 = vmatprep.subr.mxu0 0.0
        %897 = vmatpush1.msra.mxu0 0.0
        %898 = vmatprep.subr.mxu0 0.0
        %899 = vmatpush1.msra.mxu0 0.0
        %900 = vmatprep.subr.mxu0 0.0
        %901 = vmatpush1.msra.mxu0 0.0
        %902 = vmatprep.subr.mxu0 0.0
        %903 = vmatpush1.msra.mxu0 0.0
        %904 = vmatprep.subr.mxu0 0.0
        %905 = vmatpush1.msra.mxu0 0.0
        %906 = vmatprep.subr.mxu0 0.0
        %907 = vmatpush1.msra.mxu0 0.0
        %908 = vmatprep.subr.mxu0 0.0
        %909 = vmatpush1.msra.mxu0 0.0
        %910 = vmatprep.subr.mxu0 0.0
        %911 = vmatpush1.msra.mxu0 %v802
        %912 = vmatprep.subr.mxu0 0.0
        %913 = vmatpush2.msra.mxu0 0.0
        %914 = vmatprep.subr.mxu0 0.0
        %915 = vmatpush2.msra.mxu0 0.0
        %916 = vmatprep.subr.mxu0 0.0
        %917 = vmatpush2.msra.mxu0 0.0
        %918 = vmatprep.subr.mxu0 0.0
        %919 = vmatpush2.msra.mxu0 0.0
        %920 = vmatprep.subr.mxu0 0.0
        %921 = vmatpush2.msra.mxu0 0.0
        %922 = vmatprep.subr.mxu0 0.0
        %923 = vmatpush2.msra.mxu0 0.0
        %924 = vmatprep.subr.mxu0 0.0
        %925 = vmatpush2.msra.mxu0 0.0
        %926 = vmatprep.subr.mxu0 0.0
        %927 = vmatpush2.msra.mxu0 0.0
        %928 = vmatprep.subr.mxu0 0.0
        %929 = vmatpush2.msra.mxu0 0.0
        %930 = vmatprep.subr.mxu0 0.0
        %931 = vmatpush2.msra.mxu0 0.0
        %932 = vmatprep.subr.mxu0 0.0
        %933 = vmatpush2.msra.mxu0 0.0
        %934 = vmatprep.subr.mxu0 0.0
        %935 = vmatpush2.msra.mxu0 0.0
        %936 = vmatprep.subr.mxu0 0.0
        %937 = vmatpush2.msra.mxu0 0.0
        %938 = vmatprep.subr.mxu0 0.0
        %939 = vmatpush2.msra.mxu0 0.0
        %940 = vmatprep.subr.mxu0 0.0
        %941 = vmatpush2.msra.mxu0 0.0
        %942 = vmatprep.subr.mxu0 0.0
        %943 = vmatpush2.msra.mxu0 0.0
        %944 = vmatprep.mubr.f32.mxu0 0.0
        %945 = vmatmul.mubr.f32.gmra.mxu0 %v807
        %v946 = vpop.f32.mrf.mxu0
        %v947 = vadd.f32 0.0, %v946
        %v948 = vpop.f32.mrf.mxu0
        %949 = vdwg.mxu0
        %v950 = vadd.f32 %v786, %v876
        %v951 = vadd.f32 %v787, %v878
        %v952 = vadd.f32 %v788, %v947
        %s953 = scalar_lea.vmem %s1, 32
        %v954 = vld [vmem:[%s953] sm:$0xff]
        %955 = vrot.lane.b32.xlu0 %v310, 109
        %v956 = vpop.permute.xlu0 %955
        %957 = vrot.lane.b32.xlu0 %v311, 109
        %v958 = vpop.permute.xlu0 %957
        %959 = vrot.lane.b32.xlu0 %v312, 109
        %v960 = vpop.permute.xlu0 %959
        %961 = vrot.lane.b32.xlu0 %v313, 109
        %v962 = vpop.permute.xlu0 %961
        %vm963 = vcmask 891904
        %v964 = vsel %vm963, %v956, %v958
        %v965 = vsel %vm963, %v958, %v960
        %v966 = vsel %vm963, %v960, %v962
        %v971 = vsel %vm336, %v954, 0
        %973 = vmatprep.subr.mxu0 0.0
        %974 = vmatpush1.msra.mxu0 0.0
        %975 = vmatprep.subr.mxu0 0.0
        %976 = vmatpush1.msra.mxu0 0.0
        %977 = vmatprep.subr.mxu0 0.0
        %978 = vmatpush1.msra.mxu0 0.0
        %979 = vmatprep.subr.mxu0 0.0
        %980 = vmatpush1.msra.mxu0 0.0
        %981 = vmatprep.subr.mxu0 0.0
        %982 = vmatpush1.msra.mxu0 0.0
        %983 = vmatprep.subr.mxu0 0.0
        %984 = vmatpush1.msra.mxu0 0.0
        %985 = vmatprep.subr.mxu0 0.0
        %986 = vmatpush1.msra.mxu0 0.0
        %987 = vmatprep.subr.mxu0 0.0
        %988 = vmatpush1.msra.mxu0 0.0
        %989 = vmatprep.subr.mxu0 0.0
        %990 = vmatpush1.msra.mxu0 0.0
        %991 = vmatprep.subr.mxu0 0.0
        %992 = vmatpush1.msra.mxu0 0.0
        %993 = vmatprep.subr.mxu0 0.0
        %994 = vmatpush1.msra.mxu0 0.0
        %995 = vmatprep.subr.mxu0 0.0
        %996 = vmatpush1.msra.mxu0 0.0
        %997 = vmatprep.subr.mxu0 0.0
        %998 = vmatpush1.msra.mxu0 0.0
        %999 = vmatprep.subr.mxu0 0.0
        %1000 = vmatpush1.msra.mxu0 0.0
        %1001 = vmatprep.subr.mxu0 0.0
        %1002 = vmatpush1.msra.mxu0 0.0
        %1003 = vmatprep.subr.mxu0 %v965
        %1004 = vmatpush1.msra.mxu0 %v964
        %1005 = vmatprep.subr.mxu0 0.0
        %1006 = vmatpush2.msra.mxu0 0.0
        %1007 = vmatprep.subr.mxu0 0.0
        %1008 = vmatpush2.msra.mxu0 0.0
        %1009 = vmatprep.subr.mxu0 0.0
        %1010 = vmatpush2.msra.mxu0 0.0
        %1011 = vmatprep.subr.mxu0 0.0
        %1012 = vmatpush2.msra.mxu0 0.0
        %1013 = vmatprep.subr.mxu0 0.0
        %1014 = vmatpush2.msra.mxu0 0.0
        %1015 = vmatprep.subr.mxu0 0.0
        %1016 = vmatpush2.msra.mxu0 0.0
        %1017 = vmatprep.subr.mxu0 0.0
        %1018 = vmatpush2.msra.mxu0 0.0
        %1019 = vmatprep.subr.mxu0 0.0
        %1020 = vmatpush2.msra.mxu0 0.0
        %1021 = vmatprep.subr.mxu0 0.0
        %1022 = vmatpush2.msra.mxu0 0.0
        %1023 = vmatprep.subr.mxu0 0.0
        %1024 = vmatpush2.msra.mxu0 0.0
        %1025 = vmatprep.subr.mxu0 0.0
        %1026 = vmatpush2.msra.mxu0 0.0
        %1027 = vmatprep.subr.mxu0 0.0
        %1028 = vmatpush2.msra.mxu0 0.0
        %1029 = vmatprep.subr.mxu0 0.0
        %1030 = vmatpush2.msra.mxu0 0.0
        %1031 = vmatprep.subr.mxu0 0.0
        %1032 = vmatpush2.msra.mxu0 0.0
        %1033 = vmatprep.subr.mxu0 0.0
        %1034 = vmatpush2.msra.mxu0 0.0
        %1035 = vmatprep.subr.mxu0 0.0
        %1036 = vmatpush2.msra.mxu0 0.0
        %1037 = vmatprep.mubr.f32.mxu0 0.0
        %1038 = vmatmul.mubr.f32.gmra.mxu0 %v971
        %v1039 = vpop.f32.mrf.mxu0
        %v1040 = vadd.f32 0.0, %v1039
        %v1041 = vpop.f32.mrf.mxu0
        %v1042 = vadd.f32 0.0, %v1041
        %1043 = vdwg.mxu0
        %1044 = vmatprep.subr.mxu0 0.0
        %1045 = vmatpush1.msra.mxu0 0.0
        %1046 = vmatprep.subr.mxu0 0.0
        %1047 = vmatpush1.msra.mxu0 0.0
        %1048 = vmatprep.subr.mxu0 0.0
        %1049 = vmatpush1.msra.mxu0 0.0
        %1050 = vmatprep.subr.mxu0 0.0
        %1051 = vmatpush1.msra.mxu0 0.0
        %1052 = vmatprep.subr.mxu0 0.0
        %1053 = vmatpush1.msra.mxu0 0.0
        %1054 = vmatprep.subr.mxu0 0.0
        %1055 = vmatpush1.msra.mxu0 0.0
        %1056 = vmatprep.subr.mxu0 0.0
        %1057 = vmatpush1.msra.mxu0 0.0
        %1058 = vmatprep.subr.mxu0 0.0
        %1059 = vmatpush1.msra.mxu0 0.0
        %1060 = vmatprep.subr.mxu0 0.0
        %1061 = vmatpush1.msra.mxu0 0.0
        %1062 = vmatprep.subr.mxu0 0.0
        %1063 = vmatpush1.msra.mxu0 0.0
        %1064 = vmatprep.subr.mxu0 0.0
        %1065 = vmatpush1.msra.mxu0 0.0
        %1066 = vmatprep.subr.mxu0 0.0
        %1067 = vmatpush1.msra.mxu0 0.0
        %1068 = vmatprep.subr.mxu0 0.0
        %1069 = vmatpush1.msra.mxu0 0.0
        %1070 = vmatprep.subr.mxu0 0.0
        %1071 = vmatpush1.msra.mxu0 0.0
        %1072 = vmatprep.subr.mxu0 0.0
        %1073 = vmatpush1.msra.mxu0 0.0
        %1074 = vmatprep.subr.mxu0 0.0
        %1075 = vmatpush1.msra.mxu0 %v966
        %1076 = vmatprep.subr.mxu0 0.0
        %1077 = vmatpush2.msra.mxu0 0.0
        %1078 = vmatprep.subr.mxu0 0.0
        %1079 = vmatpush2.msra.mxu0 0.0
        %1080 = vmatprep.subr.mxu0 0.0
        %1081 = vmatpush2.msra.mxu0 0.0
        %1082 = vmatprep.subr.mxu0 0.0
        %1083 = vmatpush2.msra.mxu0 0.0
        %1084 = vmatprep.subr.mxu0 0.0
        %1085 = vmatpush2.msra.mxu0 0.0
        %1086 = vmatprep.subr.mxu0 0.0
        %1087 = vmatpush2.msra.mxu0 0.0
        %1088 = vmatprep.subr.mxu0 0.0
        %1089 = vmatpush2.msra.mxu0 0.0
        %1090 = vmatprep.subr.mxu0 0.0
        %1091 = vmatpush2.msra.mxu0 0.0
        %1092 = vmatprep.subr.mxu0 0.0
        %1093 = vmatpush2.msra.mxu0 0.0
        %1094 = vmatprep.subr.mxu0 0.0
        %1095 = vmatpush2.msra.mxu0 0.0
        %1096 = vmatprep.subr.mxu0 0.0
        %1097 = vmatpush2.msra.mxu0 0.0
        %1098 = vmatprep.subr.mxu0 0.0
        %1099 = vmatpush2.msra.mxu0 0.0
        %1100 = vmatprep.subr.mxu0 0.0
        %1101 = vmatpush2.msra.mxu0 0.0
        %1102 = vmatprep.subr.mxu0 0.0
        %1103 = vmatpush2.msra.mxu0 0.0
        %1104 = vmatprep.subr.mxu0 0.0
        %1105 = vmatpush2.msra.mxu0 0.0
        %1106 = vmatprep.subr.mxu0 0.0
        %1107 = vmatpush2.msra.mxu0 0.0
        %1108 = vmatprep.mubr.f32.mxu0 0.0
        %1109 = vmatmul.mubr.f32.gmra.mxu0 %v971
        %v1110 = vpop.f32.mrf.mxu0
        %v1111 = vadd.f32 0.0, %v1110
        %v1112 = vpop.f32.mrf.mxu0
        %1113 = vdwg.mxu0
        %v1114 = vadd.f32 %v950, %v1040
        %v1115 = vadd.f32 %v951, %v1042
        %v1116 = vadd.f32 %v952, %v1111
        %s1117 = scalar_lea.vmem %s1, 40
        %v1118 = vld [vmem:[%s1117] sm:$0xff]
        %1119 = vrot.lane.b32.xlu0 %v310, 108
        %v1120 = vpop.permute.xlu0 %1119
        %1121 = vrot.lane.b32.xlu0 %v311, 108
        %v1122 = vpop.permute.xlu0 %1121
        %1123 = vrot.lane.b32.xlu0 %v312, 108
        %v1124 = vpop.permute.xlu0 %1123
        %1125 = vrot.lane.b32.xlu0 %v313, 108
        %v1126 = vpop.permute.xlu0 %1125
        %vm1127 = vcmask 883712
        %v1128 = vsel %vm1127, %v1120, %v1122
        %v1129 = vsel %vm1127, %v1122, %v1124
        %v1130 = vsel %vm1127, %v1124, %v1126
        %v1135 = vsel %vm336, %v1118, 0
        %1137 = vmatprep.subr.mxu0 0.0
        %1138 = vmatpush1.msra.mxu0 0.0
        %1139 = vmatprep.subr.mxu0 0.0
        %1140 = vmatpush1.msra.mxu0 0.0
        %1141 = vmatprep.subr.mxu0 0.0
        %1142 = vmatpush1.msra.mxu0 0.0
        %1143 = vmatprep.subr.mxu0 0.0
        %1144 = vmatpush1.msra.mxu0 0.0
        %1145 = vmatprep.subr.mxu0 0.0
        %1146 = vmatpush1.msra.mxu0 0.0
        %1147 = vmatprep.subr.mxu0 0.0
        %1148 = vmatpush1.msra.mxu0 0.0
        %1149 = vmatprep.subr.mxu0 0.0
        %1150 = vmatpush1.msra.mxu0 0.0
        %1151 = vmatprep.subr.mxu0 0.0
        %1152 = vmatpush1.msra.mxu0 0.0
        %1153 = vmatprep.subr.mxu0 0.0
        %1154 = vmatpush1.msra.mxu0 0.0
        %1155 = vmatprep.subr.mxu0 0.0
        %1156 = vmatpush1.msra.mxu0 0.0
        %1157 = vmatprep.subr.mxu0 0.0
        %1158 = vmatpush1.msra.mxu0 0.0
        %1159 = vmatprep.subr.mxu0 0.0
        %1160 = vmatpush1.msra.mxu0 0.0
        %1161 = vmatprep.subr.mxu0 0.0
        %1162 = vmatpush1.msra.mxu0 0.0
        %1163 = vmatprep.subr.mxu0 0.0
        %1164 = vmatpush1.msra.mxu0 0.0
        %1165 = vmatprep.subr.mxu0 0.0
        %1166 = vmatpush1.msra.mxu0 0.0
        %1167 = vmatprep.subr.mxu0 %v1129
        %1168 = vmatpush1.msra.mxu0 %v1128
        %1169 = vmatprep.subr.mxu0 0.0
        %1170 = vmatpush2.msra.mxu0 0.0
        %1171 = vmatprep.subr.mxu0 0.0
        %1172 = vmatpush2.msra.mxu0 0.0
        %1173 = vmatprep.subr.mxu0 0.0
        %1174 = vmatpush2.msra.mxu0 0.0
        %1175 = vmatprep.subr.mxu0 0.0
        %1176 = vmatpush2.msra.mxu0 0.0
        %1177 = vmatprep.subr.mxu0 0.0
        %1178 = vmatpush2.msra.mxu0 0.0
        %1179 = vmatprep.subr.mxu0 0.0
        %1180 = vmatpush2.msra.mxu0 0.0
        %1181 = vmatprep.subr.mxu0 0.0
        %1182 = vmatpush2.msra.mxu0 0.0
        %1183 = vmatprep.subr.mxu0 0.0
        %1184 = vmatpush2.msra.mxu0 0.0
        %1185 = vmatprep.subr.mxu0 0.0
        %1186 = vmatpush2.msra.mxu0 0.0
        %1187 = vmatprep.subr.mxu0 0.0
        %1188 = vmatpush2.msra.mxu0 0.0
        %1189 = vmatprep.subr.mxu0 0.0
        %1190 = vmatpush2.msra.mxu0 0.0
        %1191 = vmatprep.subr.mxu0 0.0
        %1192 = vmatpush2.msra.mxu0 0.0
        %1193 = vmatprep.subr.mxu0 0.0
        %1194 = vmatpush2.msra.mxu0 0.0
        %1195 = vmatprep.subr.mxu0 0.0
        %1196 = vmatpush2.msra.mxu0 0.0
        %1197 = vmatprep.subr.mxu0 0.0
        %1198 = vmatpush2.msra.mxu0 0.0
        %1199 = vmatprep.subr.mxu0 0.0
        %1200 = vmatpush2.msra.mxu0 0.0
        %1201 = vmatprep.mubr.f32.mxu0 0.0
        %1202 = vmatmul.mubr.f32.gmra.mxu0 %v1135
        %v1203 = vpop.f32.mrf.mxu0
        %v1204 = vadd.f32 0.0, %v1203
        %v1205 = vpop.f32.mrf.mxu0
        %v1206 = vadd.f32 0.0, %v1205
        %1207 = vdwg.mxu0
        %1208 = vmatprep.subr.mxu0 0.0
        %1209 = vmatpush1.msra.mxu0 0.0
        %1210 = vmatprep.subr.mxu0 0.0
        %1211 = vmatpush1.msra.mxu0 0.0
        %1212 = vmatprep.subr.mxu0 0.0
        %1213 = vmatpush1.msra.mxu0 0.0
        %1214 = vmatprep.subr.mxu0 0.0
        %1215 = vmatpush1.msra.mxu0 0.0
        %1216 = vmatprep.subr.mxu0 0.0
        %1217 = vmatpush1.msra.mxu0 0.0
        %1218 = vmatprep.subr.mxu0 0.0
        %1219 = vmatpush1.msra.mxu0 0.0
        %1220 = vmatprep.subr.mxu0 0.0
        %1221 = vmatpush1.msra.mxu0 0.0
        %1222 = vmatprep.subr.mxu0 0.0
        %1223 = vmatpush1.msra.mxu0 0.0
        %1224 = vmatprep.subr.mxu0 0.0
        %1225 = vmatpush1.msra.mxu0 0.0
        %1226 = vmatprep.subr.mxu0 0.0
        %1227 = vmatpush1.msra.mxu0 0.0
        %1228 = vmatprep.subr.mxu0 0.0
        %1229 = vmatpush1.msra.mxu0 0.0
        %1230 = vmatprep.subr.mxu0 0.0
        %1231 = vmatpush1.msra.mxu0 0.0
        %1232 = vmatprep.subr.mxu0 0.0
        %1233 = vmatpush1.msra.mxu0 0.0
        %1234 = vmatprep.subr.mxu0 0.0
        %1235 = vmatpush1.msra.mxu0 0.0
        %1236 = vmatprep.subr.mxu0 0.0
        %1237 = vmatpush1.msra.mxu0 0.0
        %1238 = vmatprep.subr.mxu0 0.0
        %1239 = vmatpush1.msra.mxu0 %v1130
        %1240 = vmatprep.subr.mxu0 0.0
        %1241 = vmatpush2.msra.mxu0 0.0
        %1242 = vmatprep.subr.mxu0 0.0
        %1243 = vmatpush2.msra.mxu0 0.0
        %1244 = vmatprep.subr.mxu0 0.0
        %1245 = vmatpush2.msra.mxu0 0.0
        %1246 = vmatprep.subr.mxu0 0.0
        %1247 = vmatpush2.msra.mxu0 0.0
        %1248 = vmatprep.subr.mxu0 0.0
        %1249 = vmatpush2.msra.mxu0 0.0
        %1250 = vmatprep.subr.mxu0 0.0
        %1251 = vmatpush2.msra.mxu0 0.0
        %1252 = vmatprep.subr.mxu0 0.0
        %1253 = vmatpush2.msra.mxu0 0.0
        %1254 = vmatprep.subr.mxu0 0.0
        %1255 = vmatpush2.msra.mxu0 0.0
        %1256 = vmatprep.subr.mxu0 0.0
        %1257 = vmatpush2.msra.mxu0 0.0
        %1258 = vmatprep.subr.mxu0 0.0
        %1259 = vmatpush2.msra.mxu0 0.0
        %1260 = vmatprep.subr.mxu0 0.0
        %1261 = vmatpush2.msra.mxu0 0.0
        %1262 = vmatprep.subr.mxu0 0.0
        %1263 = vmatpush2.msra.mxu0 0.0
        %1264 = vmatprep.subr.mxu0 0.0
        %1265 = vmatpush2.msra.mxu0 0.0
        %1266 = vmatprep.subr.mxu0 0.0
        %1267 = vmatpush2.msra.mxu0 0.0
        %1268 = vmatprep.subr.mxu0 0.0
        %1269 = vmatpush2.msra.mxu0 0.0
        %1270 = vmatprep.subr.mxu0 0.0
        %1271 = vmatpush2.msra.mxu0 0.0
        %1272 = vmatprep.mubr.f32.mxu0 0.0
        %1273 = vmatmul.mubr.f32.gmra.mxu0 %v1135
        %v1274 = vpop.f32.mrf.mxu0
        %v1275 = vadd.f32 0.0, %v1274
        %v1276 = vpop.f32.mrf.mxu0
        %1277 = vdwg.mxu0
        %v1278 = vadd.f32 %v1114, %v1204
        %v1279 = vadd.f32 %v1115, %v1206
        %v1280 = vadd.f32 %v1116, %v1275
        %s1281 = scalar_lea.vmem %s1, 48
        %v1282 = vld [vmem:[%s1281] sm:$0xff]
        %1283 = vrot.lane.b32.xlu0 %v310, 92
        %v1284 = vpop.permute.xlu0 %1283
        %1285 = vrot.lane.b32.xlu0 %v311, 92
        %v1286 = vpop.permute.xlu0 %1285
        %1287 = vrot.lane.b32.xlu0 %v312, 92
        %v1288 = vpop.permute.xlu0 %1287
        %1289 = vrot.lane.b32.xlu0 %v313, 92
        %v1290 = vpop.permute.xlu0 %1289
        %vm1291 = vcmask 752640
        %v1292 = vsel %vm1291, %v1284, %v1286
        %v1293 = vsel %vm1291, %v1286, %v1288
        %v1294 = vsel %vm1291, %v1288, %v1290
        %v1299 = vsel %vm336, %v1282, 0
        %1301 = vmatprep.subr.mxu0 0.0
        %1302 = vmatpush1.msra.mxu0 0.0
        %1303 = vmatprep.subr.mxu0 0.0
        %1304 = vmatpush1.msra.mxu0 0.0
        %1305 = vmatprep.subr.mxu0 0.0
        %1306 = vmatpush1.msra.mxu0 0.0
        %1307 = vmatprep.subr.mxu0 0.0
        %1308 = vmatpush1.msra.mxu0 0.0
        %1309 = vmatprep.subr.mxu0 0.0
        %1310 = vmatpush1.msra.mxu0 0.0
        %1311 = vmatprep.subr.mxu0 0.0
        %1312 = vmatpush1.msra.mxu0 0.0
        %1313 = vmatprep.subr.mxu0 0.0
        %1314 = vmatpush1.msra.mxu0 0.0
        %1315 = vmatprep.subr.mxu0 0.0
        %1316 = vmatpush1.msra.mxu0 0.0
        %1317 = vmatprep.subr.mxu0 0.0
        %1318 = vmatpush1.msra.mxu0 0.0
        %1319 = vmatprep.subr.mxu0 0.0
        %1320 = vmatpush1.msra.mxu0 0.0
        %1321 = vmatprep.subr.mxu0 0.0
        %1322 = vmatpush1.msra.mxu0 0.0
        %1323 = vmatprep.subr.mxu0 0.0
        %1324 = vmatpush1.msra.mxu0 0.0
        %1325 = vmatprep.subr.mxu0 0.0
        %1326 = vmatpush1.msra.mxu0 0.0
        %1327 = vmatprep.subr.mxu0 0.0
        %1328 = vmatpush1.msra.mxu0 0.0
        %1329 = vmatprep.subr.mxu0 0.0
        %1330 = vmatpush1.msra.mxu0 0.0
        %1331 = vmatprep.subr.mxu0 %v1293
        %1332 = vmatpush1.msra.mxu0 %v1292
        %1333 = vmatprep.subr.mxu0 0.0
        %1334 = vmatpush2.msra.mxu0 0.0
        %1335 = vmatprep.subr.mxu0 0.0
        %1336 = vmatpush2.msra.mxu0 0.0
        %1337 = vmatprep.subr.mxu0 0.0
        %1338 = vmatpush2.msra.mxu0 0.0
        %1339 = vmatprep.subr.mxu0 0.0
        %1340 = vmatpush2.msra.mxu0 0.0
        %1341 = vmatprep.subr.mxu0 0.0
        %1342 = vmatpush2.msra.mxu0 0.0
        %1343 = vmatprep.subr.mxu0 0.0
        %1344 = vmatpush2.msra.mxu0 0.0
        %1345 = vmatprep.subr.mxu0 0.0
        %1346 = vmatpush2.msra.mxu0 0.0
        %1347 = vmatprep.subr.mxu0 0.0
        %1348 = vmatpush2.msra.mxu0 0.0
        %1349 = vmatprep.subr.mxu0 0.0
        %1350 = vmatpush2.msra.mxu0 0.0
        %1351 = vmatprep.subr.mxu0 0.0
        %1352 = vmatpush2.msra.mxu0 0.0
        %1353 = vmatprep.subr.mxu0 0.0
        %1354 = vmatpush2.msra.mxu0 0.0
        %1355 = vmatprep.subr.mxu0 0.0
        %1356 = vmatpush2.msra.mxu0 0.0
        %1357 = vmatprep.subr.mxu0 0.0
        %1358 = vmatpush2.msra.mxu0 0.0
        %1359 = vmatprep.subr.mxu0 0.0
        %1360 = vmatpush2.msra.mxu0 0.0
        %1361 = vmatprep.subr.mxu0 0.0
        %1362 = vmatpush2.msra.mxu0 0.0
        %1363 = vmatprep.subr.mxu0 0.0
        %1364 = vmatpush2.msra.mxu0 0.0
        %1365 = vmatprep.mubr.f32.mxu0 0.0
        %1366 = vmatmul.mubr.f32.gmra.mxu0 %v1299
        %v1367 = vpop.f32.mrf.mxu0
        %v1368 = vadd.f32 0.0, %v1367
        %v1369 = vpop.f32.mrf.mxu0
        %v1370 = vadd.f32 0.0, %v1369
        %1371 = vdwg.mxu0
        %1372 = vmatprep.subr.mxu0 0.0
        %1373 = vmatpush1.msra.mxu0 0.0
        %1374 = vmatprep.subr.mxu0 0.0
        %1375 = vmatpush1.msra.mxu0 0.0
        %1376 = vmatprep.subr.mxu0 0.0
        %1377 = vmatpush1.msra.mxu0 0.0
        %1378 = vmatprep.subr.mxu0 0.0
        %1379 = vmatpush1.msra.mxu0 0.0
        %1380 = vmatprep.subr.mxu0 0.0
        %1381 = vmatpush1.msra.mxu0 0.0
        %1382 = vmatprep.subr.mxu0 0.0
        %1383 = vmatpush1.msra.mxu0 0.0
        %1384 = vmatprep.subr.mxu0 0.0
        %1385 = vmatpush1.msra.mxu0 0.0
        %1386 = vmatprep.subr.mxu0 0.0
        %1387 = vmatpush1.msra.mxu0 0.0
        %1388 = vmatprep.subr.mxu0 0.0
        %1389 = vmatpush1.msra.mxu0 0.0
        %1390 = vmatprep.subr.mxu0 0.0
        %1391 = vmatpush1.msra.mxu0 0.0
        %1392 = vmatprep.subr.mxu0 0.0
        %1393 = vmatpush1.msra.mxu0 0.0
        %1394 = vmatprep.subr.mxu0 0.0
        %1395 = vmatpush1.msra.mxu0 0.0
        %1396 = vmatprep.subr.mxu0 0.0
        %1397 = vmatpush1.msra.mxu0 0.0
        %1398 = vmatprep.subr.mxu0 0.0
        %1399 = vmatpush1.msra.mxu0 0.0
        %1400 = vmatprep.subr.mxu0 0.0
        %1401 = vmatpush1.msra.mxu0 0.0
        %1402 = vmatprep.subr.mxu0 0.0
        %1403 = vmatpush1.msra.mxu0 %v1294
        %1404 = vmatprep.subr.mxu0 0.0
        %1405 = vmatpush2.msra.mxu0 0.0
        %1406 = vmatprep.subr.mxu0 0.0
        %1407 = vmatpush2.msra.mxu0 0.0
        %1408 = vmatprep.subr.mxu0 0.0
        %1409 = vmatpush2.msra.mxu0 0.0
        %1410 = vmatprep.subr.mxu0 0.0
        %1411 = vmatpush2.msra.mxu0 0.0
        %1412 = vmatprep.subr.mxu0 0.0
        %1413 = vmatpush2.msra.mxu0 0.0
        %1414 = vmatprep.subr.mxu0 0.0
        %1415 = vmatpush2.msra.mxu0 0.0
        %1416 = vmatprep.subr.mxu0 0.0
        %1417 = vmatpush2.msra.mxu0 0.0
        %1418 = vmatprep.subr.mxu0 0.0
        %1419 = vmatpush2.msra.mxu0 0.0
        %1420 = vmatprep.subr.mxu0 0.0
        %1421 = vmatpush2.msra.mxu0 0.0
        %1422 = vmatprep.subr.mxu0 0.0
        %1423 = vmatpush2.msra.mxu0 0.0
        %1424 = vmatprep.subr.mxu0 0.0
        %1425 = vmatpush2.msra.mxu0 0.0
        %1426 = vmatprep.subr.mxu0 0.0
        %1427 = vmatpush2.msra.mxu0 0.0
        %1428 = vmatprep.subr.mxu0 0.0
        %1429 = vmatpush2.msra.mxu0 0.0
        %1430 = vmatprep.subr.mxu0 0.0
        %1431 = vmatpush2.msra.mxu0 0.0
        %1432 = vmatprep.subr.mxu0 0.0
        %1433 = vmatpush2.msra.mxu0 0.0
        %1434 = vmatprep.subr.mxu0 0.0
        %1435 = vmatpush2.msra.mxu0 0.0
        %1436 = vmatprep.mubr.f32.mxu0 0.0
        %1437 = vmatmul.mubr.f32.gmra.mxu0 %v1299
        %v1438 = vpop.f32.mrf.mxu0
        %v1439 = vadd.f32 0.0, %v1438
        %v1440 = vpop.f32.mrf.mxu0
        %1441 = vdwg.mxu0
        %v1442 = vadd.f32 %v1278, %v1368
        %v1443 = vadd.f32 %v1279, %v1370
        %v1444 = vadd.f32 %v1280, %v1439
        %s1445 = scalar_lea.vmem %s1, 56
        %v1446 = vld [vmem:[%s1445] sm:$0xff]
        %1447 = vrot.lane.b32.xlu0 %v310, 91
        %v1448 = vpop.permute.xlu0 %1447
        %1449 = vrot.lane.b32.xlu0 %v311, 91
        %v1450 = vpop.permute.xlu0 %1449
        %1451 = vrot.lane.b32.xlu0 %v312, 91
        %v1452 = vpop.permute.xlu0 %1451
        %1453 = vrot.lane.b32.xlu0 %v313, 91
        %v1454 = vpop.permute.xlu0 %1453
        %vm1455 = vcmask 744448
        %v1456 = vsel %vm1455, %v1448, %v1450
        %v1457 = vsel %vm1455, %v1450, %v1452
        %v1458 = vsel %vm1455, %v1452, %v1454
        %v1463 = vsel %vm336, %v1446, 0
        %1465 = vmatprep.subr.mxu0 0.0
        %1466 = vmatpush1.msra.mxu0 0.0
        %1467 = vmatprep.subr.mxu0 0.0
        %1468 = vmatpush1.msra.mxu0 0.0
        %1469 = vmatprep.subr.mxu0 0.0
        %1470 = vmatpush1.msra.mxu0 0.0
        %1471 = vmatprep.subr.mxu0 0.0
        %1472 = vmatpush1.msra.mxu0 0.0
        %1473 = vmatprep.subr.mxu0 0.0
        %1474 = vmatpush1.msra.mxu0 0.0
        %1475 = vmatprep.subr.mxu0 0.0
        %1476 = vmatpush1.msra.mxu0 0.0
        %1477 = vmatprep.subr.mxu0 0.0
        %1478 = vmatpush1.msra.mxu0 0.0
        %1479 = vmatprep.subr.mxu0 0.0
        %1480 = vmatpush1.msra.mxu0 0.0
        %1481 = vmatprep.subr.mxu0 0.0
        %1482 = vmatpush1.msra.mxu0 0.0
        %1483 = vmatprep.subr.mxu0 0.0
        %1484 = vmatpush1.msra.mxu0 0.0
        %1485 = vmatprep.subr.mxu0 0.0
        %1486 = vmatpush1.msra.mxu0 0.0
        %1487 = vmatprep.subr.mxu0 0.0
        %1488 = vmatpush1.msra.mxu0 0.0
        %1489 = vmatprep.subr.mxu0 0.0
        %1490 = vmatpush1.msra.mxu0 0.0
        %1491 = vmatprep.subr.mxu0 0.0
        %1492 = vmatpush1.msra.mxu0 0.0
        %1493 = vmatprep.subr.mxu0 0.0
        %1494 = vmatpush1.msra.mxu0 0.0
        %1495 = vmatprep.subr.mxu0 %v1457
        %1496 = vmatpush1.msra.mxu0 %v1456
        %1497 = vmatprep.subr.mxu0 0.0
        %1498 = vmatpush2.msra.mxu0 0.0
        %1499 = vmatprep.subr.mxu0 0.0
        %1500 = vmatpush2.msra.mxu0 0.0
        %1501 = vmatprep.subr.mxu0 0.0
        %1502 = vmatpush2.msra.mxu0 0.0
        %1503 = vmatprep.subr.mxu0 0.0
        %1504 = vmatpush2.msra.mxu0 0.0
        %1505 = vmatprep.subr.mxu0 0.0
        %1506 = vmatpush2.msra.mxu0 0.0
        %1507 = vmatprep.subr.mxu0 0.0
        %1508 = vmatpush2.msra.mxu0 0.0
        %1509 = vmatprep.subr.mxu0 0.0
        %1510 = vmatpush2.msra.mxu0 0.0
        %1511 = vmatprep.subr.mxu0 0.0
        %1512 = vmatpush2.msra.mxu0 0.0
        %1513 = vmatprep.subr.mxu0 0.0
        %1514 = vmatpush2.msra.mxu0 0.0
        %1515 = vmatprep.subr.mxu0 0.0
        %1516 = vmatpush2.msra.mxu0 0.0
        %1517 = vmatprep.subr.mxu0 0.0
        %1518 = vmatpush2.msra.mxu0 0.0
        %1519 = vmatprep.subr.mxu0 0.0
        %1520 = vmatpush2.msra.mxu0 0.0
        %1521 = vmatprep.subr.mxu0 0.0
        %1522 = vmatpush2.msra.mxu0 0.0
        %1523 = vmatprep.subr.mxu0 0.0
        %1524 = vmatpush2.msra.mxu0 0.0
        %1525 = vmatprep.subr.mxu0 0.0
        %1526 = vmatpush2.msra.mxu0 0.0
        %1527 = vmatprep.subr.mxu0 0.0
        %1528 = vmatpush2.msra.mxu0 0.0
        %1529 = vmatprep.mubr.f32.mxu0 0.0
        %1530 = vmatmul.mubr.f32.gmra.mxu0 %v1463
        %v1531 = vpop.f32.mrf.mxu0
        %v1532 = vadd.f32 0.0, %v1531
        %v1533 = vpop.f32.mrf.mxu0
        %v1534 = vadd.f32 0.0, %v1533
        %1535 = vdwg.mxu0
        %1536 = vmatprep.subr.mxu0 0.0
        %1537 = vmatpush1.msra.mxu0 0.0
        %1538 = vmatprep.subr.mxu0 0.0
        %1539 = vmatpush1.msra.mxu0 0.0
        %1540 = vmatprep.subr.mxu0 0.0
        %1541 = vmatpush1.msra.mxu0 0.0
        %1542 = vmatprep.subr.mxu0 0.0
        %1543 = vmatpush1.msra.mxu0 0.0
        %1544 = vmatprep.subr.mxu0 0.0
        %1545 = vmatpush1.msra.mxu0 0.0
        %1546 = vmatprep.subr.mxu0 0.0
        %1547 = vmatpush1.msra.mxu0 0.0
        %1548 = vmatprep.subr.mxu0 0.0
        %1549 = vmatpush1.msra.mxu0 0.0
        %1550 = vmatprep.subr.mxu0 0.0
        %1551 = vmatpush1.msra.mxu0 0.0
        %1552 = vmatprep.subr.mxu0 0.0
        %1553 = vmatpush1.msra.mxu0 0.0
        %1554 = vmatprep.subr.mxu0 0.0
        %1555 = vmatpush1.msra.mxu0 0.0
        %1556 = vmatprep.subr.mxu0 0.0
        %1557 = vmatpush1.msra.mxu0 0.0
        %1558 = vmatprep.subr.mxu0 0.0
        %1559 = vmatpush1.msra.mxu0 0.0
        %1560 = vmatprep.subr.mxu0 0.0
        %1561 = vmatpush1.msra.mxu0 0.0
        %1562 = vmatprep.subr.mxu0 0.0
        %1563 = vmatpush1.msra.mxu0 0.0
        %1564 = vmatprep.subr.mxu0 0.0
        %1565 = vmatpush1.msra.mxu0 0.0
        %1566 = vmatprep.subr.mxu0 0.0
        %1567 = vmatpush1.msra.mxu0 %v1458
        %1568 = vmatprep.subr.mxu0 0.0
        %1569 = vmatpush2.msra.mxu0 0.0
        %1570 = vmatprep.subr.mxu0 0.0
        %1571 = vmatpush2.msra.mxu0 0.0
        %1572 = vmatprep.subr.mxu0 0.0
        %1573 = vmatpush2.msra.mxu0 0.0
        %1574 = vmatprep.subr.mxu0 0.0
        %1575 = vmatpush2.msra.mxu0 0.0
        %1576 = vmatprep.subr.mxu0 0.0
        %1577 = vmatpush2.msra.mxu0 0.0
        %1578 = vmatprep.subr.mxu0 0.0
        %1579 = vmatpush2.msra.mxu0 0.0
        %1580 = vmatprep.subr.mxu0 0.0
        %1581 = vmatpush2.msra.mxu0 0.0
        %1582 = vmatprep.subr.mxu0 0.0
        %1583 = vmatpush2.msra.mxu0 0.0
        %1584 = vmatprep.subr.mxu0 0.0
        %1585 = vmatpush2.msra.mxu0 0.0
        %1586 = vmatprep.subr.mxu0 0.0
        %1587 = vmatpush2.msra.mxu0 0.0
        %1588 = vmatprep.subr.mxu0 0.0
        %1589 = vmatpush2.msra.mxu0 0.0
        %1590 = vmatprep.subr.mxu0 0.0
        %1591 = vmatpush2.msra.mxu0 0.0
        %1592 = vmatprep.subr.mxu0 0.0
        %1593 = vmatpush2.msra.mxu0 0.0
        %1594 = vmatprep.subr.mxu0 0.0
        %1595 = vmatpush2.msra.mxu0 0.0
        %1596 = vmatprep.subr.mxu0 0.0
        %1597 = vmatpush2.msra.mxu0 0.0
        %1598 = vmatprep.subr.mxu0 0.0
        %1599 = vmatpush2.msra.mxu0 0.0
        %1600 = vmatprep.mubr.f32.mxu0 0.0
        %1601 = vmatmul.mubr.f32.gmra.mxu0 %v1463
        %v1602 = vpop.f32.mrf.mxu0
        %v1603 = vadd.f32 0.0, %v1602
        %v1604 = vpop.f32.mrf.mxu0
        %1605 = vdwg.mxu0
        %v1606 = vadd.f32 %v1442, %v1532
        %v1607 = vadd.f32 %v1443, %v1534
        %v1608 = vadd.f32 %v1444, %v1603
        %s1609 = scalar_lea.vmem %s1, 64
        %v1610 = vld [vmem:[%s1609] sm:$0xff]
        %1611 = vrot.lane.b32.xlu0 %v310, 90
        %v1612 = vpop.permute.xlu0 %1611
        %1613 = vrot.lane.b32.xlu0 %v311, 90
        %v1614 = vpop.permute.xlu0 %1613
        %1615 = vrot.lane.b32.xlu0 %v312, 90
        %v1616 = vpop.permute.xlu0 %1615
        %1617 = vrot.lane.b32.xlu0 %v313, 90
        %v1618 = vpop.permute.xlu0 %1617
        %vm1619 = vcmask 736256
        %v1620 = vsel %vm1619, %v1612, %v1614
        %v1621 = vsel %vm1619, %v1614, %v1616
        %v1622 = vsel %vm1619, %v1616, %v1618
        %v1627 = vsel %vm336, %v1610, 0
        %1629 = vmatprep.subr.mxu0 0.0
        %1630 = vmatpush1.msra.mxu0 0.0
        %1631 = vmatprep.subr.mxu0 0.0
        %1632 = vmatpush1.msra.mxu0 0.0
        %1633 = vmatprep.subr.mxu0 0.0
        %1634 = vmatpush1.msra.mxu0 0.0
        %1635 = vmatprep.subr.mxu0 0.0
        %1636 = vmatpush1.msra.mxu0 0.0
        %1637 = vmatprep.subr.mxu0 0.0
        %1638 = vmatpush1.msra.mxu0 0.0
        %1639 = vmatprep.subr.mxu0 0.0
        %1640 = vmatpush1.msra.mxu0 0.0
        %1641 = vmatprep.subr.mxu0 0.0
        %1642 = vmatpush1.msra.mxu0 0.0
        %1643 = vmatprep.subr.mxu0 0.0
        %1644 = vmatpush1.msra.mxu0 0.0
        %1645 = vmatprep.subr.mxu0 0.0
        %1646 = vmatpush1.msra.mxu0 0.0
        %1647 = vmatprep.subr.mxu0 0.0
        %1648 = vmatpush1.msra.mxu0 0.0
        %1649 = vmatprep.subr.mxu0 0.0
        %1650 = vmatpush1.msra.mxu0 0.0
        %1651 = vmatprep.subr.mxu0 0.0
        %1652 = vmatpush1.msra.mxu0 0.0
        %1653 = vmatprep.subr.mxu0 0.0
        %1654 = vmatpush1.msra.mxu0 0.0
        %1655 = vmatprep.subr.mxu0 0.0
        %1656 = vmatpush1.msra.mxu0 0.0
        %1657 = vmatprep.subr.mxu0 0.0
        %1658 = vmatpush1.msra.mxu0 0.0
        %1659 = vmatprep.subr.mxu0 %v1621
        %1660 = vmatpush1.msra.mxu0 %v1620
        %1661 = vmatprep.subr.mxu0 0.0
        %1662 = vmatpush2.msra.mxu0 0.0
        %1663 = vmatprep.subr.mxu0 0.0
        %1664 = vmatpush2.msra.mxu0 0.0
        %1665 = vmatprep.subr.mxu0 0.0
        %1666 = vmatpush2.msra.mxu0 0.0
        %1667 = vmatprep.subr.mxu0 0.0
        %1668 = vmatpush2.msra.mxu0 0.0
        %1669 = vmatprep.subr.mxu0 0.0
        %1670 = vmatpush2.msra.mxu0 0.0
        %1671 = vmatprep.subr.mxu0 0.0
        %1672 = vmatpush2.msra.mxu0 0.0
        %1673 = vmatprep.subr.mxu0 0.0
        %1674 = vmatpush2.msra.mxu0 0.0
        %1675 = vmatprep.subr.mxu0 0.0
        %1676 = vmatpush2.msra.mxu0 0.0
        %1677 = vmatprep.subr.mxu0 0.0
        %1678 = vmatpush2.msra.mxu0 0.0
        %1679 = vmatprep.subr.mxu0 0.0
        %1680 = vmatpush2.msra.mxu0 0.0
        %1681 = vmatprep.subr.mxu0 0.0
        %1682 = vmatpush2.msra.mxu0 0.0
        %1683 = vmatprep.subr.mxu0 0.0
        %1684 = vmatpush2.msra.mxu0 0.0
        %1685 = vmatprep.subr.mxu0 0.0
        %1686 = vmatpush2.msra.mxu0 0.0
        %1687 = vmatprep.subr.mxu0 0.0
        %1688 = vmatpush2.msra.mxu0 0.0
        %1689 = vmatprep.subr.mxu0 0.0
        %1690 = vmatpush2.msra.mxu0 0.0
        %1691 = vmatprep.subr.mxu0 0.0
        %1692 = vmatpush2.msra.mxu0 0.0
        %1693 = vmatprep.mubr.f32.mxu0 0.0
        %1694 = vmatmul.mubr.f32.gmra.mxu0 %v1627
        %v1695 = vpop.f32.mrf.mxu0
        %v1696 = vadd.f32 0.0, %v1695
        %v1697 = vpop.f32.mrf.mxu0
        %v1698 = vadd.f32 0.0, %v1697
        %1699 = vdwg.mxu0
        %1700 = vmatprep.subr.mxu0 0.0
        %1701 = vmatpush1.msra.mxu0 0.0
        %1702 = vmatprep.subr.mxu0 0.0
        %1703 = vmatpush1.msra.mxu0 0.0
        %1704 = vmatprep.subr.mxu0 0.0
        %1705 = vmatpush1.msra.mxu0 0.0
        %1706 = vmatprep.subr.mxu0 0.0
        %1707 = vmatpush1.msra.mxu0 0.0
        %1708 = vmatprep.subr.mxu0 0.0
        %1709 = vmatpush1.msra.mxu0 0.0
        %1710 = vmatprep.subr.mxu0 0.0
        %1711 = vmatpush1.msra.mxu0 0.0
        %1712 = vmatprep.subr.mxu0 0.0
        %1713 = vmatpush1.msra.mxu0 0.0
        %1714 = vmatprep.subr.mxu0 0.0
        %1715 = vmatpush1.msra.mxu0 0.0
        %1716 = vmatprep.subr.mxu0 0.0
        %1717 = vmatpush1.msra.mxu0 0.0
        %1718 = vmatprep.subr.mxu0 0.0
        %1719 = vmatpush1.msra.mxu0 0.0
        %1720 = vmatprep.subr.mxu0 0.0
        %1721 = vmatpush1.msra.mxu0 0.0
        %1722 = vmatprep.subr.mxu0 0.0
        %1723 = vmatpush1.msra.mxu0 0.0
        %1724 = vmatprep.subr.mxu0 0.0
        %1725 = vmatpush1.msra.mxu0 0.0
        %1726 = vmatprep.subr.mxu0 0.0
        %1727 = vmatpush1.msra.mxu0 0.0
        %1728 = vmatprep.subr.mxu0 0.0
        %1729 = vmatpush1.msra.mxu0 0.0
        %1730 = vmatprep.subr.mxu0 0.0
        %1731 = vmatpush1.msra.mxu0 %v1622
        %1732 = vmatprep.subr.mxu0 0.0
        %1733 = vmatpush2.msra.mxu0 0.0
        %1734 = vmatprep.subr.mxu0 0.0
        %1735 = vmatpush2.msra.mxu0 0.0
        %1736 = vmatprep.subr.mxu0 0.0
        %1737 = vmatpush2.msra.mxu0 0.0
        %1738 = vmatprep.subr.mxu0 0.0
        %1739 = vmatpush2.msra.mxu0 0.0
        %1740 = vmatprep.subr.mxu0 0.0
        %1741 = vmatpush2.msra.mxu0 0.0
        %1742 = vmatprep.subr.mxu0 0.0
        %1743 = vmatpush2.msra.mxu0 0.0
        %1744 = vmatprep.subr.mxu0 0.0
        %1745 = vmatpush2.msra.mxu0 0.0
        %1746 = vmatprep.subr.mxu0 0.0
        %1747 = vmatpush2.msra.mxu0 0.0
        %1748 = vmatprep.subr.mxu0 0.0
        %1749 = vmatpush2.msra.mxu0 0.0
        %1750 = vmatprep.subr.mxu0 0.0
        %1751 = vmatpush2.msra.mxu0 0.0
        %1752 = vmatprep.subr.mxu0 0.0
        %1753 = vmatpush2.msra.mxu0 0.0
        %1754 = vmatprep.subr.mxu0 0.0
        %1755 = vmatpush2.msra.mxu0 0.0
        %1756 = vmatprep.subr.mxu0 0.0
        %1757 = vmatpush2.msra.mxu0 0.0
        %1758 = vmatprep.subr.mxu0 0.0
        %1759 = vmatpush2.msra.mxu0 0.0
        %1760 = vmatprep.subr.mxu0 0.0
        %1761 = vmatpush2.msra.mxu0 0.0
        %1762 = vmatprep.subr.mxu0 0.0
        %1763 = vmatpush2.msra.mxu0 0.0
        %1764 = vmatprep.mubr.f32.mxu0 0.0
        %1765 = vmatmul.mubr.f32.gmra.mxu0 %v1627
        %v1766 = vpop.f32.mrf.mxu0
        %v1767 = vadd.f32 0.0, %v1766
        %v1768 = vpop.f32.mrf.mxu0
        %1769 = vdwg.mxu0
        %v1770 = vadd.f32 %v1606, %v1696
        %v1771 = vadd.f32 %v1607, %v1698
        %v1772 = vadd.f32 %v1608, %v1767
        %s1773 = sadd.s32 %s24, 1
        %p1774 = scmp.lt.s32.totalorder %s1773, 0
        %s1775 = ssub.s32 0, %s1773
        %s1776 = scalar_select %p1774, %s1775, %s1773
        %s1777 = sand.u32 %s1776, 3
        %s1778 = ssub.s32 0, %s1777
        %s1779 = scalar_select %p1774, %s1778, %s1777
        %s1780 = smul.u32 %s1779, 4
        %s1781 = smul.addr %s1780, 8
        %s1782 = scalar_lea.vmem [#allocation2], %s1781
        %v1783 = vld [vmem:[%s1782] sm:$0xff]
        %v1784 = vld [vmem:[%s1782 + $0x8] sm:$0xff]
        %v1785 = vld [vmem:[%s1782 + $0x10] sm:$0xff]
        %v1786 = vld [vmem:[%s1782 + $0x18] sm:$0xff]
        %s1787 = scalar_lea.vmem %s1, 72
        %v1788 = vld [vmem:[%s1787] sm:$0xff]
        %v1790 = vsel %vm336, %v1788, 0
        %1792 = vmatprep.subr.mxu0 0.0
        %1793 = vmatpush1.msra.mxu0 0.0
        %1794 = vmatprep.subr.mxu0 0.0
        %1795 = vmatpush1.msra.mxu0 0.0
        %1796 = vmatprep.subr.mxu0 0.0
        %1797 = vmatpush1.msra.mxu0 0.0
        %1798 = vmatprep.subr.mxu0 0.0
        %1799 = vmatpush1.msra.mxu0 0.0
        %1800 = vmatprep.subr.mxu0 0.0
        %1801 = vmatpush1.msra.mxu0 0.0
        %1802 = vmatprep.subr.mxu0 0.0
        %1803 = vmatpush1.msra.mxu0 0.0
        %1804 = vmatprep.subr.mxu0 0.0
        %1805 = vmatpush1.msra.mxu0 0.0
        %1806 = vmatprep.subr.mxu0 0.0
        %1807 = vmatpush1.msra.mxu0 0.0
        %1808 = vmatprep.subr.mxu0 0.0
        %1809 = vmatpush1.msra.mxu0 0.0
        %1810 = vmatprep.subr.mxu0 0.0
        %1811 = vmatpush1.msra.mxu0 0.0
        %1812 = vmatprep.subr.mxu0 0.0
        %1813 = vmatpush1.msra.mxu0 0.0
        %1814 = vmatprep.subr.mxu0 0.0
        %1815 = vmatpush1.msra.mxu0 0.0
        %1816 = vmatprep.subr.mxu0 0.0
        %1817 = vmatpush1.msra.mxu0 0.0
        %1818 = vmatprep.subr.mxu0 0.0
        %1819 = vmatpush1.msra.mxu0 0.0
        %1820 = vmatprep.subr.mxu0 0.0
        %1821 = vmatpush1.msra.mxu0 0.0
        %1822 = vmatprep.subr.mxu0 %v1784
        %1823 = vmatpush1.msra.mxu0 %v1783
        %1824 = vmatprep.subr.mxu0 0.0
        %1825 = vmatpush2.msra.mxu0 0.0
        %1826 = vmatprep.subr.mxu0 0.0
        %1827 = vmatpush2.msra.mxu0 0.0
        %1828 = vmatprep.subr.mxu0 0.0
        %1829 = vmatpush2.msra.mxu0 0.0
        %1830 = vmatprep.subr.mxu0 0.0
        %1831 = vmatpush2.msra.mxu0 0.0
        %1832 = vmatprep.subr.mxu0 0.0
        %1833 = vmatpush2.msra.mxu0 0.0
        %1834 = vmatprep.subr.mxu0 0.0
        %1835 = vmatpush2.msra.mxu0 0.0
        %1836 = vmatprep.subr.mxu0 0.0
        %1837 = vmatpush2.msra.mxu0 0.0
        %1838 = vmatprep.subr.mxu0 0.0
        %1839 = vmatpush2.msra.mxu0 0.0
        %1840 = vmatprep.subr.mxu0 0.0
        %1841 = vmatpush2.msra.mxu0 0.0
        %1842 = vmatprep.subr.mxu0 0.0
        %1843 = vmatpush2.msra.mxu0 0.0
        %1844 = vmatprep.subr.mxu0 0.0
        %1845 = vmatpush2.msra.mxu0 0.0
        %1846 = vmatprep.subr.mxu0 0.0
        %1847 = vmatpush2.msra.mxu0 0.0
        %1848 = vmatprep.subr.mxu0 0.0
        %1849 = vmatpush2.msra.mxu0 0.0
        %1850 = vmatprep.subr.mxu0 0.0
        %1851 = vmatpush2.msra.mxu0 0.0
        %1852 = vmatprep.subr.mxu0 0.0
        %1853 = vmatpush2.msra.mxu0 0.0
        %1854 = vmatprep.subr.mxu0 0.0
        %1855 = vmatpush2.msra.mxu0 0.0
        %1856 = vmatprep.mubr.f32.mxu0 0.0
        %1857 = vmatmul.mubr.f32.gmra.mxu0 %v1790
        %v1858 = vpop.f32.mrf.mxu0
        %v1859 = vadd.f32 0.0, %v1858
        %v1860 = vpop.f32.mrf.mxu0
        %v1861 = vadd.f32 0.0, %v1860
        %1862 = vdwg.mxu0
        %1863 = vmatprep.subr.mxu0 0.0
        %1864 = vmatpush1.msra.mxu0 0.0
        %1865 = vmatprep.subr.mxu0 0.0
        %1866 = vmatpush1.msra.mxu0 0.0
        %1867 = vmatprep.subr.mxu0 0.0
        %1868 = vmatpush1.msra.mxu0 0.0
        %1869 = vmatprep.subr.mxu0 0.0
        %1870 = vmatpush1.msra.mxu0 0.0
        %1871 = vmatprep.subr.mxu0 0.0
        %1872 = vmatpush1.msra.mxu0 0.0
        %1873 = vmatprep.subr.mxu0 0.0
        %1874 = vmatpush1.msra.mxu0 0.0
        %1875 = vmatprep.subr.mxu0 0.0
        %1876 = vmatpush1.msra.mxu0 0.0
        %1877 = vmatprep.subr.mxu0 0.0
        %1878 = vmatpush1.msra.mxu0 0.0
        %1879 = vmatprep.subr.mxu0 0.0
        %1880 = vmatpush1.msra.mxu0 0.0
        %1881 = vmatprep.subr.mxu0 0.0
        %1882 = vmatpush1.msra.mxu0 0.0
        %1883 = vmatprep.subr.mxu0 0.0
        %1884 = vmatpush1.msra.mxu0 0.0
        %1885 = vmatprep.subr.mxu0 0.0
        %1886 = vmatpush1.msra.mxu0 0.0
        %1887 = vmatprep.subr.mxu0 0.0
        %1888 = vmatpush1.msra.mxu0 0.0
        %1889 = vmatprep.subr.mxu0 0.0
        %1890 = vmatpush1.msra.mxu0 0.0
        %1891 = vmatprep.subr.mxu0 0.0
        %1892 = vmatpush1.msra.mxu0 0.0
        %1893 = vmatprep.subr.mxu0 0.0
        %1894 = vmatpush1.msra.mxu0 %v1785
        %1895 = vmatprep.subr.mxu0 0.0
        %1896 = vmatpush2.msra.mxu0 0.0
        %1897 = vmatprep.subr.mxu0 0.0
        %1898 = vmatpush2.msra.mxu0 0.0
        %1899 = vmatprep.subr.mxu0 0.0
        %1900 = vmatpush2.msra.mxu0 0.0
        %1901 = vmatprep.subr.mxu0 0.0
        %1902 = vmatpush2.msra.mxu0 0.0
        %1903 = vmatprep.subr.mxu0 0.0
        %1904 = vmatpush2.msra.mxu0 0.0
        %1905 = vmatprep.subr.mxu0 0.0
        %1906 = vmatpush2.msra.mxu0 0.0
        %1907 = vmatprep.subr.mxu0 0.0
        %1908 = vmatpush2.msra.mxu0 0.0
        %1909 = vmatprep.subr.mxu0 0.0
        %1910 = vmatpush2.msra.mxu0 0.0
        %1911 = vmatprep.subr.mxu0 0.0
        %1912 = vmatpush2.msra.mxu0 0.0
        %1913 = vmatprep.subr.mxu0 0.0
        %1914 = vmatpush2.msra.mxu0 0.0
        %1915 = vmatprep.subr.mxu0 0.0
        %1916 = vmatpush2.msra.mxu0 0.0
        %1917 = vmatprep.subr.mxu0 0.0
        %1918 = vmatpush2.msra.mxu0 0.0
        %1919 = vmatprep.subr.mxu0 0.0
        %1920 = vmatpush2.msra.mxu0 0.0
        %1921 = vmatprep.subr.mxu0 0.0
        %1922 = vmatpush2.msra.mxu0 0.0
        %1923 = vmatprep.subr.mxu0 0.0
        %1924 = vmatpush2.msra.mxu0 0.0
        %1925 = vmatprep.subr.mxu0 0.0
        %1926 = vmatpush2.msra.mxu0 0.0
        %1927 = vmatprep.mubr.f32.mxu0 0.0
        %1928 = vmatmul.mubr.f32.gmra.mxu0 %v1790
        %v1929 = vpop.f32.mrf.mxu0
        %v1930 = vadd.f32 0.0, %v1929
        %v1931 = vpop.f32.mrf.mxu0
        %1932 = vdwg.mxu0
        %v1933 = vadd.f32 %v1770, %v1859
        %v1934 = vadd.f32 %v1771, %v1861
        %v1935 = vadd.f32 %v1772, %v1930
        %s1936 = scalar_lea.vmem %s1, 80
        %v1937 = vld [vmem:[%s1936] sm:$0xff]
        %1942 = vrot.lane.b32.xlu0 %v1783, 127
        %v1943 = vpop.permute.xlu0 %1942
        %1944 = vrot.lane.b32.xlu0 %v1784, 127
        %v1945 = vpop.permute.xlu0 %1944
        %1946 = vrot.lane.b32.xlu0 %v1785, 127
        %v1947 = vpop.permute.xlu0 %1946
        %1948 = vrot.lane.b32.xlu0 %v1786, 127
        %v1949 = vpop.permute.xlu0 %1948
        %v1950 = vsel %vm329, %v1943, %v1945
        %v1951 = vsel %vm329, %v1945, %v1947
        %v1952 = vsel %vm329, %v1947, %v1949
        %v1957 = vsel %vm336, %v1937, 0
        %1959 = vmatprep.subr.mxu0 0.0
        %1960 = vmatpush1.msra.mxu0 0.0
        %1961 = vmatprep.subr.mxu0 0.0
        %1962 = vmatpush1.msra.mxu0 0.0
        %1963 = vmatprep.subr.mxu0 0.0
        %1964 = vmatpush1.msra.mxu0 0.0
        %1965 = vmatprep.subr.mxu0 0.0
        %1966 = vmatpush1.msra.mxu0 0.0
        %1967 = vmatprep.subr.mxu0 0.0
        %1968 = vmatpush1.msra.mxu0 0.0
        %1969 = vmatprep.subr.mxu0 0.0
        %1970 = vmatpush1.msra.mxu0 0.0
        %1971 = vmatprep.subr.mxu0 0.0
        %1972 = vmatpush1.msra.mxu0 0.0
        %1973 = vmatprep.subr.mxu0 0.0
        %1974 = vmatpush1.msra.mxu0 0.0
        %1975 = vmatprep.subr.mxu0 0.0
        %1976 = vmatpush1.msra.mxu0 0.0
        %1977 = vmatprep.subr.mxu0 0.0
        %1978 = vmatpush1.msra.mxu0 0.0
        %1979 = vmatprep.subr.mxu0 0.0
        %1980 = vmatpush1.msra.mxu0 0.0
        %1981 = vmatprep.subr.mxu0 0.0
        %1982 = vmatpush1.msra.mxu0 0.0
        %1983 = vmatprep.subr.mxu0 0.0
        %1984 = vmatpush1.msra.mxu0 0.0
        %1985 = vmatprep.subr.mxu0 0.0
        %1986 = vmatpush1.msra.mxu0 0.0
        %1987 = vmatprep.subr.mxu0 0.0
        %1988 = vmatpush1.msra.mxu0 0.0
        %1989 = vmatprep.subr.mxu0 %v1951
        %1990 = vmatpush1.msra.mxu0 %v1950
        %1991 = vmatprep.subr.mxu0 0.0
        %1992 = vmatpush2.msra.mxu0 0.0
        %1993 = vmatprep.subr.mxu0 0.0
        %1994 = vmatpush2.msra.mxu0 0.0
        %1995 = vmatprep.subr.mxu0 0.0
        %1996 = vmatpush2.msra.mxu0 0.0
        %1997 = vmatprep.subr.mxu0 0.0
        %1998 = vmatpush2.msra.mxu0 0.0
        %1999 = vmatprep.subr.mxu0 0.0
        %2000 = vmatpush2.msra.mxu0 0.0
        %2001 = vmatprep.subr.mxu0 0.0
        %2002 = vmatpush2.msra.mxu0 0.0
        %2003 = vmatprep.subr.mxu0 0.0
        %2004 = vmatpush2.msra.mxu0 0.0
        %2005 = vmatprep.subr.mxu0 0.0
        %2006 = vmatpush2.msra.mxu0 0.0
        %2007 = vmatprep.subr.mxu0 0.0
        %2008 = vmatpush2.msra.mxu0 0.0
        %2009 = vmatprep.subr.mxu0 0.0
        %2010 = vmatpush2.msra.mxu0 0.0
        %2011 = vmatprep.subr.mxu0 0.0
        %2012 = vmatpush2.msra.mxu0 0.0
        %2013 = vmatprep.subr.mxu0 0.0
        %2014 = vmatpush2.msra.mxu0 0.0
        %2015 = vmatprep.subr.mxu0 0.0
        %2016 = vmatpush2.msra.mxu0 0.0
        %2017 = vmatprep.subr.mxu0 0.0
        %2018 = vmatpush2.msra.mxu0 0.0
        %2019 = vmatprep.subr.mxu0 0.0
        %2020 = vmatpush2.msra.mxu0 0.0
        %2021 = vmatprep.subr.mxu0 0.0
        %2022 = vmatpush2.msra.mxu0 0.0
        %2023 = vmatprep.mubr.f32.mxu0 0.0
        %2024 = vmatmul.mubr.f32.gmra.mxu0 %v1957
        %v2025 = vpop.f32.mrf.mxu0
        %v2026 = vadd.f32 0.0, %v2025
        %v2027 = vpop.f32.mrf.mxu0
        %v2028 = vadd.f32 0.0, %v2027
        %2029 = vdwg.mxu0
        %2030 = vmatprep.subr.mxu0 0.0
        %2031 = vmatpush1.msra.mxu0 0.0
        %2032 = vmatprep.subr.mxu0 0.0
        %2033 = vmatpush1.msra.mxu0 0.0
        %2034 = vmatprep.subr.mxu0 0.0
        %2035 = vmatpush1.msra.mxu0 0.0
        %2036 = vmatprep.subr.mxu0 0.0
        %2037 = vmatpush1.msra.mxu0 0.0
        %2038 = vmatprep.subr.mxu0 0.0
        %2039 = vmatpush1.msra.mxu0 0.0
        %2040 = vmatprep.subr.mxu0 0.0
        %2041 = vmatpush1.msra.mxu0 0.0
        %2042 = vmatprep.subr.mxu0 0.0
        %2043 = vmatpush1.msra.mxu0 0.0
        %2044 = vmatprep.subr.mxu0 0.0
        %2045 = vmatpush1.msra.mxu0 0.0
        %2046 = vmatprep.subr.mxu0 0.0
        %2047 = vmatpush1.msra.mxu0 0.0
        %2048 = vmatprep.subr.mxu0 0.0
        %2049 = vmatpush1.msra.mxu0 0.0
        %2050 = vmatprep.subr.mxu0 0.0
        %2051 = vmatpush1.msra.mxu0 0.0
        %2052 = vmatprep.subr.mxu0 0.0
        %2053 = vmatpush1.msra.mxu0 0.0
        %2054 = vmatprep.subr.mxu0 0.0
        %2055 = vmatpush1.msra.mxu0 0.0
        %2056 = vmatprep.subr.mxu0 0.0
        %2057 = vmatpush1.msra.mxu0 0.0
        %2058 = vmatprep.subr.mxu0 0.0
        %2059 = vmatpush1.msra.mxu0 0.0
        %2060 = vmatprep.subr.mxu0 0.0
        %2061 = vmatpush1.msra.mxu0 %v1952
        %2062 = vmatprep.subr.mxu0 0.0
        %2063 = vmatpush2.msra.mxu0 0.0
        %2064 = vmatprep.subr.mxu0 0.0
        %2065 = vmatpush2.msra.mxu0 0.0
        %2066 = vmatprep.subr.mxu0 0.0
        %2067 = vmatpush2.msra.mxu0 0.0
        %2068 = vmatprep.subr.mxu0 0.0
        %2069 = vmatpush2.msra.mxu0 0.0
        %2070 = vmatprep.subr.mxu0 0.0
        %2071 = vmatpush2.msra.mxu0 0.0
        %2072 = vmatprep.subr.mxu0 0.0
        %2073 = vmatpush2.msra.mxu0 0.0
        %2074 = vmatprep.subr.mxu0 0.0
        %2075 = vmatpush2.msra.mxu0 0.0
        %2076 = vmatprep.subr.mxu0 0.0
        %2077 = vmatpush2.msra.mxu0 0.0
        %2078 = vmatprep.subr.mxu0 0.0
        %2079 = vmatpush2.msra.mxu0 0.0
        %2080 = vmatprep.subr.mxu0 0.0
        %2081 = vmatpush2.msra.mxu0 0.0
        %2082 = vmatprep.subr.mxu0 0.0
        %2083 = vmatpush2.msra.mxu0 0.0
        %2084 = vmatprep.subr.mxu0 0.0
        %2085 = vmatpush2.msra.mxu0 0.0
        %2086 = vmatprep.subr.mxu0 0.0
        %2087 = vmatpush2.msra.mxu0 0.0
        %2088 = vmatprep.subr.mxu0 0.0
        %2089 = vmatpush2.msra.mxu0 0.0
        %2090 = vmatprep.subr.mxu0 0.0
        %2091 = vmatpush2.msra.mxu0 0.0
        %2092 = vmatprep.subr.mxu0 0.0
        %2093 = vmatpush2.msra.mxu0 0.0
        %2094 = vmatprep.mubr.f32.mxu0 0.0
        %2095 = vmatmul.mubr.f32.gmra.mxu0 %v1957
        %v2096 = vpop.f32.mrf.mxu0
        %v2097 = vadd.f32 0.0, %v2096
        %v2098 = vpop.f32.mrf.mxu0
        %2099 = vdwg.mxu0
        %v2100 = vadd.f32 %v1933, %v2026
        %v2101 = vadd.f32 %v1934, %v2028
        %v2102 = vadd.f32 %v1935, %v2097
        %s2103 = scalar_lea.vmem %s1, 88
        %v2104 = vld [vmem:[%s2103] sm:$0xff]
        %2105 = vrot.lane.b32.xlu0 %v1783, 126
        %v2106 = vpop.permute.xlu0 %2105
        %2107 = vrot.lane.b32.xlu0 %v1784, 126
        %v2108 = vpop.permute.xlu0 %2107
        %2109 = vrot.lane.b32.xlu0 %v1785, 126
        %v2110 = vpop.permute.xlu0 %2109
        %2111 = vrot.lane.b32.xlu0 %v1786, 126
        %v2112 = vpop.permute.xlu0 %2111
        %v2113 = vsel %vm635, %v2106, %v2108
        %v2114 = vsel %vm635, %v2108, %v2110
        %v2115 = vsel %vm635, %v2110, %v2112
        %v2120 = vsel %vm336, %v2104, 0
        %2122 = vmatprep.subr.mxu0 0.0
        %2123 = vmatpush1.msra.mxu0 0.0
        %2124 = vmatprep.subr.mxu0 0.0
        %2125 = vmatpush1.msra.mxu0 0.0
        %2126 = vmatprep.subr.mxu0 0.0
        %2127 = vmatpush1.msra.mxu0 0.0
        %2128 = vmatprep.subr.mxu0 0.0
        %2129 = vmatpush1.msra.mxu0 0.0
        %2130 = vmatprep.subr.mxu0 0.0
        %2131 = vmatpush1.msra.mxu0 0.0
        %2132 = vmatprep.subr.mxu0 0.0
        %2133 = vmatpush1.msra.mxu0 0.0
        %2134 = vmatprep.subr.mxu0 0.0
        %2135 = vmatpush1.msra.mxu0 0.0
        %2136 = vmatprep.subr.mxu0 0.0
        %2137 = vmatpush1.msra.mxu0 0.0
        %2138 = vmatprep.subr.mxu0 0.0
        %2139 = vmatpush1.msra.mxu0 0.0
        %2140 = vmatprep.subr.mxu0 0.0
        %2141 = vmatpush1.msra.mxu0 0.0
        %2142 = vmatprep.subr.mxu0 0.0
        %2143 = vmatpush1.msra.mxu0 0.0
        %2144 = vmatprep.subr.mxu0 0.0
        %2145 = vmatpush1.msra.mxu0 0.0
        %2146 = vmatprep.subr.mxu0 0.0
        %2147 = vmatpush1.msra.mxu0 0.0
        %2148 = vmatprep.subr.mxu0 0.0
        %2149 = vmatpush1.msra.mxu0 0.0
        %2150 = vmatprep.subr.mxu0 0.0
        %2151 = vmatpush1.msra.mxu0 0.0
        %2152 = vmatprep.subr.mxu0 %v2114
        %2153 = vmatpush1.msra.mxu0 %v2113
        %2154 = vmatprep.subr.mxu0 0.0
        %2155 = vmatpush2.msra.mxu0 0.0
        %2156 = vmatprep.subr.mxu0 0.0
        %2157 = vmatpush2.msra.mxu0 0.0
        %2158 = vmatprep.subr.mxu0 0.0
        %2159 = vmatpush2.msra.mxu0 0.0
        %2160 = vmatprep.subr.mxu0 0.0
        %2161 = vmatpush2.msra.mxu0 0.0
        %2162 = vmatprep.subr.mxu0 0.0
        %2163 = vmatpush2.msra.mxu0 0.0
        %2164 = vmatprep.subr.mxu0 0.0
        %2165 = vmatpush2.msra.mxu0 0.0
        %2166 = vmatprep.subr.mxu0 0.0
        %2167 = vmatpush2.msra.mxu0 0.0
        %2168 = vmatprep.subr.mxu0 0.0
        %2169 = vmatpush2.msra.mxu0 0.0
        %2170 = vmatprep.subr.mxu0 0.0
        %2171 = vmatpush2.msra.mxu0 0.0
        %2172 = vmatprep.subr.mxu0 0.0
        %2173 = vmatpush2.msra.mxu0 0.0
        %2174 = vmatprep.subr.mxu0 0.0
        %2175 = vmatpush2.msra.mxu0 0.0
        %2176 = vmatprep.subr.mxu0 0.0
        %2177 = vmatpush2.msra.mxu0 0.0
        %2178 = vmatprep.subr.mxu0 0.0
        %2179 = vmatpush2.msra.mxu0 0.0
        %2180 = vmatprep.subr.mxu0 0.0
        %2181 = vmatpush2.msra.mxu0 0.0
        %2182 = vmatprep.subr.mxu0 0.0
        %2183 = vmatpush2.msra.mxu0 0.0
        %2184 = vmatprep.subr.mxu0 0.0
        %2185 = vmatpush2.msra.mxu0 0.0
        %2186 = vmatprep.mubr.f32.mxu0 0.0
        %2187 = vmatmul.mubr.f32.gmra.mxu0 %v2120
        %v2188 = vpop.f32.mrf.mxu0
        %v2189 = vadd.f32 0.0, %v2188
        %v2190 = vpop.f32.mrf.mxu0
        %v2191 = vadd.f32 0.0, %v2190
        %2192 = vdwg.mxu0
        %2193 = vmatprep.subr.mxu0 0.0
        %2194 = vmatpush1.msra.mxu0 0.0
        %2195 = vmatprep.subr.mxu0 0.0
        %2196 = vmatpush1.msra.mxu0 0.0
        %2197 = vmatprep.subr.mxu0 0.0
        %2198 = vmatpush1.msra.mxu0 0.0
        %2199 = vmatprep.subr.mxu0 0.0
        %2200 = vmatpush1.msra.mxu0 0.0
        %2201 = vmatprep.subr.mxu0 0.0
        %2202 = vmatpush1.msra.mxu0 0.0
        %2203 = vmatprep.subr.mxu0 0.0
        %2204 = vmatpush1.msra.mxu0 0.0
        %2205 = vmatprep.subr.mxu0 0.0
        %2206 = vmatpush1.msra.mxu0 0.0
        %2207 = vmatprep.subr.mxu0 0.0
        %2208 = vmatpush1.msra.mxu0 0.0
        %2209 = vmatprep.subr.mxu0 0.0
        %2210 = vmatpush1.msra.mxu0 0.0
        %2211 = vmatprep.subr.mxu0 0.0
        %2212 = vmatpush1.msra.mxu0 0.0
        %2213 = vmatprep.subr.mxu0 0.0
        %2214 = vmatpush1.msra.mxu0 0.0
        %2215 = vmatprep.subr.mxu0 0.0
        %2216 = vmatpush1.msra.mxu0 0.0
        %2217 = vmatprep.subr.mxu0 0.0
        %2218 = vmatpush1.msra.mxu0 0.0
        %2219 = vmatprep.subr.mxu0 0.0
        %2220 = vmatpush1.msra.mxu0 0.0
        %2221 = vmatprep.subr.mxu0 0.0
        %2222 = vmatpush1.msra.mxu0 0.0
        %2223 = vmatprep.subr.mxu0 0.0
        %2224 = vmatpush1.msra.mxu0 %v2115
        %2225 = vmatprep.subr.mxu0 0.0
        %2226 = vmatpush2.msra.mxu0 0.0
        %2227 = vmatprep.subr.mxu0 0.0
        %2228 = vmatpush2.msra.mxu0 0.0
        %2229 = vmatprep.subr.mxu0 0.0
        %2230 = vmatpush2.msra.mxu0 0.0
        %2231 = vmatprep.subr.mxu0 0.0
        %2232 = vmatpush2.msra.mxu0 0.0
        %2233 = vmatprep.subr.mxu0 0.0
        %2234 = vmatpush2.msra.mxu0 0.0
        %2235 = vmatprep.subr.mxu0 0.0
        %2236 = vmatpush2.msra.mxu0 0.0
        %2237 = vmatprep.subr.mxu0 0.0
        %2238 = vmatpush2.msra.mxu0 0.0
        %2239 = vmatprep.subr.mxu0 0.0
        %2240 = vmatpush2.msra.mxu0 0.0
        %2241 = vmatprep.subr.mxu0 0.0
        %2242 = vmatpush2.msra.mxu0 0.0
        %2243 = vmatprep.subr.mxu0 0.0
        %2244 = vmatpush2.msra.mxu0 0.0
        %2245 = vmatprep.subr.mxu0 0.0
        %2246 = vmatpush2.msra.mxu0 0.0
        %2247 = vmatprep.subr.mxu0 0.0
        %2248 = vmatpush2.msra.mxu0 0.0
        %2249 = vmatprep.subr.mxu0 0.0
        %2250 = vmatpush2.msra.mxu0 0.0
        %2251 = vmatprep.subr.mxu0 0.0
        %2252 = vmatpush2.msra.mxu0 0.0
        %2253 = vmatprep.subr.mxu0 0.0
        %2254 = vmatpush2.msra.mxu0 0.0
        %2255 = vmatprep.subr.mxu0 0.0
        %2256 = vmatpush2.msra.mxu0 0.0
        %2257 = vmatprep.mubr.f32.mxu0 0.0
        %2258 = vmatmul.mubr.f32.gmra.mxu0 %v2120
        %v2259 = vpop.f32.mrf.mxu0
        %v2260 = vadd.f32 0.0, %v2259
        %v2261 = vpop.f32.mrf.mxu0
        %2262 = vdwg.mxu0
        %v2263 = vadd.f32 %v2100, %v2189
        %v2264 = vadd.f32 %v2101, %v2191
        %v2265 = vadd.f32 %v2102, %v2260
        %s2266 = scalar_lea.vmem %s1, 96
        %v2267 = vld [vmem:[%s2266] sm:$0xff]
        %2268 = vrot.lane.b32.xlu0 %v1783, 110
        %v2269 = vpop.permute.xlu0 %2268
        %2270 = vrot.lane.b32.xlu0 %v1784, 110
        %v2271 = vpop.permute.xlu0 %2270
        %2272 = vrot.lane.b32.xlu0 %v1785, 110
        %v2273 = vpop.permute.xlu0 %2272
        %2274 = vrot.lane.b32.xlu0 %v1786, 110
        %v2275 = vpop.permute.xlu0 %2274
        %v2276 = vsel %vm799, %v2269, %v2271
        %v2277 = vsel %vm799, %v2271, %v2273
        %v2278 = vsel %vm799, %v2273, %v2275
        %v2283 = vsel %vm336, %v2267, 0
        %2285 = vmatprep.subr.mxu0 0.0
        %2286 = vmatpush1.msra.mxu0 0.0
        %2287 = vmatprep.subr.mxu0 0.0
        %2288 = vmatpush1.msra.mxu0 0.0
        %2289 = vmatprep.subr.mxu0 0.0
        %2290 = vmatpush1.msra.mxu0 0.0
        %2291 = vmatprep.subr.mxu0 0.0
        %2292 = vmatpush1.msra.mxu0 0.0
        %2293 = vmatprep.subr.mxu0 0.0
        %2294 = vmatpush1.msra.mxu0 0.0
        %2295 = vmatprep.subr.mxu0 0.0
        %2296 = vmatpush1.msra.mxu0 0.0
        %2297 = vmatprep.subr.mxu0 0.0
        %2298 = vmatpush1.msra.mxu0 0.0
        %2299 = vmatprep.subr.mxu0 0.0
        %2300 = vmatpush1.msra.mxu0 0.0
        %2301 = vmatprep.subr.mxu0 0.0
        %2302 = vmatpush1.msra.mxu0 0.0
        %2303 = vmatprep.subr.mxu0 0.0
        %2304 = vmatpush1.msra.mxu0 0.0
        %2305 = vmatprep.subr.mxu0 0.0
        %2306 = vmatpush1.msra.mxu0 0.0
        %2307 = vmatprep.subr.mxu0 0.0
        %2308 = vmatpush1.msra.mxu0 0.0
        %2309 = vmatprep.subr.mxu0 0.0
        %2310 = vmatpush1.msra.mxu0 0.0
        %2311 = vmatprep.subr.mxu0 0.0
        %2312 = vmatpush1.msra.mxu0 0.0
        %2313 = vmatprep.subr.mxu0 0.0
        %2314 = vmatpush1.msra.mxu0 0.0
        %2315 = vmatprep.subr.mxu0 %v2277
        %2316 = vmatpush1.msra.mxu0 %v2276
        %2317 = vmatprep.subr.mxu0 0.0
        %2318 = vmatpush2.msra.mxu0 0.0
        %2319 = vmatprep.subr.mxu0 0.0
        %2320 = vmatpush2.msra.mxu0 0.0
        %2321 = vmatprep.subr.mxu0 0.0
        %2322 = vmatpush2.msra.mxu0 0.0
        %2323 = vmatprep.subr.mxu0 0.0
        %2324 = vmatpush2.msra.mxu0 0.0
        %2325 = vmatprep.subr.mxu0 0.0
        %2326 = vmatpush2.msra.mxu0 0.0
        %2327 = vmatprep.subr.mxu0 0.0
        %2328 = vmatpush2.msra.mxu0 0.0
        %2329 = vmatprep.subr.mxu0 0.0
        %2330 = vmatpush2.msra.mxu0 0.0
        %2331 = vmatprep.subr.mxu0 0.0
        %2332 = vmatpush2.msra.mxu0 0.0
        %2333 = vmatprep.subr.mxu0 0.0
        %2334 = vmatpush2.msra.mxu0 0.0
        %2335 = vmatprep.subr.mxu0 0.0
        %2336 = vmatpush2.msra.mxu0 0.0
        %2337 = vmatprep.subr.mxu0 0.0
        %2338 = vmatpush2.msra.mxu0 0.0
        %2339 = vmatprep.subr.mxu0 0.0
        %2340 = vmatpush2.msra.mxu0 0.0
        %2341 = vmatprep.subr.mxu0 0.0
        %2342 = vmatpush2.msra.mxu0 0.0
        %2343 = vmatprep.subr.mxu0 0.0
        %2344 = vmatpush2.msra.mxu0 0.0
        %2345 = vmatprep.subr.mxu0 0.0
        %2346 = vmatpush2.msra.mxu0 0.0
        %2347 = vmatprep.subr.mxu0 0.0
        %2348 = vmatpush2.msra.mxu0 0.0
        %2349 = vmatprep.mubr.f32.mxu0 0.0
        %2350 = vmatmul.mubr.f32.gmra.mxu0 %v2283
        %v2351 = vpop.f32.mrf.mxu0
        %v2352 = vadd.f32 0.0, %v2351
        %v2353 = vpop.f32.mrf.mxu0
        %v2354 = vadd.f32 0.0, %v2353
        %2355 = vdwg.mxu0
        %2356 = vmatprep.subr.mxu0 0.0
        %2357 = vmatpush1.msra.mxu0 0.0
        %2358 = vmatprep.subr.mxu0 0.0
        %2359 = vmatpush1.msra.mxu0 0.0
        %2360 = vmatprep.subr.mxu0 0.0
        %2361 = vmatpush1.msra.mxu0 0.0
        %2362 = vmatprep.subr.mxu0 0.0
        %2363 = vmatpush1.msra.mxu0 0.0
        %2364 = vmatprep.subr.mxu0 0.0
        %2365 = vmatpush1.msra.mxu0 0.0
        %2366 = vmatprep.subr.mxu0 0.0
        %2367 = vmatpush1.msra.mxu0 0.0
        %2368 = vmatprep.subr.mxu0 0.0
        %2369 = vmatpush1.msra.mxu0 0.0
        %2370 = vmatprep.subr.mxu0 0.0
        %2371 = vmatpush1.msra.mxu0 0.0
        %2372 = vmatprep.subr.mxu0 0.0
        %2373 = vmatpush1.msra.mxu0 0.0
        %2374 = vmatprep.subr.mxu0 0.0
        %2375 = vmatpush1.msra.mxu0 0.0
        %2376 = vmatprep.subr.mxu0 0.0
        %2377 = vmatpush1.msra.mxu0 0.0
        %2378 = vmatprep.subr.mxu0 0.0
        %2379 = vmatpush1.msra.mxu0 0.0
        %2380 = vmatprep.subr.mxu0 0.0
        %2381 = vmatpush1.msra.mxu0 0.0
        %2382 = vmatprep.subr.mxu0 0.0
        %2383 = vmatpush1.msra.mxu0 0.0
        %2384 = vmatprep.subr.mxu0 0.0
        %2385 = vmatpush1.msra.mxu0 0.0
        %2386 = vmatprep.subr.mxu0 0.0
        %2387 = vmatpush1.msra.mxu0 %v2278
        %2388 = vmatprep.subr.mxu0 0.0
        %2389 = vmatpush2.msra.mxu0 0.0
        %2390 = vmatprep.subr.mxu0 0.0
        %2391 = vmatpush2.msra.mxu0 0.0
        %2392 = vmatprep.subr.mxu0 0.0
        %2393 = vmatpush2.msra.mxu0 0.0
        %2394 = vmatprep.subr.mxu0 0.0
        %2395 = vmatpush2.msra.mxu0 0.0
        %2396 = vmatprep.subr.mxu0 0.0
        %2397 = vmatpush2.msra.mxu0 0.0
        %2398 = vmatprep.subr.mxu0 0.0
        %2399 = vmatpush2.msra.mxu0 0.0
        %2400 = vmatprep.subr.mxu0 0.0
        %2401 = vmatpush2.msra.mxu0 0.0
        %2402 = vmatprep.subr.mxu0 0.0
        %2403 = vmatpush2.msra.mxu0 0.0
        %2404 = vmatprep.subr.mxu0 0.0
        %2405 = vmatpush2.msra.mxu0 0.0
        %2406 = vmatprep.subr.mxu0 0.0
        %2407 = vmatpush2.msra.mxu0 0.0
        %2408 = vmatprep.subr.mxu0 0.0
        %2409 = vmatpush2.msra.mxu0 0.0
        %2410 = vmatprep.subr.mxu0 0.0
        %2411 = vmatpush2.msra.mxu0 0.0
        %2412 = vmatprep.subr.mxu0 0.0
        %2413 = vmatpush2.msra.mxu0 0.0
        %2414 = vmatprep.subr.mxu0 0.0
        %2415 = vmatpush2.msra.mxu0 0.0
        %2416 = vmatprep.subr.mxu0 0.0
        %2417 = vmatpush2.msra.mxu0 0.0
        %2418 = vmatprep.subr.mxu0 0.0
        %2419 = vmatpush2.msra.mxu0 0.0
        %2420 = vmatprep.mubr.f32.mxu0 0.0
        %2421 = vmatmul.mubr.f32.gmra.mxu0 %v2283
        %v2422 = vpop.f32.mrf.mxu0
        %v2423 = vadd.f32 0.0, %v2422
        %v2424 = vpop.f32.mrf.mxu0
        %2425 = vdwg.mxu0
        %v2426 = vadd.f32 %v2263, %v2352
        %v2427 = vadd.f32 %v2264, %v2354
        %v2428 = vadd.f32 %v2265, %v2423
        %s2429 = scalar_lea.vmem %s1, 104
        %v2430 = vld [vmem:[%s2429] sm:$0xff]
        %2431 = vrot.lane.b32.xlu0 %v1783, 109
        %v2432 = vpop.permute.xlu0 %2431
        %2433 = vrot.lane.b32.xlu0 %v1784, 109
        %v2434 = vpop.permute.xlu0 %2433
        %2435 = vrot.lane.b32.xlu0 %v1785, 109
        %v2436 = vpop.permute.xlu0 %2435
        %2437 = vrot.lane.b32.xlu0 %v1786, 109
        %v2438 = vpop.permute.xlu0 %2437
        %v2439 = vsel %vm963, %v2432, %v2434
        %v2440 = vsel %vm963, %v2434, %v2436
        %v2441 = vsel %vm963, %v2436, %v2438
        %v2446 = vsel %vm336, %v2430, 0
        %2448 = vmatprep.subr.mxu0 0.0
        %2449 = vmatpush1.msra.mxu0 0.0
        %2450 = vmatprep.subr.mxu0 0.0
        %2451 = vmatpush1.msra.mxu0 0.0
        %2452 = vmatprep.subr.mxu0 0.0
        %2453 = vmatpush1.msra.mxu0 0.0
        %2454 = vmatprep.subr.mxu0 0.0
        %2455 = vmatpush1.msra.mxu0 0.0
        %2456 = vmatprep.subr.mxu0 0.0
        %2457 = vmatpush1.msra.mxu0 0.0
        %2458 = vmatprep.subr.mxu0 0.0
        %2459 = vmatpush1.msra.mxu0 0.0
        %2460 = vmatprep.subr.mxu0 0.0
        %2461 = vmatpush1.msra.mxu0 0.0
        %2462 = vmatprep.subr.mxu0 0.0
        %2463 = vmatpush1.msra.mxu0 0.0
        %2464 = vmatprep.subr.mxu0 0.0
        %2465 = vmatpush1.msra.mxu0 0.0
        %2466 = vmatprep.subr.mxu0 0.0
        %2467 = vmatpush1.msra.mxu0 0.0
        %2468 = vmatprep.subr.mxu0 0.0
        %2469 = vmatpush1.msra.mxu0 0.0
        %2470 = vmatprep.subr.mxu0 0.0
        %2471 = vmatpush1.msra.mxu0 0.0
        %2472 = vmatprep.subr.mxu0 0.0
        %2473 = vmatpush1.msra.mxu0 0.0
        %2474 = vmatprep.subr.mxu0 0.0
        %2475 = vmatpush1.msra.mxu0 0.0
        %2476 = vmatprep.subr.mxu0 0.0
        %2477 = vmatpush1.msra.mxu0 0.0
        %2478 = vmatprep.subr.mxu0 %v2440
        %2479 = vmatpush1.msra.mxu0 %v2439
        %2480 = vmatprep.subr.mxu0 0.0
        %2481 = vmatpush2.msra.mxu0 0.0
        %2482 = vmatprep.subr.mxu0 0.0
        %2483 = vmatpush2.msra.mxu0 0.0
        %2484 = vmatprep.subr.mxu0 0.0
        %2485 = vmatpush2.msra.mxu0 0.0
        %2486 = vmatprep.subr.mxu0 0.0
        %2487 = vmatpush2.msra.mxu0 0.0
        %2488 = vmatprep.subr.mxu0 0.0
        %2489 = vmatpush2.msra.mxu0 0.0
        %2490 = vmatprep.subr.mxu0 0.0
        %2491 = vmatpush2.msra.mxu0 0.0
        %2492 = vmatprep.subr.mxu0 0.0
        %2493 = vmatpush2.msra.mxu0 0.0
        %2494 = vmatprep.subr.mxu0 0.0
        %2495 = vmatpush2.msra.mxu0 0.0
        %2496 = vmatprep.subr.mxu0 0.0
        %2497 = vmatpush2.msra.mxu0 0.0
        %2498 = vmatprep.subr.mxu0 0.0
        %2499 = vmatpush2.msra.mxu0 0.0
        %2500 = vmatprep.subr.mxu0 0.0
        %2501 = vmatpush2.msra.mxu0 0.0
        %2502 = vmatprep.subr.mxu0 0.0
        %2503 = vmatpush2.msra.mxu0 0.0
        %2504 = vmatprep.subr.mxu0 0.0
        %2505 = vmatpush2.msra.mxu0 0.0
        %2506 = vmatprep.subr.mxu0 0.0
        %2507 = vmatpush2.msra.mxu0 0.0
        %2508 = vmatprep.subr.mxu0 0.0
        %2509 = vmatpush2.msra.mxu0 0.0
        %2510 = vmatprep.subr.mxu0 0.0
        %2511 = vmatpush2.msra.mxu0 0.0
        %2512 = vmatprep.mubr.f32.mxu0 0.0
        %2513 = vmatmul.mubr.f32.gmra.mxu0 %v2446
        %v2514 = vpop.f32.mrf.mxu0
        %v2515 = vadd.f32 0.0, %v2514
        %v2516 = vpop.f32.mrf.mxu0
        %v2517 = vadd.f32 0.0, %v2516
        %2518 = vdwg.mxu0
        %2519 = vmatprep.subr.mxu0 0.0
        %2520 = vmatpush1.msra.mxu0 0.0
        %2521 = vmatprep.subr.mxu0 0.0
        %2522 = vmatpush1.msra.mxu0 0.0
        %2523 = vmatprep.subr.mxu0 0.0
        %2524 = vmatpush1.msra.mxu0 0.0
        %2525 = vmatprep.subr.mxu0 0.0
        %2526 = vmatpush1.msra.mxu0 0.0
        %2527 = vmatprep.subr.mxu0 0.0
        %2528 = vmatpush1.msra.mxu0 0.0
        %2529 = vmatprep.subr.mxu0 0.0
        %2530 = vmatpush1.msra.mxu0 0.0
        %2531 = vmatprep.subr.mxu0 0.0
        %2532 = vmatpush1.msra.mxu0 0.0
        %2533 = vmatprep.subr.mxu0 0.0
        %2534 = vmatpush1.msra.mxu0 0.0
        %2535 = vmatprep.subr.mxu0 0.0
        %2536 = vmatpush1.msra.mxu0 0.0
        %2537 = vmatprep.subr.mxu0 0.0
        %2538 = vmatpush1.msra.mxu0 0.0
        %2539 = vmatprep.subr.mxu0 0.0
        %2540 = vmatpush1.msra.mxu0 0.0
        %2541 = vmatprep.subr.mxu0 0.0
        %2542 = vmatpush1.msra.mxu0 0.0
        %2543 = vmatprep.subr.mxu0 0.0
        %2544 = vmatpush1.msra.mxu0 0.0
        %2545 = vmatprep.subr.mxu0 0.0
        %2546 = vmatpush1.msra.mxu0 0.0
        %2547 = vmatprep.subr.mxu0 0.0
        %2548 = vmatpush1.msra.mxu0 0.0
        %2549 = vmatprep.subr.mxu0 0.0
        %2550 = vmatpush1.msra.mxu0 %v2441
        %2551 = vmatprep.subr.mxu0 0.0
        %2552 = vmatpush2.msra.mxu0 0.0
        %2553 = vmatprep.subr.mxu0 0.0
        %2554 = vmatpush2.msra.mxu0 0.0
        %2555 = vmatprep.subr.mxu0 0.0
        %2556 = vmatpush2.msra.mxu0 0.0
        %2557 = vmatprep.subr.mxu0 0.0
        %2558 = vmatpush2.msra.mxu0 0.0
        %2559 = vmatprep.subr.mxu0 0.0
        %2560 = vmatpush2.msra.mxu0 0.0
        %2561 = vmatprep.subr.mxu0 0.0
        %2562 = vmatpush2.msra.mxu0 0.0
        %2563 = vmatprep.subr.mxu0 0.0
        %2564 = vmatpush2.msra.mxu0 0.0
        %2565 = vmatprep.subr.mxu0 0.0
        %2566 = vmatpush2.msra.mxu0 0.0
        %2567 = vmatprep.subr.mxu0 0.0
        %2568 = vmatpush2.msra.mxu0 0.0
        %2569 = vmatprep.subr.mxu0 0.0
        %2570 = vmatpush2.msra.mxu0 0.0
        %2571 = vmatprep.subr.mxu0 0.0
        %2572 = vmatpush2.msra.mxu0 0.0
        %2573 = vmatprep.subr.mxu0 0.0
        %2574 = vmatpush2.msra.mxu0 0.0
        %2575 = vmatprep.subr.mxu0 0.0
        %2576 = vmatpush2.msra.mxu0 0.0
        %2577 = vmatprep.subr.mxu0 0.0
        %2578 = vmatpush2.msra.mxu0 0.0
        %2579 = vmatprep.subr.mxu0 0.0
        %2580 = vmatpush2.msra.mxu0 0.0
        %2581 = vmatprep.subr.mxu0 0.0
        %2582 = vmatpush2.msra.mxu0 0.0
        %2583 = vmatprep.mubr.f32.mxu0 0.0
        %2584 = vmatmul.mubr.f32.gmra.mxu0 %v2446
        %v2585 = vpop.f32.mrf.mxu0
        %v2586 = vadd.f32 0.0, %v2585
        %v2587 = vpop.f32.mrf.mxu0
        %2588 = vdwg.mxu0
        %v2589 = vadd.f32 %v2426, %v2515
        %v2590 = vadd.f32 %v2427, %v2517
        %v2591 = vadd.f32 %v2428, %v2586
        %s2592 = scalar_lea.vmem %s1, 112
        %v2593 = vld [vmem:[%s2592] sm:$0xff]
        %2594 = vrot.lane.b32.xlu0 %v1783, 108
        %v2595 = vpop.permute.xlu0 %2594
        %2596 = vrot.lane.b32.xlu0 %v1784, 108
        %v2597 = vpop.permute.xlu0 %2596
        %2598 = vrot.lane.b32.xlu0 %v1785, 108
        %v2599 = vpop.permute.xlu0 %2598
        %2600 = vrot.lane.b32.xlu0 %v1786, 108
        %v2601 = vpop.permute.xlu0 %2600
        %v2602 = vsel %vm1127, %v2595, %v2597
        %v2603 = vsel %vm1127, %v2597, %v2599
        %v2604 = vsel %vm1127, %v2599, %v2601
        %v2609 = vsel %vm336, %v2593, 0
        %2611 = vmatprep.subr.mxu0 0.0
        %2612 = vmatpush1.msra.mxu0 0.0
        %2613 = vmatprep.subr.mxu0 0.0
        %2614 = vmatpush1.msra.mxu0 0.0
        %2615 = vmatprep.subr.mxu0 0.0
        %2616 = vmatpush1.msra.mxu0 0.0
        %2617 = vmatprep.subr.mxu0 0.0
        %2618 = vmatpush1.msra.mxu0 0.0
        %2619 = vmatprep.subr.mxu0 0.0
        %2620 = vmatpush1.msra.mxu0 0.0
        %2621 = vmatprep.subr.mxu0 0.0
        %2622 = vmatpush1.msra.mxu0 0.0
        %2623 = vmatprep.subr.mxu0 0.0
        %2624 = vmatpush1.msra.mxu0 0.0
        %2625 = vmatprep.subr.mxu0 0.0
        %2626 = vmatpush1.msra.mxu0 0.0
        %2627 = vmatprep.subr.mxu0 0.0
        %2628 = vmatpush1.msra.mxu0 0.0
        %2629 = vmatprep.subr.mxu0 0.0
        %2630 = vmatpush1.msra.mxu0 0.0
        %2631 = vmatprep.subr.mxu0 0.0
        %2632 = vmatpush1.msra.mxu0 0.0
        %2633 = vmatprep.subr.mxu0 0.0
        %2634 = vmatpush1.msra.mxu0 0.0
        %2635 = vmatprep.subr.mxu0 0.0
        %2636 = vmatpush1.msra.mxu0 0.0
        %2637 = vmatprep.subr.mxu0 0.0
        %2638 = vmatpush1.msra.mxu0 0.0
        %2639 = vmatprep.subr.mxu0 0.0
        %2640 = vmatpush1.msra.mxu0 0.0
        %2641 = vmatprep.subr.mxu0 %v2603
        %2642 = vmatpush1.msra.mxu0 %v2602
        %2643 = vmatprep.subr.mxu0 0.0
        %2644 = vmatpush2.msra.mxu0 0.0
        %2645 = vmatprep.subr.mxu0 0.0
        %2646 = vmatpush2.msra.mxu0 0.0
        %2647 = vmatprep.subr.mxu0 0.0
        %2648 = vmatpush2.msra.mxu0 0.0
        %2649 = vmatprep.subr.mxu0 0.0
        %2650 = vmatpush2.msra.mxu0 0.0
        %2651 = vmatprep.subr.mxu0 0.0
        %2652 = vmatpush2.msra.mxu0 0.0
        %2653 = vmatprep.subr.mxu0 0.0
        %2654 = vmatpush2.msra.mxu0 0.0
        %2655 = vmatprep.subr.mxu0 0.0
        %2656 = vmatpush2.msra.mxu0 0.0
        %2657 = vmatprep.subr.mxu0 0.0
        %2658 = vmatpush2.msra.mxu0 0.0
        %2659 = vmatprep.subr.mxu0 0.0
        %2660 = vmatpush2.msra.mxu0 0.0
        %2661 = vmatprep.subr.mxu0 0.0
        %2662 = vmatpush2.msra.mxu0 0.0
        %2663 = vmatprep.subr.mxu0 0.0
        %2664 = vmatpush2.msra.mxu0 0.0
        %2665 = vmatprep.subr.mxu0 0.0
        %2666 = vmatpush2.msra.mxu0 0.0
        %2667 = vmatprep.subr.mxu0 0.0
        %2668 = vmatpush2.msra.mxu0 0.0
        %2669 = vmatprep.subr.mxu0 0.0
        %2670 = vmatpush2.msra.mxu0 0.0
        %2671 = vmatprep.subr.mxu0 0.0
        %2672 = vmatpush2.msra.mxu0 0.0
        %2673 = vmatprep.subr.mxu0 0.0
        %2674 = vmatpush2.msra.mxu0 0.0
        %2675 = vmatprep.mubr.f32.mxu0 0.0
        %2676 = vmatmul.mubr.f32.gmra.mxu0 %v2609
        %v2677 = vpop.f32.mrf.mxu0
        %v2678 = vadd.f32 0.0, %v2677
        %v2679 = vpop.f32.mrf.mxu0
        %v2680 = vadd.f32 0.0, %v2679
        %2681 = vdwg.mxu0
        %2682 = vmatprep.subr.mxu0 0.0
        %2683 = vmatpush1.msra.mxu0 0.0
        %2684 = vmatprep.subr.mxu0 0.0
        %2685 = vmatpush1.msra.mxu0 0.0
        %2686 = vmatprep.subr.mxu0 0.0
        %2687 = vmatpush1.msra.mxu0 0.0
        %2688 = vmatprep.subr.mxu0 0.0
        %2689 = vmatpush1.msra.mxu0 0.0
        %2690 = vmatprep.subr.mxu0 0.0
        %2691 = vmatpush1.msra.mxu0 0.0
        %2692 = vmatprep.subr.mxu0 0.0
        %2693 = vmatpush1.msra.mxu0 0.0
        %2694 = vmatprep.subr.mxu0 0.0
        %2695 = vmatpush1.msra.mxu0 0.0
        %2696 = vmatprep.subr.mxu0 0.0
        %2697 = vmatpush1.msra.mxu0 0.0
        %2698 = vmatprep.subr.mxu0 0.0
        %2699 = vmatpush1.msra.mxu0 0.0
        %2700 = vmatprep.subr.mxu0 0.0
        %2701 = vmatpush1.msra.mxu0 0.0
        %2702 = vmatprep.subr.mxu0 0.0
        %2703 = vmatpush1.msra.mxu0 0.0
        %2704 = vmatprep.subr.mxu0 0.0
        %2705 = vmatpush1.msra.mxu0 0.0
        %2706 = vmatprep.subr.mxu0 0.0
        %2707 = vmatpush1.msra.mxu0 0.0
        %2708 = vmatprep.subr.mxu0 0.0
        %2709 = vmatpush1.msra.mxu0 0.0
        %2710 = vmatprep.subr.mxu0 0.0
        %2711 = vmatpush1.msra.mxu0 0.0
        %2712 = vmatprep.subr.mxu0 0.0
        %2713 = vmatpush1.msra.mxu0 %v2604
        %2714 = vmatprep.subr.mxu0 0.0
        %2715 = vmatpush2.msra.mxu0 0.0
        %2716 = vmatprep.subr.mxu0 0.0
        %2717 = vmatpush2.msra.mxu0 0.0
        %2718 = vmatprep.subr.mxu0 0.0
        %2719 = vmatpush2.msra.mxu0 0.0
        %2720 = vmatprep.subr.mxu0 0.0
        %2721 = vmatpush2.msra.mxu0 0.0
        %2722 = vmatprep.subr.mxu0 0.0
        %2723 = vmatpush2.msra.mxu0 0.0
        %2724 = vmatprep.subr.mxu0 0.0
        %2725 = vmatpush2.msra.mxu0 0.0
        %2726 = vmatprep.subr.mxu0 0.0
        %2727 = vmatpush2.msra.mxu0 0.0
        %2728 = vmatprep.subr.mxu0 0.0
        %2729 = vmatpush2.msra.mxu0 0.0
        %2730 = vmatprep.subr.mxu0 0.0
        %2731 = vmatpush2.msra.mxu0 0.0
        %2732 = vmatprep.subr.mxu0 0.0
        %2733 = vmatpush2.msra.mxu0 0.0
        %2734 = vmatprep.subr.mxu0 0.0
        %2735 = vmatpush2.msra.mxu0 0.0
        %2736 = vmatprep.subr.mxu0 0.0
        %2737 = vmatpush2.msra.mxu0 0.0
        %2738 = vmatprep.subr.mxu0 0.0
        %2739 = vmatpush2.msra.mxu0 0.0
        %2740 = vmatprep.subr.mxu0 0.0
        %2741 = vmatpush2.msra.mxu0 0.0
        %2742 = vmatprep.subr.mxu0 0.0
        %2743 = vmatpush2.msra.mxu0 0.0
        %2744 = vmatprep.subr.mxu0 0.0
        %2745 = vmatpush2.msra.mxu0 0.0
        %2746 = vmatprep.mubr.f32.mxu0 0.0
        %2747 = vmatmul.mubr.f32.gmra.mxu0 %v2609
        %v2748 = vpop.f32.mrf.mxu0
        %v2749 = vadd.f32 0.0, %v2748
        %v2750 = vpop.f32.mrf.mxu0
        %2751 = vdwg.mxu0
        %v2752 = vadd.f32 %v2589, %v2678
        %v2753 = vadd.f32 %v2590, %v2680
        %v2754 = vadd.f32 %v2591, %v2749
        %s2755 = scalar_lea.vmem %s1, 120
        %v2756 = vld [vmem:[%s2755] sm:$0xff]
        %2757 = vrot.lane.b32.xlu0 %v1783, 92
        %v2758 = vpop.permute.xlu0 %2757
        %2759 = vrot.lane.b32.xlu0 %v1784, 92
        %v2760 = vpop.permute.xlu0 %2759
        %2761 = vrot.lane.b32.xlu0 %v1785, 92
        %v2762 = vpop.permute.xlu0 %2761
        %2763 = vrot.lane.b32.xlu0 %v1786, 92
        %v2764 = vpop.permute.xlu0 %2763
        %v2765 = vsel %vm1291, %v2758, %v2760
        %v2766 = vsel %vm1291, %v2760, %v2762
        %v2767 = vsel %vm1291, %v2762, %v2764
        %v2772 = vsel %vm336, %v2756, 0
        %2774 = vmatprep.subr.mxu0 0.0
        %2775 = vmatpush1.msra.mxu0 0.0
        %2776 = vmatprep.subr.mxu0 0.0
        %2777 = vmatpush1.msra.mxu0 0.0
        %2778 = vmatprep.subr.mxu0 0.0
        %2779 = vmatpush1.msra.mxu0 0.0
        %2780 = vmatprep.subr.mxu0 0.0
        %2781 = vmatpush1.msra.mxu0 0.0
        %2782 = vmatprep.subr.mxu0 0.0
        %2783 = vmatpush1.msra.mxu0 0.0
        %2784 = vmatprep.subr.mxu0 0.0
        %2785 = vmatpush1.msra.mxu0 0.0
        %2786 = vmatprep.subr.mxu0 0.0
        %2787 = vmatpush1.msra.mxu0 0.0
        %2788 = vmatprep.subr.mxu0 0.0
        %2789 = vmatpush1.msra.mxu0 0.0
        %2790 = vmatprep.subr.mxu0 0.0
        %2791 = vmatpush1.msra.mxu0 0.0
        %2792 = vmatprep.subr.mxu0 0.0
        %2793 = vmatpush1.msra.mxu0 0.0
        %2794 = vmatprep.subr.mxu0 0.0
        %2795 = vmatpush1.msra.mxu0 0.0
        %2796 = vmatprep.subr.mxu0 0.0
        %2797 = vmatpush1.msra.mxu0 0.0
        %2798 = vmatprep.subr.mxu0 0.0
        %2799 = vmatpush1.msra.mxu0 0.0
        %2800 = vmatprep.subr.mxu0 0.0
        %2801 = vmatpush1.msra.mxu0 0.0
        %2802 = vmatprep.subr.mxu0 0.0
        %2803 = vmatpush1.msra.mxu0 0.0
        %2804 = vmatprep.subr.mxu0 %v2766
        %2805 = vmatpush1.msra.mxu0 %v2765
        %2806 = vmatprep.subr.mxu0 0.0
        %2807 = vmatpush2.msra.mxu0 0.0
        %2808 = vmatprep.subr.mxu0 0.0
        %2809 = vmatpush2.msra.mxu0 0.0
        %2810 = vmatprep.subr.mxu0 0.0
        %2811 = vmatpush2.msra.mxu0 0.0
        %2812 = vmatprep.subr.mxu0 0.0
        %2813 = vmatpush2.msra.mxu0 0.0
        %2814 = vmatprep.subr.mxu0 0.0
        %2815 = vmatpush2.msra.mxu0 0.0
        %2816 = vmatprep.subr.mxu0 0.0
        %2817 = vmatpush2.msra.mxu0 0.0
        %2818 = vmatprep.subr.mxu0 0.0
        %2819 = vmatpush2.msra.mxu0 0.0
        %2820 = vmatprep.subr.mxu0 0.0
        %2821 = vmatpush2.msra.mxu0 0.0
        %2822 = vmatprep.subr.mxu0 0.0
        %2823 = vmatpush2.msra.mxu0 0.0
        %2824 = vmatprep.subr.mxu0 0.0
        %2825 = vmatpush2.msra.mxu0 0.0
        %2826 = vmatprep.subr.mxu0 0.0
        %2827 = vmatpush2.msra.mxu0 0.0
        %2828 = vmatprep.subr.mxu0 0.0
        %2829 = vmatpush2.msra.mxu0 0.0
        %2830 = vmatprep.subr.mxu0 0.0
        %2831 = vmatpush2.msra.mxu0 0.0
        %2832 = vmatprep.subr.mxu0 0.0
        %2833 = vmatpush2.msra.mxu0 0.0
        %2834 = vmatprep.subr.mxu0 0.0
        %2835 = vmatpush2.msra.mxu0 0.0
        %2836 = vmatprep.subr.mxu0 0.0
        %2837 = vmatpush2.msra.mxu0 0.0
        %2838 = vmatprep.mubr.f32.mxu0 0.0
        %2839 = vmatmul.mubr.f32.gmra.mxu0 %v2772
        %v2840 = vpop.f32.mrf.mxu0
        %v2841 = vadd.f32 0.0, %v2840
        %v2842 = vpop.f32.mrf.mxu0
        %v2843 = vadd.f32 0.0, %v2842
        %2844 = vdwg.mxu0
        %2845 = vmatprep.subr.mxu0 0.0
        %2846 = vmatpush1.msra.mxu0 0.0
        %2847 = vmatprep.subr.mxu0 0.0
        %2848 = vmatpush1.msra.mxu0 0.0
        %2849 = vmatprep.subr.mxu0 0.0
        %2850 = vmatpush1.msra.mxu0 0.0
        %2851 = vmatprep.subr.mxu0 0.0
        %2852 = vmatpush1.msra.mxu0 0.0
        %2853 = vmatprep.subr.mxu0 0.0
        %2854 = vmatpush1.msra.mxu0 0.0
        %2855 = vmatprep.subr.mxu0 0.0
        %2856 = vmatpush1.msra.mxu0 0.0
        %2857 = vmatprep.subr.mxu0 0.0
        %2858 = vmatpush1.msra.mxu0 0.0
        %2859 = vmatprep.subr.mxu0 0.0
        %2860 = vmatpush1.msra.mxu0 0.0
        %2861 = vmatprep.subr.mxu0 0.0
        %2862 = vmatpush1.msra.mxu0 0.0
        %2863 = vmatprep.subr.mxu0 0.0
        %2864 = vmatpush1.msra.mxu0 0.0
        %2865 = vmatprep.subr.mxu0 0.0
        %2866 = vmatpush1.msra.mxu0 0.0
        %2867 = vmatprep.subr.mxu0 0.0
        %2868 = vmatpush1.msra.mxu0 0.0
        %2869 = vmatprep.subr.mxu0 0.0
        %2870 = vmatpush1.msra.mxu0 0.0
        %2871 = vmatprep.subr.mxu0 0.0
        %2872 = vmatpush1.msra.mxu0 0.0
        %2873 = vmatprep.subr.mxu0 0.0
        %2874 = vmatpush1.msra.mxu0 0.0
        %2875 = vmatprep.subr.mxu0 0.0
        %2876 = vmatpush1.msra.mxu0 %v2767
        %2877 = vmatprep.subr.mxu0 0.0
        %2878 = vmatpush2.msra.mxu0 0.0
        %2879 = vmatprep.subr.mxu0 0.0
        %2880 = vmatpush2.msra.mxu0 0.0
        %2881 = vmatprep.subr.mxu0 0.0
        %2882 = vmatpush2.msra.mxu0 0.0
        %2883 = vmatprep.subr.mxu0 0.0
        %2884 = vmatpush2.msra.mxu0 0.0
        %2885 = vmatprep.subr.mxu0 0.0
        %2886 = vmatpush2.msra.mxu0 0.0
        %2887 = vmatprep.subr.mxu0 0.0
        %2888 = vmatpush2.msra.mxu0 0.0
        %2889 = vmatprep.subr.mxu0 0.0
        %2890 = vmatpush2.msra.mxu0 0.0
        %2891 = vmatprep.subr.mxu0 0.0
        %2892 = vmatpush2.msra.mxu0 0.0
        %2893 = vmatprep.subr.mxu0 0.0
        %2894 = vmatpush2.msra.mxu0 0.0
        %2895 = vmatprep.subr.mxu0 0.0
        %2896 = vmatpush2.msra.mxu0 0.0
        %2897 = vmatprep.subr.mxu0 0.0
        %2898 = vmatpush2.msra.mxu0 0.0
        %2899 = vmatprep.subr.mxu0 0.0
        %2900 = vmatpush2.msra.mxu0 0.0
        %2901 = vmatprep.subr.mxu0 0.0
        %2902 = vmatpush2.msra.mxu0 0.0
        %2903 = vmatprep.subr.mxu0 0.0
        %2904 = vmatpush2.msra.mxu0 0.0
        %2905 = vmatprep.subr.mxu0 0.0
        %2906 = vmatpush2.msra.mxu0 0.0
        %2907 = vmatprep.subr.mxu0 0.0
        %2908 = vmatpush2.msra.mxu0 0.0
        %2909 = vmatprep.mubr.f32.mxu0 0.0
        %2910 = vmatmul.mubr.f32.gmra.mxu0 %v2772
        %v2911 = vpop.f32.mrf.mxu0
        %v2912 = vadd.f32 0.0, %v2911
        %v2913 = vpop.f32.mrf.mxu0
        %2914 = vdwg.mxu0
        %v2915 = vadd.f32 %v2752, %v2841
        %v2916 = vadd.f32 %v2753, %v2843
        %v2917 = vadd.f32 %v2754, %v2912
        %s2918 = scalar_lea.vmem %s1, 128
        %v2919 = vld [vmem:[%s2918] sm:$0xff]
        %2920 = vrot.lane.b32.xlu0 %v1783, 91
        %v2921 = vpop.permute.xlu0 %2920
        %2922 = vrot.lane.b32.xlu0 %v1784, 91
        %v2923 = vpop.permute.xlu0 %2922
        %2924 = vrot.lane.b32.xlu0 %v1785, 91
        %v2925 = vpop.permute.xlu0 %2924
        %2926 = vrot.lane.b32.xlu0 %v1786, 91
        %v2927 = vpop.permute.xlu0 %2926
        %v2928 = vsel %vm1455, %v2921, %v2923
        %v2929 = vsel %vm1455, %v2923, %v2925
        %v2930 = vsel %vm1455, %v2925, %v2927
        %v2935 = vsel %vm336, %v2919, 0
        %2937 = vmatprep.subr.mxu0 0.0
        %2938 = vmatpush1.msra.mxu0 0.0
        %2939 = vmatprep.subr.mxu0 0.0
        %2940 = vmatpush1.msra.mxu0 0.0
        %2941 = vmatprep.subr.mxu0 0.0
        %2942 = vmatpush1.msra.mxu0 0.0
        %2943 = vmatprep.subr.mxu0 0.0
        %2944 = vmatpush1.msra.mxu0 0.0
        %2945 = vmatprep.subr.mxu0 0.0
        %2946 = vmatpush1.msra.mxu0 0.0
        %2947 = vmatprep.subr.mxu0 0.0
        %2948 = vmatpush1.msra.mxu0 0.0
        %2949 = vmatprep.subr.mxu0 0.0
        %2950 = vmatpush1.msra.mxu0 0.0
        %2951 = vmatprep.subr.mxu0 0.0
        %2952 = vmatpush1.msra.mxu0 0.0
        %2953 = vmatprep.subr.mxu0 0.0
        %2954 = vmatpush1.msra.mxu0 0.0
        %2955 = vmatprep.subr.mxu0 0.0
        %2956 = vmatpush1.msra.mxu0 0.0
        %2957 = vmatprep.subr.mxu0 0.0
        %2958 = vmatpush1.msra.mxu0 0.0
        %2959 = vmatprep.subr.mxu0 0.0
        %2960 = vmatpush1.msra.mxu0 0.0
        %2961 = vmatprep.subr.mxu0 0.0
        %2962 = vmatpush1.msra.mxu0 0.0
        %2963 = vmatprep.subr.mxu0 0.0
        %2964 = vmatpush1.msra.mxu0 0.0
        %2965 = vmatprep.subr.mxu0 0.0
        %2966 = vmatpush1.msra.mxu0 0.0
        %2967 = vmatprep.subr.mxu0 %v2929
        %2968 = vmatpush1.msra.mxu0 %v2928
        %2969 = vmatprep.subr.mxu0 0.0
        %2970 = vmatpush2.msra.mxu0 0.0
        %2971 = vmatprep.subr.mxu0 0.0
        %2972 = vmatpush2.msra.mxu0 0.0
        %2973 = vmatprep.subr.mxu0 0.0
        %2974 = vmatpush2.msra.mxu0 0.0
        %2975 = vmatprep.subr.mxu0 0.0
        %2976 = vmatpush2.msra.mxu0 0.0
        %2977 = vmatprep.subr.mxu0 0.0
        %2978 = vmatpush2.msra.mxu0 0.0
        %2979 = vmatprep.subr.mxu0 0.0
        %2980 = vmatpush2.msra.mxu0 0.0
        %2981 = vmatprep.subr.mxu0 0.0
        %2982 = vmatpush2.msra.mxu0 0.0
        %2983 = vmatprep.subr.mxu0 0.0
        %2984 = vmatpush2.msra.mxu0 0.0
        %2985 = vmatprep.subr.mxu0 0.0
        %2986 = vmatpush2.msra.mxu0 0.0
        %2987 = vmatprep.subr.mxu0 0.0
        %2988 = vmatpush2.msra.mxu0 0.0
        %2989 = vmatprep.subr.mxu0 0.0
        %2990 = vmatpush2.msra.mxu0 0.0
        %2991 = vmatprep.subr.mxu0 0.0
        %2992 = vmatpush2.msra.mxu0 0.0
        %2993 = vmatprep.subr.mxu0 0.0
        %2994 = vmatpush2.msra.mxu0 0.0
        %2995 = vmatprep.subr.mxu0 0.0
        %2996 = vmatpush2.msra.mxu0 0.0
        %2997 = vmatprep.subr.mxu0 0.0
        %2998 = vmatpush2.msra.mxu0 0.0
        %2999 = vmatprep.subr.mxu0 0.0
        %3000 = vmatpush2.msra.mxu0 0.0
        %3001 = vmatprep.mubr.f32.mxu0 0.0
        %3002 = vmatmul.mubr.f32.gmra.mxu0 %v2935
        %v3003 = vpop.f32.mrf.mxu0
        %v3004 = vadd.f32 0.0, %v3003
        %v3005 = vpop.f32.mrf.mxu0
        %v3006 = vadd.f32 0.0, %v3005
        %3007 = vdwg.mxu0
        %3008 = vmatprep.subr.mxu0 0.0
        %3009 = vmatpush1.msra.mxu0 0.0
        %3010 = vmatprep.subr.mxu0 0.0
        %3011 = vmatpush1.msra.mxu0 0.0
        %3012 = vmatprep.subr.mxu0 0.0
        %3013 = vmatpush1.msra.mxu0 0.0
        %3014 = vmatprep.subr.mxu0 0.0
        %3015 = vmatpush1.msra.mxu0 0.0
        %3016 = vmatprep.subr.mxu0 0.0
        %3017 = vmatpush1.msra.mxu0 0.0
        %3018 = vmatprep.subr.mxu0 0.0
        %3019 = vmatpush1.msra.mxu0 0.0
        %3020 = vmatprep.subr.mxu0 0.0
        %3021 = vmatpush1.msra.mxu0 0.0
        %3022 = vmatprep.subr.mxu0 0.0
        %3023 = vmatpush1.msra.mxu0 0.0
        %3024 = vmatprep.subr.mxu0 0.0
        %3025 = vmatpush1.msra.mxu0 0.0
        %3026 = vmatprep.subr.mxu0 0.0
        %3027 = vmatpush1.msra.mxu0 0.0
        %3028 = vmatprep.subr.mxu0 0.0
        %3029 = vmatpush1.msra.mxu0 0.0
        %3030 = vmatprep.subr.mxu0 0.0
        %3031 = vmatpush1.msra.mxu0 0.0
        %3032 = vmatprep.subr.mxu0 0.0
        %3033 = vmatpush1.msra.mxu0 0.0
        %3034 = vmatprep.subr.mxu0 0.0
        %3035 = vmatpush1.msra.mxu0 0.0
        %3036 = vmatprep.subr.mxu0 0.0
        %3037 = vmatpush1.msra.mxu0 0.0
        %3038 = vmatprep.subr.mxu0 0.0
        %3039 = vmatpush1.msra.mxu0 %v2930
        %3040 = vmatprep.subr.mxu0 0.0
        %3041 = vmatpush2.msra.mxu0 0.0
        %3042 = vmatprep.subr.mxu0 0.0
        %3043 = vmatpush2.msra.mxu0 0.0
        %3044 = vmatprep.subr.mxu0 0.0
        %3045 = vmatpush2.msra.mxu0 0.0
        %3046 = vmatprep.subr.mxu0 0.0
        %3047 = vmatpush2.msra.mxu0 0.0
        %3048 = vmatprep.subr.mxu0 0.0
        %3049 = vmatpush2.msra.mxu0 0.0
        %3050 = vmatprep.subr.mxu0 0.0
        %3051 = vmatpush2.msra.mxu0 0.0
        %3052 = vmatprep.subr.mxu0 0.0
        %3053 = vmatpush2.msra.mxu0 0.0
        %3054 = vmatprep.subr.mxu0 0.0
        %3055 = vmatpush2.msra.mxu0 0.0
        %3056 = vmatprep.subr.mxu0 0.0
        %3057 = vmatpush2.msra.mxu0 0.0
        %3058 = vmatprep.subr.mxu0 0.0
        %3059 = vmatpush2.msra.mxu0 0.0
        %3060 = vmatprep.subr.mxu0 0.0
        %3061 = vmatpush2.msra.mxu0 0.0
        %3062 = vmatprep.subr.mxu0 0.0
        %3063 = vmatpush2.msra.mxu0 0.0
        %3064 = vmatprep.subr.mxu0 0.0
        %3065 = vmatpush2.msra.mxu0 0.0
        %3066 = vmatprep.subr.mxu0 0.0
        %3067 = vmatpush2.msra.mxu0 0.0
        %3068 = vmatprep.subr.mxu0 0.0
        %3069 = vmatpush2.msra.mxu0 0.0
        %3070 = vmatprep.subr.mxu0 0.0
        %3071 = vmatpush2.msra.mxu0 0.0
        %3072 = vmatprep.mubr.f32.mxu0 0.0
        %3073 = vmatmul.mubr.f32.gmra.mxu0 %v2935
        %v3074 = vpop.f32.mrf.mxu0
        %v3075 = vadd.f32 0.0, %v3074
        %v3076 = vpop.f32.mrf.mxu0
        %3077 = vdwg.mxu0
        %v3078 = vadd.f32 %v2915, %v3004
        %v3079 = vadd.f32 %v2916, %v3006
        %v3080 = vadd.f32 %v2917, %v3075
        %s3081 = scalar_lea.vmem %s1, 136
        %v3082 = vld [vmem:[%s3081] sm:$0xff]
        %3083 = vrot.lane.b32.xlu0 %v1783, 90
        %v3084 = vpop.permute.xlu0 %3083
        %3085 = vrot.lane.b32.xlu0 %v1784, 90
        %v3086 = vpop.permute.xlu0 %3085
        %3087 = vrot.lane.b32.xlu0 %v1785, 90
        %v3088 = vpop.permute.xlu0 %3087
        %3089 = vrot.lane.b32.xlu0 %v1786, 90
        %v3090 = vpop.permute.xlu0 %3089
        %v3091 = vsel %vm1619, %v3084, %v3086
        %v3092 = vsel %vm1619, %v3086, %v3088
        %v3093 = vsel %vm1619, %v3088, %v3090
        %v3098 = vsel %vm336, %v3082, 0
        %3100 = vmatprep.subr.mxu0 0.0
        %3101 = vmatpush1.msra.mxu0 0.0
        %3102 = vmatprep.subr.mxu0 0.0
        %3103 = vmatpush1.msra.mxu0 0.0
        %3104 = vmatprep.subr.mxu0 0.0
        %3105 = vmatpush1.msra.mxu0 0.0
        %3106 = vmatprep.subr.mxu0 0.0
        %3107 = vmatpush1.msra.mxu0 0.0
        %3108 = vmatprep.subr.mxu0 0.0
        %3109 = vmatpush1.msra.mxu0 0.0
        %3110 = vmatprep.subr.mxu0 0.0
        %3111 = vmatpush1.msra.mxu0 0.0
        %3112 = vmatprep.subr.mxu0 0.0
        %3113 = vmatpush1.msra.mxu0 0.0
        %3114 = vmatprep.subr.mxu0 0.0
        %3115 = vmatpush1.msra.mxu0 0.0
        %3116 = vmatprep.subr.mxu0 0.0
        %3117 = vmatpush1.msra.mxu0 0.0
        %3118 = vmatprep.subr.mxu0 0.0
        %3119 = vmatpush1.msra.mxu0 0.0
        %3120 = vmatprep.subr.mxu0 0.0
        %3121 = vmatpush1.msra.mxu0 0.0
        %3122 = vmatprep.subr.mxu0 0.0
        %3123 = vmatpush1.msra.mxu0 0.0
        %3124 = vmatprep.subr.mxu0 0.0
        %3125 = vmatpush1.msra.mxu0 0.0
        %3126 = vmatprep.subr.mxu0 0.0
        %3127 = vmatpush1.msra.mxu0 0.0
        %3128 = vmatprep.subr.mxu0 0.0
        %3129 = vmatpush1.msra.mxu0 0.0
        %3130 = vmatprep.subr.mxu0 %v3092
        %3131 = vmatpush1.msra.mxu0 %v3091
        %3132 = vmatprep.subr.mxu0 0.0
        %3133 = vmatpush2.msra.mxu0 0.0
        %3134 = vmatprep.subr.mxu0 0.0
        %3135 = vmatpush2.msra.mxu0 0.0
        %3136 = vmatprep.subr.mxu0 0.0
        %3137 = vmatpush2.msra.mxu0 0.0
        %3138 = vmatprep.subr.mxu0 0.0
        %3139 = vmatpush2.msra.mxu0 0.0
        %3140 = vmatprep.subr.mxu0 0.0
        %3141 = vmatpush2.msra.mxu0 0.0
        %3142 = vmatprep.subr.mxu0 0.0
        %3143 = vmatpush2.msra.mxu0 0.0
        %3144 = vmatprep.subr.mxu0 0.0
        %3145 = vmatpush2.msra.mxu0 0.0
        %3146 = vmatprep.subr.mxu0 0.0
        %3147 = vmatpush2.msra.mxu0 0.0
        %3148 = vmatprep.subr.mxu0 0.0
        %3149 = vmatpush2.msra.mxu0 0.0
        %3150 = vmatprep.subr.mxu0 0.0
        %3151 = vmatpush2.msra.mxu0 0.0
        %3152 = vmatprep.subr.mxu0 0.0
        %3153 = vmatpush2.msra.mxu0 0.0
        %3154 = vmatprep.subr.mxu0 0.0
        %3155 = vmatpush2.msra.mxu0 0.0
        %3156 = vmatprep.subr.mxu0 0.0
        %3157 = vmatpush2.msra.mxu0 0.0
        %3158 = vmatprep.subr.mxu0 0.0
        %3159 = vmatpush2.msra.mxu0 0.0
        %3160 = vmatprep.subr.mxu0 0.0
        %3161 = vmatpush2.msra.mxu0 0.0
        %3162 = vmatprep.subr.mxu0 0.0
        %3163 = vmatpush2.msra.mxu0 0.0
        %3164 = vmatprep.mubr.f32.mxu0 0.0
        %3165 = vmatmul.mubr.f32.gmra.mxu0 %v3098
        %v3166 = vpop.f32.mrf.mxu0
        %v3167 = vadd.f32 0.0, %v3166
        %v3168 = vpop.f32.mrf.mxu0
        %v3169 = vadd.f32 0.0, %v3168
        %3170 = vdwg.mxu0
        %3171 = vmatprep.subr.mxu0 0.0
        %3172 = vmatpush1.msra.mxu0 0.0
        %3173 = vmatprep.subr.mxu0 0.0
        %3174 = vmatpush1.msra.mxu0 0.0
        %3175 = vmatprep.subr.mxu0 0.0
        %3176 = vmatpush1.msra.mxu0 0.0
        %3177 = vmatprep.subr.mxu0 0.0
        %3178 = vmatpush1.msra.mxu0 0.0
        %3179 = vmatprep.subr.mxu0 0.0
        %3180 = vmatpush1.msra.mxu0 0.0
        %3181 = vmatprep.subr.mxu0 0.0
        %3182 = vmatpush1.msra.mxu0 0.0
        %3183 = vmatprep.subr.mxu0 0.0
        %3184 = vmatpush1.msra.mxu0 0.0
        %3185 = vmatprep.subr.mxu0 0.0
        %3186 = vmatpush1.msra.mxu0 0.0
        %3187 = vmatprep.subr.mxu0 0.0
        %3188 = vmatpush1.msra.mxu0 0.0
        %3189 = vmatprep.subr.mxu0 0.0
        %3190 = vmatpush1.msra.mxu0 0.0
        %3191 = vmatprep.subr.mxu0 0.0
        %3192 = vmatpush1.msra.mxu0 0.0
        %3193 = vmatprep.subr.mxu0 0.0
        %3194 = vmatpush1.msra.mxu0 0.0
        %3195 = vmatprep.subr.mxu0 0.0
        %3196 = vmatpush1.msra.mxu0 0.0
        %3197 = vmatprep.subr.mxu0 0.0
        %3198 = vmatpush1.msra.mxu0 0.0
        %3199 = vmatprep.subr.mxu0 0.0
        %3200 = vmatpush1.msra.mxu0 0.0
        %3201 = vmatprep.subr.mxu0 0.0
        %3202 = vmatpush1.msra.mxu0 %v3093
        %3203 = vmatprep.subr.mxu0 0.0
        %3204 = vmatpush2.msra.mxu0 0.0
        %3205 = vmatprep.subr.mxu0 0.0
        %3206 = vmatpush2.msra.mxu0 0.0
        %3207 = vmatprep.subr.mxu0 0.0
        %3208 = vmatpush2.msra.mxu0 0.0
        %3209 = vmatprep.subr.mxu0 0.0
        %3210 = vmatpush2.msra.mxu0 0.0
        %3211 = vmatprep.subr.mxu0 0.0
        %3212 = vmatpush2.msra.mxu0 0.0
        %3213 = vmatprep.subr.mxu0 0.0
        %3214 = vmatpush2.msra.mxu0 0.0
        %3215 = vmatprep.subr.mxu0 0.0
        %3216 = vmatpush2.msra.mxu0 0.0
        %3217 = vmatprep.subr.mxu0 0.0
        %3218 = vmatpush2.msra.mxu0 0.0
        %3219 = vmatprep.subr.mxu0 0.0
        %3220 = vmatpush2.msra.mxu0 0.0
        %3221 = vmatprep.subr.mxu0 0.0
        %3222 = vmatpush2.msra.mxu0 0.0
        %3223 = vmatprep.subr.mxu0 0.0
        %3224 = vmatpush2.msra.mxu0 0.0
        %3225 = vmatprep.subr.mxu0 0.0
        %3226 = vmatpush2.msra.mxu0 0.0
        %3227 = vmatprep.subr.mxu0 0.0
        %3228 = vmatpush2.msra.mxu0 0.0
        %3229 = vmatprep.subr.mxu0 0.0
        %3230 = vmatpush2.msra.mxu0 0.0
        %3231 = vmatprep.subr.mxu0 0.0
        %3232 = vmatpush2.msra.mxu0 0.0
        %3233 = vmatprep.subr.mxu0 0.0
        %3234 = vmatpush2.msra.mxu0 0.0
        %3235 = vmatprep.mubr.f32.mxu0 0.0
        %3236 = vmatmul.mubr.f32.gmra.mxu0 %v3098
        %v3237 = vpop.f32.mrf.mxu0
        %v3238 = vadd.f32 0.0, %v3237
        %v3239 = vpop.f32.mrf.mxu0
        %3240 = vdwg.mxu0
        %v3241 = vadd.f32 %v3078, %v3167
        %v3242 = vadd.f32 %v3079, %v3169
        %v3243 = vadd.f32 %v3080, %v3238
        %s3244 = sadd.s32 %s24, 2
        %p3245 = scmp.lt.s32.totalorder %s3244, 0
        %s3246 = ssub.s32 0, %s3244
        %s3247 = scalar_select %p3245, %s3246, %s3244
        %s3248 = sand.u32 %s3247, 3
        %s3249 = ssub.s32 0, %s3248
        %s3250 = scalar_select %p3245, %s3249, %s3248
        %s3251 = smul.u32 %s3250, 4
        %s3252 = smul.addr %s3251, 8
        %s3253 = scalar_lea.vmem [#allocation2], %s3252
        %v3254 = vld [vmem:[%s3253] sm:$0xff]
        %v3255 = vld [vmem:[%s3253 + $0x8] sm:$0xff]
        %v3256 = vld [vmem:[%s3253 + $0x10] sm:$0xff]
        %v3257 = vld [vmem:[%s3253 + $0x18] sm:$0xff]
        %s3258 = scalar_lea.vmem %s1, 144
        %v3259 = vld [vmem:[%s3258] sm:$0xff]
        %v3261 = vsel %vm336, %v3259, 0
        %3263 = vmatprep.subr.mxu0 0.0
        %3264 = vmatpush1.msra.mxu0 0.0
        %3265 = vmatprep.subr.mxu0 0.0
        %3266 = vmatpush1.msra.mxu0 0.0
        %3267 = vmatprep.subr.mxu0 0.0
        %3268 = vmatpush1.msra.mxu0 0.0
        %3269 = vmatprep.subr.mxu0 0.0
        %3270 = vmatpush1.msra.mxu0 0.0
        %3271 = vmatprep.subr.mxu0 0.0
        %3272 = vmatpush1.msra.mxu0 0.0
        %3273 = vmatprep.subr.mxu0 0.0
        %3274 = vmatpush1.msra.mxu0 0.0
        %3275 = vmatprep.subr.mxu0 0.0
        %3276 = vmatpush1.msra.mxu0 0.0
        %3277 = vmatprep.subr.mxu0 0.0
        %3278 = vmatpush1.msra.mxu0 0.0
        %3279 = vmatprep.subr.mxu0 0.0
        %3280 = vmatpush1.msra.mxu0 0.0
        %3281 = vmatprep.subr.mxu0 0.0
        %3282 = vmatpush1.msra.mxu0 0.0
        %3283 = vmatprep.subr.mxu0 0.0
        %3284 = vmatpush1.msra.mxu0 0.0
        %3285 = vmatprep.subr.mxu0 0.0
        %3286 = vmatpush1.msra.mxu0 0.0
        %3287 = vmatprep.subr.mxu0 0.0
        %3288 = vmatpush1.msra.mxu0 0.0
        %3289 = vmatprep.subr.mxu0 0.0
        %3290 = vmatpush1.msra.mxu0 0.0
        %3291 = vmatprep.subr.mxu0 0.0
        %3292 = vmatpush1.msra.mxu0 0.0
        %3293 = vmatprep.subr.mxu0 %v3255
        %3294 = vmatpush1.msra.mxu0 %v3254
        %3295 = vmatprep.subr.mxu0 0.0
        %3296 = vmatpush2.msra.mxu0 0.0
        %3297 = vmatprep.subr.mxu0 0.0
        %3298 = vmatpush2.msra.mxu0 0.0
        %3299 = vmatprep.subr.mxu0 0.0
        %3300 = vmatpush2.msra.mxu0 0.0
        %3301 = vmatprep.subr.mxu0 0.0
        %3302 = vmatpush2.msra.mxu0 0.0
        %3303 = vmatprep.subr.mxu0 0.0
        %3304 = vmatpush2.msra.mxu0 0.0
        %3305 = vmatprep.subr.mxu0 0.0
        %3306 = vmatpush2.msra.mxu0 0.0
        %3307 = vmatprep.subr.mxu0 0.0
        %3308 = vmatpush2.msra.mxu0 0.0
        %3309 = vmatprep.subr.mxu0 0.0
        %3310 = vmatpush2.msra.mxu0 0.0
        %3311 = vmatprep.subr.mxu0 0.0
        %3312 = vmatpush2.msra.mxu0 0.0
        %3313 = vmatprep.subr.mxu0 0.0
        %3314 = vmatpush2.msra.mxu0 0.0
        %3315 = vmatprep.subr.mxu0 0.0
        %3316 = vmatpush2.msra.mxu0 0.0
        %3317 = vmatprep.subr.mxu0 0.0
        %3318 = vmatpush2.msra.mxu0 0.0
        %3319 = vmatprep.subr.mxu0 0.0
        %3320 = vmatpush2.msra.mxu0 0.0
        %3321 = vmatprep.subr.mxu0 0.0
        %3322 = vmatpush2.msra.mxu0 0.0
        %3323 = vmatprep.subr.mxu0 0.0
        %3324 = vmatpush2.msra.mxu0 0.0
        %3325 = vmatprep.subr.mxu0 0.0
        %3326 = vmatpush2.msra.mxu0 0.0
        %3327 = vmatprep.mubr.f32.mxu0 0.0
        %3328 = vmatmul.mubr.f32.gmra.mxu0 %v3261
        %v3329 = vpop.f32.mrf.mxu0
        %v3330 = vadd.f32 0.0, %v3329
        %v3331 = vpop.f32.mrf.mxu0
        %v3332 = vadd.f32 0.0, %v3331
        %3333 = vdwg.mxu0
        %3334 = vmatprep.subr.mxu0 0.0
        %3335 = vmatpush1.msra.mxu0 0.0
        %3336 = vmatprep.subr.mxu0 0.0
        %3337 = vmatpush1.msra.mxu0 0.0
        %3338 = vmatprep.subr.mxu0 0.0
        %3339 = vmatpush1.msra.mxu0 0.0
        %3340 = vmatprep.subr.mxu0 0.0
        %3341 = vmatpush1.msra.mxu0 0.0
        %3342 = vmatprep.subr.mxu0 0.0
        %3343 = vmatpush1.msra.mxu0 0.0
        %3344 = vmatprep.subr.mxu0 0.0
        %3345 = vmatpush1.msra.mxu0 0.0
        %3346 = vmatprep.subr.mxu0 0.0
        %3347 = vmatpush1.msra.mxu0 0.0
        %3348 = vmatprep.subr.mxu0 0.0
        %3349 = vmatpush1.msra.mxu0 0.0
        %3350 = vmatprep.subr.mxu0 0.0
        %3351 = vmatpush1.msra.mxu0 0.0
        %3352 = vmatprep.subr.mxu0 0.0
        %3353 = vmatpush1.msra.mxu0 0.0
        %3354 = vmatprep.subr.mxu0 0.0
        %3355 = vmatpush1.msra.mxu0 0.0
        %3356 = vmatprep.subr.mxu0 0.0
        %3357 = vmatpush1.msra.mxu0 0.0
        %3358 = vmatprep.subr.mxu0 0.0
        %3359 = vmatpush1.msra.mxu0 0.0
        %3360 = vmatprep.subr.mxu0 0.0
        %3361 = vmatpush1.msra.mxu0 0.0
        %3362 = vmatprep.subr.mxu0 0.0
        %3363 = vmatpush1.msra.mxu0 0.0
        %3364 = vmatprep.subr.mxu0 0.0
        %3365 = vmatpush1.msra.mxu0 %v3256
        %3366 = vmatprep.subr.mxu0 0.0
        %3367 = vmatpush2.msra.mxu0 0.0
        %3368 = vmatprep.subr.mxu0 0.0
        %3369 = vmatpush2.msra.mxu0 0.0
        %3370 = vmatprep.subr.mxu0 0.0
        %3371 = vmatpush2.msra.mxu0 0.0
        %3372 = vmatprep.subr.mxu0 0.0
        %3373 = vmatpush2.msra.mxu0 0.0
        %3374 = vmatprep.subr.mxu0 0.0
        %3375 = vmatpush2.msra.mxu0 0.0
        %3376 = vmatprep.subr.mxu0 0.0
        %3377 = vmatpush2.msra.mxu0 0.0
        %3378 = vmatprep.subr.mxu0 0.0
        %3379 = vmatpush2.msra.mxu0 0.0
        %3380 = vmatprep.subr.mxu0 0.0
        %3381 = vmatpush2.msra.mxu0 0.0
        %3382 = vmatprep.subr.mxu0 0.0
        %3383 = vmatpush2.msra.mxu0 0.0
        %3384 = vmatprep.subr.mxu0 0.0
        %3385 = vmatpush2.msra.mxu0 0.0
        %3386 = vmatprep.subr.mxu0 0.0
        %3387 = vmatpush2.msra.mxu0 0.0
        %3388 = vmatprep.subr.mxu0 0.0
        %3389 = vmatpush2.msra.mxu0 0.0
        %3390 = vmatprep.subr.mxu0 0.0
        %3391 = vmatpush2.msra.mxu0 0.0
        %3392 = vmatprep.subr.mxu0 0.0
        %3393 = vmatpush2.msra.mxu0 0.0
        %3394 = vmatprep.subr.mxu0 0.0
        %3395 = vmatpush2.msra.mxu0 0.0
        %3396 = vmatprep.subr.mxu0 0.0
        %3397 = vmatpush2.msra.mxu0 0.0
        %3398 = vmatprep.mubr.f32.mxu0 0.0
        %3399 = vmatmul.mubr.f32.gmra.mxu0 %v3261
        %v3400 = vpop.f32.mrf.mxu0
        %v3401 = vadd.f32 0.0, %v3400
        %v3402 = vpop.f32.mrf.mxu0
        %3403 = vdwg.mxu0
        %v3404 = vadd.f32 %v3241, %v3330
        %v3405 = vadd.f32 %v3242, %v3332
        %v3406 = vadd.f32 %v3243, %v3401
        %s3407 = scalar_lea.vmem %s1, 152
        %v3408 = vld [vmem:[%s3407] sm:$0xff]
        %3413 = vrot.lane.b32.xlu0 %v3254, 127
        %v3414 = vpop.permute.xlu0 %3413
        %3415 = vrot.lane.b32.xlu0 %v3255, 127
        %v3416 = vpop.permute.xlu0 %3415
        %3417 = vrot.lane.b32.xlu0 %v3256, 127
        %v3418 = vpop.permute.xlu0 %3417
        %3419 = vrot.lane.b32.xlu0 %v3257, 127
        %v3420 = vpop.permute.xlu0 %3419
        %v3421 = vsel %vm329, %v3414, %v3416
        %v3422 = vsel %vm329, %v3416, %v3418
        %v3423 = vsel %vm329, %v3418, %v3420
        %v3428 = vsel %vm336, %v3408, 0
        %3430 = vmatprep.subr.mxu0 0.0
        %3431 = vmatpush1.msra.mxu0 0.0
        %3432 = vmatprep.subr.mxu0 0.0
        %3433 = vmatpush1.msra.mxu0 0.0
        %3434 = vmatprep.subr.mxu0 0.0
        %3435 = vmatpush1.msra.mxu0 0.0
        %3436 = vmatprep.subr.mxu0 0.0
        %3437 = vmatpush1.msra.mxu0 0.0
        %3438 = vmatprep.subr.mxu0 0.0
        %3439 = vmatpush1.msra.mxu0 0.0
        %3440 = vmatprep.subr.mxu0 0.0
        %3441 = vmatpush1.msra.mxu0 0.0
        %3442 = vmatprep.subr.mxu0 0.0
        %3443 = vmatpush1.msra.mxu0 0.0
        %3444 = vmatprep.subr.mxu0 0.0
        %3445 = vmatpush1.msra.mxu0 0.0
        %3446 = vmatprep.subr.mxu0 0.0
        %3447 = vmatpush1.msra.mxu0 0.0
        %3448 = vmatprep.subr.mxu0 0.0
        %3449 = vmatpush1.msra.mxu0 0.0
        %3450 = vmatprep.subr.mxu0 0.0
        %3451 = vmatpush1.msra.mxu0 0.0
        %3452 = vmatprep.subr.mxu0 0.0
        %3453 = vmatpush1.msra.mxu0 0.0
        %3454 = vmatprep.subr.mxu0 0.0
        %3455 = vmatpush1.msra.mxu0 0.0
        %3456 = vmatprep.subr.mxu0 0.0
        %3457 = vmatpush1.msra.mxu0 0.0
        %3458 = vmatprep.subr.mxu0 0.0
        %3459 = vmatpush1.msra.mxu0 0.0
        %3460 = vmatprep.subr.mxu0 %v3422
        %3461 = vmatpush1.msra.mxu0 %v3421
        %3462 = vmatprep.subr.mxu0 0.0
        %3463 = vmatpush2.msra.mxu0 0.0
        %3464 = vmatprep.subr.mxu0 0.0
        %3465 = vmatpush2.msra.mxu0 0.0
        %3466 = vmatprep.subr.mxu0 0.0
        %3467 = vmatpush2.msra.mxu0 0.0
        %3468 = vmatprep.subr.mxu0 0.0
        %3469 = vmatpush2.msra.mxu0 0.0
        %3470 = vmatprep.subr.mxu0 0.0
        %3471 = vmatpush2.msra.mxu0 0.0
        %3472 = vmatprep.subr.mxu0 0.0
        %3473 = vmatpush2.msra.mxu0 0.0
        %3474 = vmatprep.subr.mxu0 0.0
        %3475 = vmatpush2.msra.mxu0 0.0
        %3476 = vmatprep.subr.mxu0 0.0
        %3477 = vmatpush2.msra.mxu0 0.0
        %3478 = vmatprep.subr.mxu0 0.0
        %3479 = vmatpush2.msra.mxu0 0.0
        %3480 = vmatprep.subr.mxu0 0.0
        %3481 = vmatpush2.msra.mxu0 0.0
        %3482 = vmatprep.subr.mxu0 0.0
        %3483 = vmatpush2.msra.mxu0 0.0
        %3484 = vmatprep.subr.mxu0 0.0
        %3485 = vmatpush2.msra.mxu0 0.0
        %3486 = vmatprep.subr.mxu0 0.0
        %3487 = vmatpush2.msra.mxu0 0.0
        %3488 = vmatprep.subr.mxu0 0.0
        %3489 = vmatpush2.msra.mxu0 0.0
        %3490 = vmatprep.subr.mxu0 0.0
        %3491 = vmatpush2.msra.mxu0 0.0
        %3492 = vmatprep.subr.mxu0 0.0
        %3493 = vmatpush2.msra.mxu0 0.0
        %3494 = vmatprep.mubr.f32.mxu0 0.0
        %3495 = vmatmul.mubr.f32.gmra.mxu0 %v3428
        %v3496 = vpop.f32.mrf.mxu0
        %v3497 = vadd.f32 0.0, %v3496
        %v3498 = vpop.f32.mrf.mxu0
        %v3499 = vadd.f32 0.0, %v3498
        %3500 = vdwg.mxu0
        %3501 = vmatprep.subr.mxu0 0.0
        %3502 = vmatpush1.msra.mxu0 0.0
        %3503 = vmatprep.subr.mxu0 0.0
        %3504 = vmatpush1.msra.mxu0 0.0
        %3505 = vmatprep.subr.mxu0 0.0
        %3506 = vmatpush1.msra.mxu0 0.0
        %3507 = vmatprep.subr.mxu0 0.0
        %3508 = vmatpush1.msra.mxu0 0.0
        %3509 = vmatprep.subr.mxu0 0.0
        %3510 = vmatpush1.msra.mxu0 0.0
        %3511 = vmatprep.subr.mxu0 0.0
        %3512 = vmatpush1.msra.mxu0 0.0
        %3513 = vmatprep.subr.mxu0 0.0
        %3514 = vmatpush1.msra.mxu0 0.0
        %3515 = vmatprep.subr.mxu0 0.0
        %3516 = vmatpush1.msra.mxu0 0.0
        %3517 = vmatprep.subr.mxu0 0.0
        %3518 = vmatpush1.msra.mxu0 0.0
        %3519 = vmatprep.subr.mxu0 0.0
        %3520 = vmatpush1.msra.mxu0 0.0
        %3521 = vmatprep.subr.mxu0 0.0
        %3522 = vmatpush1.msra.mxu0 0.0
        %3523 = vmatprep.subr.mxu0 0.0
        %3524 = vmatpush1.msra.mxu0 0.0
        %3525 = vmatprep.subr.mxu0 0.0
        %3526 = vmatpush1.msra.mxu0 0.0
        %3527 = vmatprep.subr.mxu0 0.0
        %3528 = vmatpush1.msra.mxu0 0.0
        %3529 = vmatprep.subr.mxu0 0.0
        %3530 = vmatpush1.msra.mxu0 0.0
        %3531 = vmatprep.subr.mxu0 0.0
        %3532 = vmatpush1.msra.mxu0 %v3423
        %3533 = vmatprep.subr.mxu0 0.0
        %3534 = vmatpush2.msra.mxu0 0.0
        %3535 = vmatprep.subr.mxu0 0.0
        %3536 = vmatpush2.msra.mxu0 0.0
        %3537 = vmatprep.subr.mxu0 0.0
        %3538 = vmatpush2.msra.mxu0 0.0
        %3539 = vmatprep.subr.mxu0 0.0
        %3540 = vmatpush2.msra.mxu0 0.0
        %3541 = vmatprep.subr.mxu0 0.0
        %3542 = vmatpush2.msra.mxu0 0.0
        %3543 = vmatprep.subr.mxu0 0.0
        %3544 = vmatpush2.msra.mxu0 0.0
        %3545 = vmatprep.subr.mxu0 0.0
        %3546 = vmatpush2.msra.mxu0 0.0
        %3547 = vmatprep.subr.mxu0 0.0
        %3548 = vmatpush2.msra.mxu0 0.0
        %3549 = vmatprep.subr.mxu0 0.0
        %3550 = vmatpush2.msra.mxu0 0.0
        %3551 = vmatprep.subr.mxu0 0.0
        %3552 = vmatpush2.msra.mxu0 0.0
        %3553 = vmatprep.subr.mxu0 0.0
        %3554 = vmatpush2.msra.mxu0 0.0
        %3555 = vmatprep.subr.mxu0 0.0
        %3556 = vmatpush2.msra.mxu0 0.0
        %3557 = vmatprep.subr.mxu0 0.0
        %3558 = vmatpush2.msra.mxu0 0.0
        %3559 = vmatprep.subr.mxu0 0.0
        %3560 = vmatpush2.msra.mxu0 0.0
        %3561 = vmatprep.subr.mxu0 0.0
        %3562 = vmatpush2.msra.mxu0 0.0
        %3563 = vmatprep.subr.mxu0 0.0
        %3564 = vmatpush2.msra.mxu0 0.0
        %3565 = vmatprep.mubr.f32.mxu0 0.0
        %3566 = vmatmul.mubr.f32.gmra.mxu0 %v3428
        %v3567 = vpop.f32.mrf.mxu0
        %v3568 = vadd.f32 0.0, %v3567
        %v3569 = vpop.f32.mrf.mxu0
        %3570 = vdwg.mxu0
        %v3571 = vadd.f32 %v3404, %v3497
        %v3572 = vadd.f32 %v3405, %v3499
        %v3573 = vadd.f32 %v3406, %v3568
        %s3574 = scalar_lea.vmem %s1, 160
        %v3575 = vld [vmem:[%s3574] sm:$0xff]
        %3576 = vrot.lane.b32.xlu0 %v3254, 126
        %v3577 = vpop.permute.xlu0 %3576
        %3578 = vrot.lane.b32.xlu0 %v3255, 126
        %v3579 = vpop.permute.xlu0 %3578
        %3580 = vrot.lane.b32.xlu0 %v3256, 126
        %v3581 = vpop.permute.xlu0 %3580
        %3582 = vrot.lane.b32.xlu0 %v3257, 126
        %v3583 = vpop.permute.xlu0 %3582
        %v3584 = vsel %vm635, %v3577, %v3579
        %v3585 = vsel %vm635, %v3579, %v3581
        %v3586 = vsel %vm635, %v3581, %v3583
        %v3591 = vsel %vm336, %v3575, 0
        %3593 = vmatprep.subr.mxu0 0.0
        %3594 = vmatpush1.msra.mxu0 0.0
        %3595 = vmatprep.subr.mxu0 0.0
        %3596 = vmatpush1.msra.mxu0 0.0
        %3597 = vmatprep.subr.mxu0 0.0
        %3598 = vmatpush1.msra.mxu0 0.0
        %3599 = vmatprep.subr.mxu0 0.0
        %3600 = vmatpush1.msra.mxu0 0.0
        %3601 = vmatprep.subr.mxu0 0.0
        %3602 = vmatpush1.msra.mxu0 0.0
        %3603 = vmatprep.subr.mxu0 0.0
        %3604 = vmatpush1.msra.mxu0 0.0
        %3605 = vmatprep.subr.mxu0 0.0
        %3606 = vmatpush1.msra.mxu0 0.0
        %3607 = vmatprep.subr.mxu0 0.0
        %3608 = vmatpush1.msra.mxu0 0.0
        %3609 = vmatprep.subr.mxu0 0.0
        %3610 = vmatpush1.msra.mxu0 0.0
        %3611 = vmatprep.subr.mxu0 0.0
        %3612 = vmatpush1.msra.mxu0 0.0
        %3613 = vmatprep.subr.mxu0 0.0
        %3614 = vmatpush1.msra.mxu0 0.0
        %3615 = vmatprep.subr.mxu0 0.0
        %3616 = vmatpush1.msra.mxu0 0.0
        %3617 = vmatprep.subr.mxu0 0.0
        %3618 = vmatpush1.msra.mxu0 0.0
        %3619 = vmatprep.subr.mxu0 0.0
        %3620 = vmatpush1.msra.mxu0 0.0
        %3621 = vmatprep.subr.mxu0 0.0
        %3622 = vmatpush1.msra.mxu0 0.0
        %3623 = vmatprep.subr.mxu0 %v3585
        %3624 = vmatpush1.msra.mxu0 %v3584
        %3625 = vmatprep.subr.mxu0 0.0
        %3626 = vmatpush2.msra.mxu0 0.0
        %3627 = vmatprep.subr.mxu0 0.0
        %3628 = vmatpush2.msra.mxu0 0.0
        %3629 = vmatprep.subr.mxu0 0.0
        %3630 = vmatpush2.msra.mxu0 0.0
        %3631 = vmatprep.subr.mxu0 0.0
        %3632 = vmatpush2.msra.mxu0 0.0
        %3633 = vmatprep.subr.mxu0 0.0
        %3634 = vmatpush2.msra.mxu0 0.0
        %3635 = vmatprep.subr.mxu0 0.0
        %3636 = vmatpush2.msra.mxu0 0.0
        %3637 = vmatprep.subr.mxu0 0.0
        %3638 = vmatpush2.msra.mxu0 0.0
        %3639 = vmatprep.subr.mxu0 0.0
        %3640 = vmatpush2.msra.mxu0 0.0
        %3641 = vmatprep.subr.mxu0 0.0
        %3642 = vmatpush2.msra.mxu0 0.0
        %3643 = vmatprep.subr.mxu0 0.0
        %3644 = vmatpush2.msra.mxu0 0.0
        %3645 = vmatprep.subr.mxu0 0.0
        %3646 = vmatpush2.msra.mxu0 0.0
        %3647 = vmatprep.subr.mxu0 0.0
        %3648 = vmatpush2.msra.mxu0 0.0
        %3649 = vmatprep.subr.mxu0 0.0
        %3650 = vmatpush2.msra.mxu0 0.0
        %3651 = vmatprep.subr.mxu0 0.0
        %3652 = vmatpush2.msra.mxu0 0.0
        %3653 = vmatprep.subr.mxu0 0.0
        %3654 = vmatpush2.msra.mxu0 0.0
        %3655 = vmatprep.subr.mxu0 0.0
        %3656 = vmatpush2.msra.mxu0 0.0
        %3657 = vmatprep.mubr.f32.mxu0 0.0
        %3658 = vmatmul.mubr.f32.gmra.mxu0 %v3591
        %v3659 = vpop.f32.mrf.mxu0
        %v3660 = vadd.f32 0.0, %v3659
        %v3661 = vpop.f32.mrf.mxu0
        %v3662 = vadd.f32 0.0, %v3661
        %3663 = vdwg.mxu0
        %3664 = vmatprep.subr.mxu0 0.0
        %3665 = vmatpush1.msra.mxu0 0.0
        %3666 = vmatprep.subr.mxu0 0.0
        %3667 = vmatpush1.msra.mxu0 0.0
        %3668 = vmatprep.subr.mxu0 0.0
        %3669 = vmatpush1.msra.mxu0 0.0
        %3670 = vmatprep.subr.mxu0 0.0
        %3671 = vmatpush1.msra.mxu0 0.0
        %3672 = vmatprep.subr.mxu0 0.0
        %3673 = vmatpush1.msra.mxu0 0.0
        %3674 = vmatprep.subr.mxu0 0.0
        %3675 = vmatpush1.msra.mxu0 0.0
        %3676 = vmatprep.subr.mxu0 0.0
        %3677 = vmatpush1.msra.mxu0 0.0
        %3678 = vmatprep.subr.mxu0 0.0
        %3679 = vmatpush1.msra.mxu0 0.0
        %3680 = vmatprep.subr.mxu0 0.0
        %3681 = vmatpush1.msra.mxu0 0.0
        %3682 = vmatprep.subr.mxu0 0.0
        %3683 = vmatpush1.msra.mxu0 0.0
        %3684 = vmatprep.subr.mxu0 0.0
        %3685 = vmatpush1.msra.mxu0 0.0
        %3686 = vmatprep.subr.mxu0 0.0
        %3687 = vmatpush1.msra.mxu0 0.0
        %3688 = vmatprep.subr.mxu0 0.0
        %3689 = vmatpush1.msra.mxu0 0.0
        %3690 = vmatprep.subr.mxu0 0.0
        %3691 = vmatpush1.msra.mxu0 0.0
        %3692 = vmatprep.subr.mxu0 0.0
        %3693 = vmatpush1.msra.mxu0 0.0
        %3694 = vmatprep.subr.mxu0 0.0
        %3695 = vmatpush1.msra.mxu0 %v3586
        %3696 = vmatprep.subr.mxu0 0.0
        %3697 = vmatpush2.msra.mxu0 0.0
        %3698 = vmatprep.subr.mxu0 0.0
        %3699 = vmatpush2.msra.mxu0 0.0
        %3700 = vmatprep.subr.mxu0 0.0
        %3701 = vmatpush2.msra.mxu0 0.0
        %3702 = vmatprep.subr.mxu0 0.0
        %3703 = vmatpush2.msra.mxu0 0.0
        %3704 = vmatprep.subr.mxu0 0.0
        %3705 = vmatpush2.msra.mxu0 0.0
        %3706 = vmatprep.subr.mxu0 0.0
        %3707 = vmatpush2.msra.mxu0 0.0
        %3708 = vmatprep.subr.mxu0 0.0
        %3709 = vmatpush2.msra.mxu0 0.0
        %3710 = vmatprep.subr.mxu0 0.0
        %3711 = vmatpush2.msra.mxu0 0.0
        %3712 = vmatprep.subr.mxu0 0.0
        %3713 = vmatpush2.msra.mxu0 0.0
        %3714 = vmatprep.subr.mxu0 0.0
        %3715 = vmatpush2.msra.mxu0 0.0
        %3716 = vmatprep.subr.mxu0 0.0
        %3717 = vmatpush2.msra.mxu0 0.0
        %3718 = vmatprep.subr.mxu0 0.0
        %3719 = vmatpush2.msra.mxu0 0.0
        %3720 = vmatprep.subr.mxu0 0.0
        %3721 = vmatpush2.msra.mxu0 0.0
        %3722 = vmatprep.subr.mxu0 0.0
        %3723 = vmatpush2.msra.mxu0 0.0
        %3724 = vmatprep.subr.mxu0 0.0
        %3725 = vmatpush2.msra.mxu0 0.0
        %3726 = vmatprep.subr.mxu0 0.0
        %3727 = vmatpush2.msra.mxu0 0.0
        %3728 = vmatprep.mubr.f32.mxu0 0.0
        %3729 = vmatmul.mubr.f32.gmra.mxu0 %v3591
        %v3730 = vpop.f32.mrf.mxu0
        %v3731 = vadd.f32 0.0, %v3730
        %v3732 = vpop.f32.mrf.mxu0
        %3733 = vdwg.mxu0
        %v3734 = vadd.f32 %v3571, %v3660
        %v3735 = vadd.f32 %v3572, %v3662
        %v3736 = vadd.f32 %v3573, %v3731
        %s3737 = scalar_lea.vmem %s1, 168
        %v3738 = vld [vmem:[%s3737] sm:$0xff]
        %3739 = vrot.lane.b32.xlu0 %v3254, 110
        %v3740 = vpop.permute.xlu0 %3739
        %3741 = vrot.lane.b32.xlu0 %v3255, 110
        %v3742 = vpop.permute.xlu0 %3741
        %3743 = vrot.lane.b32.xlu0 %v3256, 110
        %v3744 = vpop.permute.xlu0 %3743
        %3745 = vrot.lane.b32.xlu0 %v3257, 110
        %v3746 = vpop.permute.xlu0 %3745
        %v3747 = vsel %vm799, %v3740, %v3742
        %v3748 = vsel %vm799, %v3742, %v3744
        %v3749 = vsel %vm799, %v3744, %v3746
        %v3754 = vsel %vm336, %v3738, 0
        %3756 = vmatprep.subr.mxu0 0.0
        %3757 = vmatpush1.msra.mxu0 0.0
        %3758 = vmatprep.subr.mxu0 0.0
        %3759 = vmatpush1.msra.mxu0 0.0
        %3760 = vmatprep.subr.mxu0 0.0
        %3761 = vmatpush1.msra.mxu0 0.0
        %3762 = vmatprep.subr.mxu0 0.0
        %3763 = vmatpush1.msra.mxu0 0.0
        %3764 = vmatprep.subr.mxu0 0.0
        %3765 = vmatpush1.msra.mxu0 0.0
        %3766 = vmatprep.subr.mxu0 0.0
        %3767 = vmatpush1.msra.mxu0 0.0
        %3768 = vmatprep.subr.mxu0 0.0
        %3769 = vmatpush1.msra.mxu0 0.0
        %3770 = vmatprep.subr.mxu0 0.0
        %3771 = vmatpush1.msra.mxu0 0.0
        %3772 = vmatprep.subr.mxu0 0.0
        %3773 = vmatpush1.msra.mxu0 0.0
        %3774 = vmatprep.subr.mxu0 0.0
        %3775 = vmatpush1.msra.mxu0 0.0
        %3776 = vmatprep.subr.mxu0 0.0
        %3777 = vmatpush1.msra.mxu0 0.0
        %3778 = vmatprep.subr.mxu0 0.0
        %3779 = vmatpush1.msra.mxu0 0.0
        %3780 = vmatprep.subr.mxu0 0.0
        %3781 = vmatpush1.msra.mxu0 0.0
        %3782 = vmatprep.subr.mxu0 0.0
        %3783 = vmatpush1.msra.mxu0 0.0
        %3784 = vmatprep.subr.mxu0 0.0
        %3785 = vmatpush1.msra.mxu0 0.0
        %3786 = vmatprep.subr.mxu0 %v3748
        %3787 = vmatpush1.msra.mxu0 %v3747
        %3788 = vmatprep.subr.mxu0 0.0
        %3789 = vmatpush2.msra.mxu0 0.0
        %3790 = vmatprep.subr.mxu0 0.0
        %3791 = vmatpush2.msra.mxu0 0.0
        %3792 = vmatprep.subr.mxu0 0.0
        %3793 = vmatpush2.msra.mxu0 0.0
        %3794 = vmatprep.subr.mxu0 0.0
        %3795 = vmatpush2.msra.mxu0 0.0
        %3796 = vmatprep.subr.mxu0 0.0
        %3797 = vmatpush2.msra.mxu0 0.0
        %3798 = vmatprep.subr.mxu0 0.0
        %3799 = vmatpush2.msra.mxu0 0.0
        %3800 = vmatprep.subr.mxu0 0.0
        %3801 = vmatpush2.msra.mxu0 0.0
        %3802 = vmatprep.subr.mxu0 0.0
        %3803 = vmatpush2.msra.mxu0 0.0
        %3804 = vmatprep.subr.mxu0 0.0
        %3805 = vmatpush2.msra.mxu0 0.0
        %3806 = vmatprep.subr.mxu0 0.0
        %3807 = vmatpush2.msra.mxu0 0.0
        %3808 = vmatprep.subr.mxu0 0.0
        %3809 = vmatpush2.msra.mxu0 0.0
        %3810 = vmatprep.subr.mxu0 0.0
        %3811 = vmatpush2.msra.mxu0 0.0
        %3812 = vmatprep.subr.mxu0 0.0
        %3813 = vmatpush2.msra.mxu0 0.0
        %3814 = vmatprep.subr.mxu0 0.0
        %3815 = vmatpush2.msra.mxu0 0.0
        %3816 = vmatprep.subr.mxu0 0.0
        %3817 = vmatpush2.msra.mxu0 0.0
        %3818 = vmatprep.subr.mxu0 0.0
        %3819 = vmatpush2.msra.mxu0 0.0
        %3820 = vmatprep.mubr.f32.mxu0 0.0
        %3821 = vmatmul.mubr.f32.gmra.mxu0 %v3754
        %v3822 = vpop.f32.mrf.mxu0
        %v3823 = vadd.f32 0.0, %v3822
        %v3824 = vpop.f32.mrf.mxu0
        %v3825 = vadd.f32 0.0, %v3824
        %3826 = vdwg.mxu0
        %3827 = vmatprep.subr.mxu0 0.0
        %3828 = vmatpush1.msra.mxu0 0.0
        %3829 = vmatprep.subr.mxu0 0.0
        %3830 = vmatpush1.msra.mxu0 0.0
        %3831 = vmatprep.subr.mxu0 0.0
        %3832 = vmatpush1.msra.mxu0 0.0
        %3833 = vmatprep.subr.mxu0 0.0
        %3834 = vmatpush1.msra.mxu0 0.0
        %3835 = vmatprep.subr.mxu0 0.0
        %3836 = vmatpush1.msra.mxu0 0.0
        %3837 = vmatprep.subr.mxu0 0.0
        %3838 = vmatpush1.msra.mxu0 0.0
        %3839 = vmatprep.subr.mxu0 0.0
        %3840 = vmatpush1.msra.mxu0 0.0
        %3841 = vmatprep.subr.mxu0 0.0
        %3842 = vmatpush1.msra.mxu0 0.0
        %3843 = vmatprep.subr.mxu0 0.0
        %3844 = vmatpush1.msra.mxu0 0.0
        %3845 = vmatprep.subr.mxu0 0.0
        %3846 = vmatpush1.msra.mxu0 0.0
        %3847 = vmatprep.subr.mxu0 0.0
        %3848 = vmatpush1.msra.mxu0 0.0
        %3849 = vmatprep.subr.mxu0 0.0
        %3850 = vmatpush1.msra.mxu0 0.0
        %3851 = vmatprep.subr.mxu0 0.0
        %3852 = vmatpush1.msra.mxu0 0.0
        %3853 = vmatprep.subr.mxu0 0.0
        %3854 = vmatpush1.msra.mxu0 0.0
        %3855 = vmatprep.subr.mxu0 0.0
        %3856 = vmatpush1.msra.mxu0 0.0
        %3857 = vmatprep.subr.mxu0 0.0
        %3858 = vmatpush1.msra.mxu0 %v3749
        %3859 = vmatprep.subr.mxu0 0.0
        %3860 = vmatpush2.msra.mxu0 0.0
        %3861 = vmatprep.subr.mxu0 0.0
        %3862 = vmatpush2.msra.mxu0 0.0
        %3863 = vmatprep.subr.mxu0 0.0
        %3864 = vmatpush2.msra.mxu0 0.0
        %3865 = vmatprep.subr.mxu0 0.0
        %3866 = vmatpush2.msra.mxu0 0.0
        %3867 = vmatprep.subr.mxu0 0.0
        %3868 = vmatpush2.msra.mxu0 0.0
        %3869 = vmatprep.subr.mxu0 0.0
        %3870 = vmatpush2.msra.mxu0 0.0
        %3871 = vmatprep.subr.mxu0 0.0
        %3872 = vmatpush2.msra.mxu0 0.0
        %3873 = vmatprep.subr.mxu0 0.0
        %3874 = vmatpush2.msra.mxu0 0.0
        %3875 = vmatprep.subr.mxu0 0.0
        %3876 = vmatpush2.msra.mxu0 0.0
        %3877 = vmatprep.subr.mxu0 0.0
        %3878 = vmatpush2.msra.mxu0 0.0
        %3879 = vmatprep.subr.mxu0 0.0
        %3880 = vmatpush2.msra.mxu0 0.0
        %3881 = vmatprep.subr.mxu0 0.0
        %3882 = vmatpush2.msra.mxu0 0.0
        %3883 = vmatprep.subr.mxu0 0.0
        %3884 = vmatpush2.msra.mxu0 0.0
        %3885 = vmatprep.subr.mxu0 0.0
        %3886 = vmatpush2.msra.mxu0 0.0
        %3887 = vmatprep.subr.mxu0 0.0
        %3888 = vmatpush2.msra.mxu0 0.0
        %3889 = vmatprep.subr.mxu0 0.0
        %3890 = vmatpush2.msra.mxu0 0.0
        %3891 = vmatprep.mubr.f32.mxu0 0.0
        %3892 = vmatmul.mubr.f32.gmra.mxu0 %v3754
        %v3893 = vpop.f32.mrf.mxu0
        %v3894 = vadd.f32 0.0, %v3893
        %v3895 = vpop.f32.mrf.mxu0
        %3896 = vdwg.mxu0
        %v3897 = vadd.f32 %v3734, %v3823
        %v3898 = vadd.f32 %v3735, %v3825
        %v3899 = vadd.f32 %v3736, %v3894
        %s3900 = scalar_lea.vmem %s1, 176
        %v3901 = vld [vmem:[%s3900] sm:$0xff]
        %3902 = vrot.lane.b32.xlu0 %v3254, 109
        %v3903 = vpop.permute.xlu0 %3902
        %3904 = vrot.lane.b32.xlu0 %v3255, 109
        %v3905 = vpop.permute.xlu0 %3904
        %3906 = vrot.lane.b32.xlu0 %v3256, 109
        %v3907 = vpop.permute.xlu0 %3906
        %3908 = vrot.lane.b32.xlu0 %v3257, 109
        %v3909 = vpop.permute.xlu0 %3908
        %v3910 = vsel %vm963, %v3903, %v3905
        %v3911 = vsel %vm963, %v3905, %v3907
        %v3912 = vsel %vm963, %v3907, %v3909
        %v3917 = vsel %vm336, %v3901, 0
        %3919 = vmatprep.subr.mxu0 0.0
        %3920 = vmatpush1.msra.mxu0 0.0
        %3921 = vmatprep.subr.mxu0 0.0
        %3922 = vmatpush1.msra.mxu0 0.0
        %3923 = vmatprep.subr.mxu0 0.0
        %3924 = vmatpush1.msra.mxu0 0.0
        %3925 = vmatprep.subr.mxu0 0.0
        %3926 = vmatpush1.msra.mxu0 0.0
        %3927 = vmatprep.subr.mxu0 0.0
        %3928 = vmatpush1.msra.mxu0 0.0
        %3929 = vmatprep.subr.mxu0 0.0
        %3930 = vmatpush1.msra.mxu0 0.0
        %3931 = vmatprep.subr.mxu0 0.0
        %3932 = vmatpush1.msra.mxu0 0.0
        %3933 = vmatprep.subr.mxu0 0.0
        %3934 = vmatpush1.msra.mxu0 0.0
        %3935 = vmatprep.subr.mxu0 0.0
        %3936 = vmatpush1.msra.mxu0 0.0
        %3937 = vmatprep.subr.mxu0 0.0
        %3938 = vmatpush1.msra.mxu0 0.0
        %3939 = vmatprep.subr.mxu0 0.0
        %3940 = vmatpush1.msra.mxu0 0.0
        %3941 = vmatprep.subr.mxu0 0.0
        %3942 = vmatpush1.msra.mxu0 0.0
        %3943 = vmatprep.subr.mxu0 0.0
        %3944 = vmatpush1.msra.mxu0 0.0
        %3945 = vmatprep.subr.mxu0 0.0
        %3946 = vmatpush1.msra.mxu0 0.0
        %3947 = vmatprep.subr.mxu0 0.0
        %3948 = vmatpush1.msra.mxu0 0.0
        %3949 = vmatprep.subr.mxu0 %v3911
        %3950 = vmatpush1.msra.mxu0 %v3910
        %3951 = vmatprep.subr.mxu0 0.0
        %3952 = vmatpush2.msra.mxu0 0.0
        %3953 = vmatprep.subr.mxu0 0.0
        %3954 = vmatpush2.msra.mxu0 0.0
        %3955 = vmatprep.subr.mxu0 0.0
        %3956 = vmatpush2.msra.mxu0 0.0
        %3957 = vmatprep.subr.mxu0 0.0
        %3958 = vmatpush2.msra.mxu0 0.0
        %3959 = vmatprep.subr.mxu0 0.0
        %3960 = vmatpush2.msra.mxu0 0.0
        %3961 = vmatprep.subr.mxu0 0.0
        %3962 = vmatpush2.msra.mxu0 0.0
        %3963 = vmatprep.subr.mxu0 0.0
        %3964 = vmatpush2.msra.mxu0 0.0
        %3965 = vmatprep.subr.mxu0 0.0
        %3966 = vmatpush2.msra.mxu0 0.0
        %3967 = vmatprep.subr.mxu0 0.0
        %3968 = vmatpush2.msra.mxu0 0.0
        %3969 = vmatprep.subr.mxu0 0.0
        %3970 = vmatpush2.msra.mxu0 0.0
        %3971 = vmatprep.subr.mxu0 0.0
        %3972 = vmatpush2.msra.mxu0 0.0
        %3973 = vmatprep.subr.mxu0 0.0
        %3974 = vmatpush2.msra.mxu0 0.0
        %3975 = vmatprep.subr.mxu0 0.0
        %3976 = vmatpush2.msra.mxu0 0.0
        %3977 = vmatprep.subr.mxu0 0.0
        %3978 = vmatpush2.msra.mxu0 0.0
        %3979 = vmatprep.subr.mxu0 0.0
        %3980 = vmatpush2.msra.mxu0 0.0
        %3981 = vmatprep.subr.mxu0 0.0
        %3982 = vmatpush2.msra.mxu0 0.0
        %3983 = vmatprep.mubr.f32.mxu0 0.0
        %3984 = vmatmul.mubr.f32.gmra.mxu0 %v3917
        %v3985 = vpop.f32.mrf.mxu0
        %v3986 = vadd.f32 0.0, %v3985
        %v3987 = vpop.f32.mrf.mxu0
        %v3988 = vadd.f32 0.0, %v3987
        %3989 = vdwg.mxu0
        %3990 = vmatprep.subr.mxu0 0.0
        %3991 = vmatpush1.msra.mxu0 0.0
        %3992 = vmatprep.subr.mxu0 0.0
        %3993 = vmatpush1.msra.mxu0 0.0
        %3994 = vmatprep.subr.mxu0 0.0
        %3995 = vmatpush1.msra.mxu0 0.0
        %3996 = vmatprep.subr.mxu0 0.0
        %3997 = vmatpush1.msra.mxu0 0.0
        %3998 = vmatprep.subr.mxu0 0.0
        %3999 = vmatpush1.msra.mxu0 0.0
        %4000 = vmatprep.subr.mxu0 0.0
        %4001 = vmatpush1.msra.mxu0 0.0
        %4002 = vmatprep.subr.mxu0 0.0
        %4003 = vmatpush1.msra.mxu0 0.0
        %4004 = vmatprep.subr.mxu0 0.0
        %4005 = vmatpush1.msra.mxu0 0.0
        %4006 = vmatprep.subr.mxu0 0.0
        %4007 = vmatpush1.msra.mxu0 0.0
        %4008 = vmatprep.subr.mxu0 0.0
        %4009 = vmatpush1.msra.mxu0 0.0
        %4010 = vmatprep.subr.mxu0 0.0
        %4011 = vmatpush1.msra.mxu0 0.0
        %4012 = vmatprep.subr.mxu0 0.0
        %4013 = vmatpush1.msra.mxu0 0.0
        %4014 = vmatprep.subr.mxu0 0.0
        %4015 = vmatpush1.msra.mxu0 0.0
        %4016 = vmatprep.subr.mxu0 0.0
        %4017 = vmatpush1.msra.mxu0 0.0
        %4018 = vmatprep.subr.mxu0 0.0
        %4019 = vmatpush1.msra.mxu0 0.0
        %4020 = vmatprep.subr.mxu0 0.0
        %4021 = vmatpush1.msra.mxu0 %v3912
        %4022 = vmatprep.subr.mxu0 0.0
        %4023 = vmatpush2.msra.mxu0 0.0
        %4024 = vmatprep.subr.mxu0 0.0
        %4025 = vmatpush2.msra.mxu0 0.0
        %4026 = vmatprep.subr.mxu0 0.0
        %4027 = vmatpush2.msra.mxu0 0.0
        %4028 = vmatprep.subr.mxu0 0.0
        %4029 = vmatpush2.msra.mxu0 0.0
        %4030 = vmatprep.subr.mxu0 0.0
        %4031 = vmatpush2.msra.mxu0 0.0
        %4032 = vmatprep.subr.mxu0 0.0
        %4033 = vmatpush2.msra.mxu0 0.0
        %4034 = vmatprep.subr.mxu0 0.0
        %4035 = vmatpush2.msra.mxu0 0.0
        %4036 = vmatprep.subr.mxu0 0.0
        %4037 = vmatpush2.msra.mxu0 0.0
        %4038 = vmatprep.subr.mxu0 0.0
        %4039 = vmatpush2.msra.mxu0 0.0
        %4040 = vmatprep.subr.mxu0 0.0
        %4041 = vmatpush2.msra.mxu0 0.0
        %4042 = vmatprep.subr.mxu0 0.0
        %4043 = vmatpush2.msra.mxu0 0.0
        %4044 = vmatprep.subr.mxu0 0.0
        %4045 = vmatpush2.msra.mxu0 0.0
        %4046 = vmatprep.subr.mxu0 0.0
        %4047 = vmatpush2.msra.mxu0 0.0
        %4048 = vmatprep.subr.mxu0 0.0
        %4049 = vmatpush2.msra.mxu0 0.0
        %4050 = vmatprep.subr.mxu0 0.0
        %4051 = vmatpush2.msra.mxu0 0.0
        %4052 = vmatprep.subr.mxu0 0.0
        %4053 = vmatpush2.msra.mxu0 0.0
        %4054 = vmatprep.mubr.f32.mxu0 0.0
        %4055 = vmatmul.mubr.f32.gmra.mxu0 %v3917
        %v4056 = vpop.f32.mrf.mxu0
        %v4057 = vadd.f32 0.0, %v4056
        %v4058 = vpop.f32.mrf.mxu0
        %4059 = vdwg.mxu0
        %v4060 = vadd.f32 %v3897, %v3986
        %v4061 = vadd.f32 %v3898, %v3988
        %v4062 = vadd.f32 %v3899, %v4057
        %s4063 = scalar_lea.vmem %s1, 184
        %v4064 = vld [vmem:[%s4063] sm:$0xff]
        %4065 = vrot.lane.b32.xlu0 %v3254, 108
        %v4066 = vpop.permute.xlu0 %4065
        %4067 = vrot.lane.b32.xlu0 %v3255, 108
        %v4068 = vpop.permute.xlu0 %4067
        %4069 = vrot.lane.b32.xlu0 %v3256, 108
        %v4070 = vpop.permute.xlu0 %4069
        %4071 = vrot.lane.b32.xlu0 %v3257, 108
        %v4072 = vpop.permute.xlu0 %4071
        %v4073 = vsel %vm1127, %v4066, %v4068
        %v4074 = vsel %vm1127, %v4068, %v4070
        %v4075 = vsel %vm1127, %v4070, %v4072
        %v4080 = vsel %vm336, %v4064, 0
        %4082 = vmatprep.subr.mxu0 0.0
        %4083 = vmatpush1.msra.mxu0 0.0
        %4084 = vmatprep.subr.mxu0 0.0
        %4085 = vmatpush1.msra.mxu0 0.0
        %4086 = vmatprep.subr.mxu0 0.0
        %4087 = vmatpush1.msra.mxu0 0.0
        %4088 = vmatprep.subr.mxu0 0.0
        %4089 = vmatpush1.msra.mxu0 0.0
        %4090 = vmatprep.subr.mxu0 0.0
        %4091 = vmatpush1.msra.mxu0 0.0
        %4092 = vmatprep.subr.mxu0 0.0
        %4093 = vmatpush1.msra.mxu0 0.0
        %4094 = vmatprep.subr.mxu0 0.0
        %4095 = vmatpush1.msra.mxu0 0.0
        %4096 = vmatprep.subr.mxu0 0.0
        %4097 = vmatpush1.msra.mxu0 0.0
        %4098 = vmatprep.subr.mxu0 0.0
        %4099 = vmatpush1.msra.mxu0 0.0
        %4100 = vmatprep.subr.mxu0 0.0
        %4101 = vmatpush1.msra.mxu0 0.0
        %4102 = vmatprep.subr.mxu0 0.0
        %4103 = vmatpush1.msra.mxu0 0.0
        %4104 = vmatprep.subr.mxu0 0.0
        %4105 = vmatpush1.msra.mxu0 0.0
        %4106 = vmatprep.subr.mxu0 0.0
        %4107 = vmatpush1.msra.mxu0 0.0
        %4108 = vmatprep.subr.mxu0 0.0
        %4109 = vmatpush1.msra.mxu0 0.0
        %4110 = vmatprep.subr.mxu0 0.0
        %4111 = vmatpush1.msra.mxu0 0.0
        %4112 = vmatprep.subr.mxu0 %v4074
        %4113 = vmatpush1.msra.mxu0 %v4073
        %4114 = vmatprep.subr.mxu0 0.0
        %4115 = vmatpush2.msra.mxu0 0.0
        %4116 = vmatprep.subr.mxu0 0.0
        %4117 = vmatpush2.msra.mxu0 0.0
        %4118 = vmatprep.subr.mxu0 0.0
        %4119 = vmatpush2.msra.mxu0 0.0
        %4120 = vmatprep.subr.mxu0 0.0
        %4121 = vmatpush2.msra.mxu0 0.0
        %4122 = vmatprep.subr.mxu0 0.0
        %4123 = vmatpush2.msra.mxu0 0.0
        %4124 = vmatprep.subr.mxu0 0.0
        %4125 = vmatpush2.msra.mxu0 0.0
        %4126 = vmatprep.subr.mxu0 0.0
        %4127 = vmatpush2.msra.mxu0 0.0
        %4128 = vmatprep.subr.mxu0 0.0
        %4129 = vmatpush2.msra.mxu0 0.0
        %4130 = vmatprep.subr.mxu0 0.0
        %4131 = vmatpush2.msra.mxu0 0.0
        %4132 = vmatprep.subr.mxu0 0.0
        %4133 = vmatpush2.msra.mxu0 0.0
        %4134 = vmatprep.subr.mxu0 0.0
        %4135 = vmatpush2.msra.mxu0 0.0
        %4136 = vmatprep.subr.mxu0 0.0
        %4137 = vmatpush2.msra.mxu0 0.0
        %4138 = vmatprep.subr.mxu0 0.0
        %4139 = vmatpush2.msra.mxu0 0.0
        %4140 = vmatprep.subr.mxu0 0.0
        %4141 = vmatpush2.msra.mxu0 0.0
        %4142 = vmatprep.subr.mxu0 0.0
        %4143 = vmatpush2.msra.mxu0 0.0
        %4144 = vmatprep.subr.mxu0 0.0
        %4145 = vmatpush2.msra.mxu0 0.0
        %4146 = vmatprep.mubr.f32.mxu0 0.0
        %4147 = vmatmul.mubr.f32.gmra.mxu0 %v4080
        %v4148 = vpop.f32.mrf.mxu0
        %v4149 = vadd.f32 0.0, %v4148
        %v4150 = vpop.f32.mrf.mxu0
        %v4151 = vadd.f32 0.0, %v4150
        %4152 = vdwg.mxu0
        %4153 = vmatprep.subr.mxu0 0.0
        %4154 = vmatpush1.msra.mxu0 0.0
        %4155 = vmatprep.subr.mxu0 0.0
        %4156 = vmatpush1.msra.mxu0 0.0
        %4157 = vmatprep.subr.mxu0 0.0
        %4158 = vmatpush1.msra.mxu0 0.0
        %4159 = vmatprep.subr.mxu0 0.0
        %4160 = vmatpush1.msra.mxu0 0.0
        %4161 = vmatprep.subr.mxu0 0.0
        %4162 = vmatpush1.msra.mxu0 0.0
        %4163 = vmatprep.subr.mxu0 0.0
        %4164 = vmatpush1.msra.mxu0 0.0
        %4165 = vmatprep.subr.mxu0 0.0
        %4166 = vmatpush1.msra.mxu0 0.0
        %4167 = vmatprep.subr.mxu0 0.0
        %4168 = vmatpush1.msra.mxu0 0.0
        %4169 = vmatprep.subr.mxu0 0.0
        %4170 = vmatpush1.msra.mxu0 0.0
        %4171 = vmatprep.subr.mxu0 0.0
        %4172 = vmatpush1.msra.mxu0 0.0
        %4173 = vmatprep.subr.mxu0 0.0
        %4174 = vmatpush1.msra.mxu0 0.0
        %4175 = vmatprep.subr.mxu0 0.0
        %4176 = vmatpush1.msra.mxu0 0.0
        %4177 = vmatprep.subr.mxu0 0.0
        %4178 = vmatpush1.msra.mxu0 0.0
        %4179 = vmatprep.subr.mxu0 0.0
        %4180 = vmatpush1.msra.mxu0 0.0
        %4181 = vmatprep.subr.mxu0 0.0
        %4182 = vmatpush1.msra.mxu0 0.0
        %4183 = vmatprep.subr.mxu0 0.0
        %4184 = vmatpush1.msra.mxu0 %v4075
        %4185 = vmatprep.subr.mxu0 0.0
        %4186 = vmatpush2.msra.mxu0 0.0
        %4187 = vmatprep.subr.mxu0 0.0
        %4188 = vmatpush2.msra.mxu0 0.0
        %4189 = vmatprep.subr.mxu0 0.0
        %4190 = vmatpush2.msra.mxu0 0.0
        %4191 = vmatprep.subr.mxu0 0.0
        %4192 = vmatpush2.msra.mxu0 0.0
        %4193 = vmatprep.subr.mxu0 0.0
        %4194 = vmatpush2.msra.mxu0 0.0
        %4195 = vmatprep.subr.mxu0 0.0
        %4196 = vmatpush2.msra.mxu0 0.0
        %4197 = vmatprep.subr.mxu0 0.0
        %4198 = vmatpush2.msra.mxu0 0.0
        %4199 = vmatprep.subr.mxu0 0.0
        %4200 = vmatpush2.msra.mxu0 0.0
        %4201 = vmatprep.subr.mxu0 0.0
        %4202 = vmatpush2.msra.mxu0 0.0
        %4203 = vmatprep.subr.mxu0 0.0
        %4204 = vmatpush2.msra.mxu0 0.0
        %4205 = vmatprep.subr.mxu0 0.0
        %4206 = vmatpush2.msra.mxu0 0.0
        %4207 = vmatprep.subr.mxu0 0.0
        %4208 = vmatpush2.msra.mxu0 0.0
        %4209 = vmatprep.subr.mxu0 0.0
        %4210 = vmatpush2.msra.mxu0 0.0
        %4211 = vmatprep.subr.mxu0 0.0
        %4212 = vmatpush2.msra.mxu0 0.0
        %4213 = vmatprep.subr.mxu0 0.0
        %4214 = vmatpush2.msra.mxu0 0.0
        %4215 = vmatprep.subr.mxu0 0.0
        %4216 = vmatpush2.msra.mxu0 0.0
        %4217 = vmatprep.mubr.f32.mxu0 0.0
        %4218 = vmatmul.mubr.f32.gmra.mxu0 %v4080
        %v4219 = vpop.f32.mrf.mxu0
        %v4220 = vadd.f32 0.0, %v4219
        %v4221 = vpop.f32.mrf.mxu0
        %4222 = vdwg.mxu0
        %v4223 = vadd.f32 %v4060, %v4149
        %v4224 = vadd.f32 %v4061, %v4151
        %v4225 = vadd.f32 %v4062, %v4220
        %s4226 = scalar_lea.vmem %s1, 192
        %v4227 = vld [vmem:[%s4226] sm:$0xff]
        %4228 = vrot.lane.b32.xlu0 %v3254, 92
        %v4229 = vpop.permute.xlu0 %4228
        %4230 = vrot.lane.b32.xlu0 %v3255, 92
        %v4231 = vpop.permute.xlu0 %4230
        %4232 = vrot.lane.b32.xlu0 %v3256, 92
        %v4233 = vpop.permute.xlu0 %4232
        %4234 = vrot.lane.b32.xlu0 %v3257, 92
        %v4235 = vpop.permute.xlu0 %4234
        %v4236 = vsel %vm1291, %v4229, %v4231
        %v4237 = vsel %vm1291, %v4231, %v4233
        %v4238 = vsel %vm1291, %v4233, %v4235
        %v4243 = vsel %vm336, %v4227, 0
        %4245 = vmatprep.subr.mxu0 0.0
        %4246 = vmatpush1.msra.mxu0 0.0
        %4247 = vmatprep.subr.mxu0 0.0
        %4248 = vmatpush1.msra.mxu0 0.0
        %4249 = vmatprep.subr.mxu0 0.0
        %4250 = vmatpush1.msra.mxu0 0.0
        %4251 = vmatprep.subr.mxu0 0.0
        %4252 = vmatpush1.msra.mxu0 0.0
        %4253 = vmatprep.subr.mxu0 0.0
        %4254 = vmatpush1.msra.mxu0 0.0
        %4255 = vmatprep.subr.mxu0 0.0
        %4256 = vmatpush1.msra.mxu0 0.0
        %4257 = vmatprep.subr.mxu0 0.0
        %4258 = vmatpush1.msra.mxu0 0.0
        %4259 = vmatprep.subr.mxu0 0.0
        %4260 = vmatpush1.msra.mxu0 0.0
        %4261 = vmatprep.subr.mxu0 0.0
        %4262 = vmatpush1.msra.mxu0 0.0
        %4263 = vmatprep.subr.mxu0 0.0
        %4264 = vmatpush1.msra.mxu0 0.0
        %4265 = vmatprep.subr.mxu0 0.0
        %4266 = vmatpush1.msra.mxu0 0.0
        %4267 = vmatprep.subr.mxu0 0.0
        %4268 = vmatpush1.msra.mxu0 0.0
        %4269 = vmatprep.subr.mxu0 0.0
        %4270 = vmatpush1.msra.mxu0 0.0
        %4271 = vmatprep.subr.mxu0 0.0
        %4272 = vmatpush1.msra.mxu0 0.0
        %4273 = vmatprep.subr.mxu0 0.0
        %4274 = vmatpush1.msra.mxu0 0.0
        %4275 = vmatprep.subr.mxu0 %v4237
        %4276 = vmatpush1.msra.mxu0 %v4236
        %4277 = vmatprep.subr.mxu0 0.0
        %4278 = vmatpush2.msra.mxu0 0.0
        %4279 = vmatprep.subr.mxu0 0.0
        %4280 = vmatpush2.msra.mxu0 0.0
        %4281 = vmatprep.subr.mxu0 0.0
        %4282 = vmatpush2.msra.mxu0 0.0
        %4283 = vmatprep.subr.mxu0 0.0
        %4284 = vmatpush2.msra.mxu0 0.0
        %4285 = vmatprep.subr.mxu0 0.0
        %4286 = vmatpush2.msra.mxu0 0.0
        %4287 = vmatprep.subr.mxu0 0.0
        %4288 = vmatpush2.msra.mxu0 0.0
        %4289 = vmatprep.subr.mxu0 0.0
        %4290 = vmatpush2.msra.mxu0 0.0
        %4291 = vmatprep.subr.mxu0 0.0
        %4292 = vmatpush2.msra.mxu0 0.0
        %4293 = vmatprep.subr.mxu0 0.0
        %4294 = vmatpush2.msra.mxu0 0.0
        %4295 = vmatprep.subr.mxu0 0.0
        %4296 = vmatpush2.msra.mxu0 0.0
        %4297 = vmatprep.subr.mxu0 0.0
        %4298 = vmatpush2.msra.mxu0 0.0
        %4299 = vmatprep.subr.mxu0 0.0
        %4300 = vmatpush2.msra.mxu0 0.0
        %4301 = vmatprep.subr.mxu0 0.0
        %4302 = vmatpush2.msra.mxu0 0.0
        %4303 = vmatprep.subr.mxu0 0.0
        %4304 = vmatpush2.msra.mxu0 0.0
        %4305 = vmatprep.subr.mxu0 0.0
        %4306 = vmatpush2.msra.mxu0 0.0
        %4307 = vmatprep.subr.mxu0 0.0
        %4308 = vmatpush2.msra.mxu0 0.0
        %4309 = vmatprep.mubr.f32.mxu0 0.0
        %4310 = vmatmul.mubr.f32.gmra.mxu0 %v4243
        %v4311 = vpop.f32.mrf.mxu0
        %v4312 = vadd.f32 0.0, %v4311
        %v4313 = vpop.f32.mrf.mxu0
        %v4314 = vadd.f32 0.0, %v4313
        %4315 = vdwg.mxu0
        %4316 = vmatprep.subr.mxu0 0.0
        %4317 = vmatpush1.msra.mxu0 0.0
        %4318 = vmatprep.subr.mxu0 0.0
        %4319 = vmatpush1.msra.mxu0 0.0
        %4320 = vmatprep.subr.mxu0 0.0
        %4321 = vmatpush1.msra.mxu0 0.0
        %4322 = vmatprep.subr.mxu0 0.0
        %4323 = vmatpush1.msra.mxu0 0.0
        %4324 = vmatprep.subr.mxu0 0.0
        %4325 = vmatpush1.msra.mxu0 0.0
        %4326 = vmatprep.subr.mxu0 0.0
        %4327 = vmatpush1.msra.mxu0 0.0
        %4328 = vmatprep.subr.mxu0 0.0
        %4329 = vmatpush1.msra.mxu0 0.0
        %4330 = vmatprep.subr.mxu0 0.0
        %4331 = vmatpush1.msra.mxu0 0.0
        %4332 = vmatprep.subr.mxu0 0.0
        %4333 = vmatpush1.msra.mxu0 0.0
        %4334 = vmatprep.subr.mxu0 0.0
        %4335 = vmatpush1.msra.mxu0 0.0
        %4336 = vmatprep.subr.mxu0 0.0
        %4337 = vmatpush1.msra.mxu0 0.0
        %4338 = vmatprep.subr.mxu0 0.0
        %4339 = vmatpush1.msra.mxu0 0.0
        %4340 = vmatprep.subr.mxu0 0.0
        %4341 = vmatpush1.msra.mxu0 0.0
        %4342 = vmatprep.subr.mxu0 0.0
        %4343 = vmatpush1.msra.mxu0 0.0
        %4344 = vmatprep.subr.mxu0 0.0
        %4345 = vmatpush1.msra.mxu0 0.0
        %4346 = vmatprep.subr.mxu0 0.0
        %4347 = vmatpush1.msra.mxu0 %v4238
        %4348 = vmatprep.subr.mxu0 0.0
        %4349 = vmatpush2.msra.mxu0 0.0
        %4350 = vmatprep.subr.mxu0 0.0
        %4351 = vmatpush2.msra.mxu0 0.0
        %4352 = vmatprep.subr.mxu0 0.0
        %4353 = vmatpush2.msra.mxu0 0.0
        %4354 = vmatprep.subr.mxu0 0.0
        %4355 = vmatpush2.msra.mxu0 0.0
        %4356 = vmatprep.subr.mxu0 0.0
        %4357 = vmatpush2.msra.mxu0 0.0
        %4358 = vmatprep.subr.mxu0 0.0
        %4359 = vmatpush2.msra.mxu0 0.0
        %4360 = vmatprep.subr.mxu0 0.0
        %4361 = vmatpush2.msra.mxu0 0.0
        %4362 = vmatprep.subr.mxu0 0.0
        %4363 = vmatpush2.msra.mxu0 0.0
        %4364 = vmatprep.subr.mxu0 0.0
        %4365 = vmatpush2.msra.mxu0 0.0
        %4366 = vmatprep.subr.mxu0 0.0
        %4367 = vmatpush2.msra.mxu0 0.0
        %4368 = vmatprep.subr.mxu0 0.0
        %4369 = vmatpush2.msra.mxu0 0.0
        %4370 = vmatprep.subr.mxu0 0.0
        %4371 = vmatpush2.msra.mxu0 0.0
        %4372 = vmatprep.subr.mxu0 0.0
        %4373 = vmatpush2.msra.mxu0 0.0
        %4374 = vmatprep.subr.mxu0 0.0
        %4375 = vmatpush2.msra.mxu0 0.0
        %4376 = vmatprep.subr.mxu0 0.0
        %4377 = vmatpush2.msra.mxu0 0.0
        %4378 = vmatprep.subr.mxu0 0.0
        %4379 = vmatpush2.msra.mxu0 0.0
        %4380 = vmatprep.mubr.f32.mxu0 0.0
        %4381 = vmatmul.mubr.f32.gmra.mxu0 %v4243
        %v4382 = vpop.f32.mrf.mxu0
        %v4383 = vadd.f32 0.0, %v4382
        %v4384 = vpop.f32.mrf.mxu0
        %4385 = vdwg.mxu0
        %v4386 = vadd.f32 %v4223, %v4312
        %v4387 = vadd.f32 %v4224, %v4314
        %v4388 = vadd.f32 %v4225, %v4383
        %s4389 = scalar_lea.vmem %s1, 200
        %v4390 = vld [vmem:[%s4389] sm:$0xff]
        %4391 = vrot.lane.b32.xlu0 %v3254, 91
        %v4392 = vpop.permute.xlu0 %4391
        %4393 = vrot.lane.b32.xlu0 %v3255, 91
        %v4394 = vpop.permute.xlu0 %4393
        %4395 = vrot.lane.b32.xlu0 %v3256, 91
        %v4396 = vpop.permute.xlu0 %4395
        %4397 = vrot.lane.b32.xlu0 %v3257, 91
        %v4398 = vpop.permute.xlu0 %4397
        %v4399 = vsel %vm1455, %v4392, %v4394
        %v4400 = vsel %vm1455, %v4394, %v4396
        %v4401 = vsel %vm1455, %v4396, %v4398
        %v4406 = vsel %vm336, %v4390, 0
        %4408 = vmatprep.subr.mxu0 0.0
        %4409 = vmatpush1.msra.mxu0 0.0
        %4410 = vmatprep.subr.mxu0 0.0
        %4411 = vmatpush1.msra.mxu0 0.0
        %4412 = vmatprep.subr.mxu0 0.0
        %4413 = vmatpush1.msra.mxu0 0.0
        %4414 = vmatprep.subr.mxu0 0.0
        %4415 = vmatpush1.msra.mxu0 0.0
        %4416 = vmatprep.subr.mxu0 0.0
        %4417 = vmatpush1.msra.mxu0 0.0
        %4418 = vmatprep.subr.mxu0 0.0
        %4419 = vmatpush1.msra.mxu0 0.0
        %4420 = vmatprep.subr.mxu0 0.0
        %4421 = vmatpush1.msra.mxu0 0.0
        %4422 = vmatprep.subr.mxu0 0.0
        %4423 = vmatpush1.msra.mxu0 0.0
        %4424 = vmatprep.subr.mxu0 0.0
        %4425 = vmatpush1.msra.mxu0 0.0
        %4426 = vmatprep.subr.mxu0 0.0
        %4427 = vmatpush1.msra.mxu0 0.0
        %4428 = vmatprep.subr.mxu0 0.0
        %4429 = vmatpush1.msra.mxu0 0.0
        %4430 = vmatprep.subr.mxu0 0.0
        %4431 = vmatpush1.msra.mxu0 0.0
        %4432 = vmatprep.subr.mxu0 0.0
        %4433 = vmatpush1.msra.mxu0 0.0
        %4434 = vmatprep.subr.mxu0 0.0
        %4435 = vmatpush1.msra.mxu0 0.0
        %4436 = vmatprep.subr.mxu0 0.0
        %4437 = vmatpush1.msra.mxu0 0.0
        %4438 = vmatprep.subr.mxu0 %v4400
        %4439 = vmatpush1.msra.mxu0 %v4399
        %4440 = vmatprep.subr.mxu0 0.0
        %4441 = vmatpush2.msra.mxu0 0.0
        %4442 = vmatprep.subr.mxu0 0.0
        %4443 = vmatpush2.msra.mxu0 0.0
        %4444 = vmatprep.subr.mxu0 0.0
        %4445 = vmatpush2.msra.mxu0 0.0
        %4446 = vmatprep.subr.mxu0 0.0
        %4447 = vmatpush2.msra.mxu0 0.0
        %4448 = vmatprep.subr.mxu0 0.0
        %4449 = vmatpush2.msra.mxu0 0.0
        %4450 = vmatprep.subr.mxu0 0.0
        %4451 = vmatpush2.msra.mxu0 0.0
        %4452 = vmatprep.subr.mxu0 0.0
        %4453 = vmatpush2.msra.mxu0 0.0
        %4454 = vmatprep.subr.mxu0 0.0
        %4455 = vmatpush2.msra.mxu0 0.0
        %4456 = vmatprep.subr.mxu0 0.0
        %4457 = vmatpush2.msra.mxu0 0.0
        %4458 = vmatprep.subr.mxu0 0.0
        %4459 = vmatpush2.msra.mxu0 0.0
        %4460 = vmatprep.subr.mxu0 0.0
        %4461 = vmatpush2.msra.mxu0 0.0
        %4462 = vmatprep.subr.mxu0 0.0
        %4463 = vmatpush2.msra.mxu0 0.0
        %4464 = vmatprep.subr.mxu0 0.0
        %4465 = vmatpush2.msra.mxu0 0.0
        %4466 = vmatprep.subr.mxu0 0.0
        %4467 = vmatpush2.msra.mxu0 0.0
        %4468 = vmatprep.subr.mxu0 0.0
        %4469 = vmatpush2.msra.mxu0 0.0
        %4470 = vmatprep.subr.mxu0 0.0
        %4471 = vmatpush2.msra.mxu0 0.0
        %4472 = vmatprep.mubr.f32.mxu0 0.0
        %4473 = vmatmul.mubr.f32.gmra.mxu0 %v4406
        %v4474 = vpop.f32.mrf.mxu0
        %v4475 = vadd.f32 0.0, %v4474
        %v4476 = vpop.f32.mrf.mxu0
        %v4477 = vadd.f32 0.0, %v4476
        %4478 = vdwg.mxu0
        %4479 = vmatprep.subr.mxu0 0.0
        %4480 = vmatpush1.msra.mxu0 0.0
        %4481 = vmatprep.subr.mxu0 0.0
        %4482 = vmatpush1.msra.mxu0 0.0
        %4483 = vmatprep.subr.mxu0 0.0
        %4484 = vmatpush1.msra.mxu0 0.0
        %4485 = vmatprep.subr.mxu0 0.0
        %4486 = vmatpush1.msra.mxu0 0.0
        %4487 = vmatprep.subr.mxu0 0.0
        %4488 = vmatpush1.msra.mxu0 0.0
        %4489 = vmatprep.subr.mxu0 0.0
        %4490 = vmatpush1.msra.mxu0 0.0
        %4491 = vmatprep.subr.mxu0 0.0
        %4492 = vmatpush1.msra.mxu0 0.0
        %4493 = vmatprep.subr.mxu0 0.0
        %4494 = vmatpush1.msra.mxu0 0.0
        %4495 = vmatprep.subr.mxu0 0.0
        %4496 = vmatpush1.msra.mxu0 0.0
        %4497 = vmatprep.subr.mxu0 0.0
        %4498 = vmatpush1.msra.mxu0 0.0
        %4499 = vmatprep.subr.mxu0 0.0
        %4500 = vmatpush1.msra.mxu0 0.0
        %4501 = vmatprep.subr.mxu0 0.0
        %4502 = vmatpush1.msra.mxu0 0.0
        %4503 = vmatprep.subr.mxu0 0.0
        %4504 = vmatpush1.msra.mxu0 0.0
        %4505 = vmatprep.subr.mxu0 0.0
        %4506 = vmatpush1.msra.mxu0 0.0
        %4507 = vmatprep.subr.mxu0 0.0
        %4508 = vmatpush1.msra.mxu0 0.0
        %4509 = vmatprep.subr.mxu0 0.0
        %4510 = vmatpush1.msra.mxu0 %v4401
        %4511 = vmatprep.subr.mxu0 0.0
        %4512 = vmatpush2.msra.mxu0 0.0
        %4513 = vmatprep.subr.mxu0 0.0
        %4514 = vmatpush2.msra.mxu0 0.0
        %4515 = vmatprep.subr.mxu0 0.0
        %4516 = vmatpush2.msra.mxu0 0.0
        %4517 = vmatprep.subr.mxu0 0.0
        %4518 = vmatpush2.msra.mxu0 0.0
        %4519 = vmatprep.subr.mxu0 0.0
        %4520 = vmatpush2.msra.mxu0 0.0
        %4521 = vmatprep.subr.mxu0 0.0
        %4522 = vmatpush2.msra.mxu0 0.0
        %4523 = vmatprep.subr.mxu0 0.0
        %4524 = vmatpush2.msra.mxu0 0.0
        %4525 = vmatprep.subr.mxu0 0.0
        %4526 = vmatpush2.msra.mxu0 0.0
        %4527 = vmatprep.subr.mxu0 0.0
        %4528 = vmatpush2.msra.mxu0 0.0
        %4529 = vmatprep.subr.mxu0 0.0
        %4530 = vmatpush2.msra.mxu0 0.0
        %4531 = vmatprep.subr.mxu0 0.0
        %4532 = vmatpush2.msra.mxu0 0.0
        %4533 = vmatprep.subr.mxu0 0.0
        %4534 = vmatpush2.msra.mxu0 0.0
        %4535 = vmatprep.subr.mxu0 0.0
        %4536 = vmatpush2.msra.mxu0 0.0
        %4537 = vmatprep.subr.mxu0 0.0
        %4538 = vmatpush2.msra.mxu0 0.0
        %4539 = vmatprep.subr.mxu0 0.0
        %4540 = vmatpush2.msra.mxu0 0.0
        %4541 = vmatprep.subr.mxu0 0.0
        %4542 = vmatpush2.msra.mxu0 0.0
        %4543 = vmatprep.mubr.f32.mxu0 0.0
        %4544 = vmatmul.mubr.f32.gmra.mxu0 %v4406
        %v4545 = vpop.f32.mrf.mxu0
        %v4546 = vadd.f32 0.0, %v4545
        %v4547 = vpop.f32.mrf.mxu0
        %4548 = vdwg.mxu0
        %v4549 = vadd.f32 %v4386, %v4475
        %v4550 = vadd.f32 %v4387, %v4477
        %v4551 = vadd.f32 %v4388, %v4546
        %s4552 = scalar_lea.vmem %s1, 208
        %v4553 = vld [vmem:[%s4552] sm:$0xff]
        %4554 = vrot.lane.b32.xlu0 %v3254, 90
        %v4555 = vpop.permute.xlu0 %4554
        %4556 = vrot.lane.b32.xlu0 %v3255, 90
        %v4557 = vpop.permute.xlu0 %4556
        %4558 = vrot.lane.b32.xlu0 %v3256, 90
        %v4559 = vpop.permute.xlu0 %4558
        %4560 = vrot.lane.b32.xlu0 %v3257, 90
        %v4561 = vpop.permute.xlu0 %4560
        %v4562 = vsel %vm1619, %v4555, %v4557
        %v4563 = vsel %vm1619, %v4557, %v4559
        %v4564 = vsel %vm1619, %v4559, %v4561
        %v4569 = vsel %vm336, %v4553, 0
        %4571 = vmatprep.subr.mxu0 0.0
        %4572 = vmatpush1.msra.mxu0 0.0
        %4573 = vmatprep.subr.mxu0 0.0
        %4574 = vmatpush1.msra.mxu0 0.0
        %4575 = vmatprep.subr.mxu0 0.0
        %4576 = vmatpush1.msra.mxu0 0.0
        %4577 = vmatprep.subr.mxu0 0.0
        %4578 = vmatpush1.msra.mxu0 0.0
        %4579 = vmatprep.subr.mxu0 0.0
        %4580 = vmatpush1.msra.mxu0 0.0
        %4581 = vmatprep.subr.mxu0 0.0
        %4582 = vmatpush1.msra.mxu0 0.0
        %4583 = vmatprep.subr.mxu0 0.0
        %4584 = vmatpush1.msra.mxu0 0.0
        %4585 = vmatprep.subr.mxu0 0.0
        %4586 = vmatpush1.msra.mxu0 0.0
        %4587 = vmatprep.subr.mxu0 0.0
        %4588 = vmatpush1.msra.mxu0 0.0
        %4589 = vmatprep.subr.mxu0 0.0
        %4590 = vmatpush1.msra.mxu0 0.0
        %4591 = vmatprep.subr.mxu0 0.0
        %4592 = vmatpush1.msra.mxu0 0.0
        %4593 = vmatprep.subr.mxu0 0.0
        %4594 = vmatpush1.msra.mxu0 0.0
        %4595 = vmatprep.subr.mxu0 0.0
        %4596 = vmatpush1.msra.mxu0 0.0
        %4597 = vmatprep.subr.mxu0 0.0
        %4598 = vmatpush1.msra.mxu0 0.0
        %4599 = vmatprep.subr.mxu0 0.0
        %4600 = vmatpush1.msra.mxu0 0.0
        %4601 = vmatprep.subr.mxu0 %v4563
        %4602 = vmatpush1.msra.mxu0 %v4562
        %4603 = vmatprep.subr.mxu0 0.0
        %4604 = vmatpush2.msra.mxu0 0.0
        %4605 = vmatprep.subr.mxu0 0.0
        %4606 = vmatpush2.msra.mxu0 0.0
        %4607 = vmatprep.subr.mxu0 0.0
        %4608 = vmatpush2.msra.mxu0 0.0
        %4609 = vmatprep.subr.mxu0 0.0
        %4610 = vmatpush2.msra.mxu0 0.0
        %4611 = vmatprep.subr.mxu0 0.0
        %4612 = vmatpush2.msra.mxu0 0.0
        %4613 = vmatprep.subr.mxu0 0.0
        %4614 = vmatpush2.msra.mxu0 0.0
        %4615 = vmatprep.subr.mxu0 0.0
        %4616 = vmatpush2.msra.mxu0 0.0
        %4617 = vmatprep.subr.mxu0 0.0
        %4618 = vmatpush2.msra.mxu0 0.0
        %4619 = vmatprep.subr.mxu0 0.0
        %4620 = vmatpush2.msra.mxu0 0.0
        %4621 = vmatprep.subr.mxu0 0.0
        %4622 = vmatpush2.msra.mxu0 0.0
        %4623 = vmatprep.subr.mxu0 0.0
        %4624 = vmatpush2.msra.mxu0 0.0
        %4625 = vmatprep.subr.mxu0 0.0
        %4626 = vmatpush2.msra.mxu0 0.0
        %4627 = vmatprep.subr.mxu0 0.0
        %4628 = vmatpush2.msra.mxu0 0.0
        %4629 = vmatprep.subr.mxu0 0.0
        %4630 = vmatpush2.msra.mxu0 0.0
        %4631 = vmatprep.subr.mxu0 0.0
        %4632 = vmatpush2.msra.mxu0 0.0
        %4633 = vmatprep.subr.mxu0 0.0
        %4634 = vmatpush2.msra.mxu0 0.0
        %4635 = vmatprep.mubr.f32.mxu0 0.0
        %4636 = vmatmul.mubr.f32.gmra.mxu0 %v4569
        %v4637 = vpop.f32.mrf.mxu0
        %v4638 = vadd.f32 0.0, %v4637
        %v4639 = vpop.f32.mrf.mxu0
        %v4640 = vadd.f32 0.0, %v4639
        %4641 = vdwg.mxu0
        %4642 = vmatprep.subr.mxu0 0.0
        %4643 = vmatpush1.msra.mxu0 0.0
        %4644 = vmatprep.subr.mxu0 0.0
        %4645 = vmatpush1.msra.mxu0 0.0
        %4646 = vmatprep.subr.mxu0 0.0
        %4647 = vmatpush1.msra.mxu0 0.0
        %4648 = vmatprep.subr.mxu0 0.0
        %4649 = vmatpush1.msra.mxu0 0.0
        %4650 = vmatprep.subr.mxu0 0.0
        %4651 = vmatpush1.msra.mxu0 0.0
        %4652 = vmatprep.subr.mxu0 0.0
        %4653 = vmatpush1.msra.mxu0 0.0
        %4654 = vmatprep.subr.mxu0 0.0
        %4655 = vmatpush1.msra.mxu0 0.0
        %4656 = vmatprep.subr.mxu0 0.0
        %4657 = vmatpush1.msra.mxu0 0.0
        %4658 = vmatprep.subr.mxu0 0.0
        %4659 = vmatpush1.msra.mxu0 0.0
        %4660 = vmatprep.subr.mxu0 0.0
        %4661 = vmatpush1.msra.mxu0 0.0
        %4662 = vmatprep.subr.mxu0 0.0
        %4663 = vmatpush1.msra.mxu0 0.0
        %4664 = vmatprep.subr.mxu0 0.0
        %4665 = vmatpush1.msra.mxu0 0.0
        %4666 = vmatprep.subr.mxu0 0.0
        %4667 = vmatpush1.msra.mxu0 0.0
        %4668 = vmatprep.subr.mxu0 0.0
        %4669 = vmatpush1.msra.mxu0 0.0
        %4670 = vmatprep.subr.mxu0 0.0
        %4671 = vmatpush1.msra.mxu0 0.0
        %4672 = vmatprep.subr.mxu0 0.0
        %4673 = vmatpush1.msra.mxu0 %v4564
        %4674 = vmatprep.subr.mxu0 0.0
        %4675 = vmatpush2.msra.mxu0 0.0
        %4676 = vmatprep.subr.mxu0 0.0
        %4677 = vmatpush2.msra.mxu0 0.0
        %4678 = vmatprep.subr.mxu0 0.0
        %4679 = vmatpush2.msra.mxu0 0.0
        %4680 = vmatprep.subr.mxu0 0.0
        %4681 = vmatpush2.msra.mxu0 0.0
        %4682 = vmatprep.subr.mxu0 0.0
        %4683 = vmatpush2.msra.mxu0 0.0
        %4684 = vmatprep.subr.mxu0 0.0
        %4685 = vmatpush2.msra.mxu0 0.0
        %4686 = vmatprep.subr.mxu0 0.0
        %4687 = vmatpush2.msra.mxu0 0.0
        %4688 = vmatprep.subr.mxu0 0.0
        %4689 = vmatpush2.msra.mxu0 0.0
        %4690 = vmatprep.subr.mxu0 0.0
        %4691 = vmatpush2.msra.mxu0 0.0
        %4692 = vmatprep.subr.mxu0 0.0
        %4693 = vmatpush2.msra.mxu0 0.0
        %4694 = vmatprep.subr.mxu0 0.0
        %4695 = vmatpush2.msra.mxu0 0.0
        %4696 = vmatprep.subr.mxu0 0.0
        %4697 = vmatpush2.msra.mxu0 0.0
        %4698 = vmatprep.subr.mxu0 0.0
        %4699 = vmatpush2.msra.mxu0 0.0
        %4700 = vmatprep.subr.mxu0 0.0
        %4701 = vmatpush2.msra.mxu0 0.0
        %4702 = vmatprep.subr.mxu0 0.0
        %4703 = vmatpush2.msra.mxu0 0.0
        %4704 = vmatprep.subr.mxu0 0.0
        %4705 = vmatpush2.msra.mxu0 0.0
        %4706 = vmatprep.mubr.f32.mxu0 0.0
        %4707 = vmatmul.mubr.f32.gmra.mxu0 %v4569
        %v4708 = vpop.f32.mrf.mxu0
        %v4709 = vadd.f32 0.0, %v4708
        %v4710 = vpop.f32.mrf.mxu0
        %4711 = vdwg.mxu0
        %v4712 = vadd.f32 %v4549, %v4638
        %v4713 = vadd.f32 %v4550, %v4640
        %v4714 = vadd.f32 %v4551, %v4709
        %v4715 = vld [vmem:[%s2] sm:$0xff]
        %4717 = vset.pattern.permute.xlu0 0
        %4718 = vperm.xlu0 %4717, %v4715
        %v4719 = vpop.permute.xlu0 %4718
        %v4721 = vmul.f32 %v4712, %v4719
        %v4722 = vmul.f32 %v4713, %v4719
        %v4723 = vmul.f32 %v4714, %v4719
        %v4724 = vld [vmem:[%s3] sm:$0xff]
        %4726 = vset.pattern.permute.xlu0 0
        %4727 = vperm.xlu0 %4726, %v4724
        %v4728 = vpop.permute.xlu0 %4727
        %v4730 = vadd.f32 %v4721, %v4728
        %v4731 = vadd.f32 %v4722, %v4728
        %v4732 = vadd.f32 %v4723, %v4728
        %vm4733 = vcmp.ge.f32.partialorder %v4730, 0.0
        %vm4734 = vcmp.ge.f32.partialorder %v4731, 0.0
        %vm4735 = vcmp.ge.f32.partialorder %v4732, 0.0
        %v4736 = vmul.f32 %v4730, 0.01
        %v4737 = vmul.f32 %v4731, 0.01
        %v4738 = vmul.f32 %v4732, 0.01
        %v4739 = vsel %vm4733, %v4730, %v4736
        %v4740 = vsel %vm4734, %v4731, %v4737
        %v4741 = vsel %vm4735, %v4732, %v4738
        %4742 = vst [vmem:[%s172] sm:$0xff] %v4739
        %4743 = vst [vmem:[%s172 + $0x8] sm:$0xff] %v4740
        %4744 = vst [vmem:[%s172 + $0x10] sm:$0xff] %v4741
        %s4745 = sand.u32 %s112, 1
        %s4746 = scalar_lea.sflag [#allocation5], %s4745
        %s4747 = sand.u32 %s112, 1
        %s4748 = smul.addr %s4747, 24
        %s4749 = scalar_lea.vmem [#allocation4], %s4748
        // Predicated region
        $region65: #{tpu_custom_call.1} parent=31 // pred_check
          %p4750 = pneg %p122
        $region66: #{tpu_custom_call.1} parent=31 // pred_check_branch
          %4752 = sbr.rel (%p4750) target = $region68
        $region67: #{tpu_custom_call.1} parent=31 // pred_region
          %s4753 = smul.u32 3, %s25
          %s4755 = ssub.s32 384, 384
          %4756 = vsyncadd %s4746, %s4755
          %s4757 = smul.addr %s24, 3
          %s4758 = sadd.s32 %s4753, %s4757
          %s4759 = smul.addr %s23, 24
          %s4760 = sadd.s32 %s4758, %s4759
          %s4761 = smul.addr %s4760, 128
          %s4762 = scalar_lea.hbm %s4, %s4761
          %s4764 = sshll.u32 %s4749, 4
          %s4765 = int_to_ptr.vmem [resolvable:$true] %s4764
          %4767 = dma.vmem_to_hbm [thread:$0]  %s4765, 384, %s4762, %s4746
        $region68: #{tpu_custom_call.1} parent=31 // pred_fallthru
          _
      $region32: #{tpu_custom_call.1} parent=5 // pred_fallthru
        _
      %p4768 = scmp.le.s32.totalorder 2, %s13
      // Predicated region
      $region69: #{tpu_custom_call.1} parent=5 // pred_check
        %p4769 = pneg %p4768
      $region70: #{tpu_custom_call.1} parent=5 // pred_check_branch
        %4771 = sbr.rel (%p4769) target = $region72
      $region71: #{tpu_custom_call.1} parent=5 // pred_region
        %s4772 = ssub.s32 %s13, 2
        // Predicated region
        $region73: #{tpu_custom_call.1} parent=71 // pred_check
          %p4773 = pneg %p128
        $region74: #{tpu_custom_call.1} parent=71 // pred_check_branch
          %4775 = sbr.rel (%p4773) target = $region76
        $region75: #{tpu_custom_call.1} parent=71 // pred_region
          %s4776 = sand.u32 %s113, 1
          %s4777 = scalar_lea.sflag [#allocation5], %s4776
          %s4778 = sand.u32 %s113, 1
          %s4779 = smul.addr %s4778, 24
          %s4780 = scalar_lea.vmem [#allocation4], %s4779
          %4781 = dma.done %s4777, 384
        $region76: #{tpu_custom_call.1} parent=71 // pred_fallthru
          _
      $region72: #{tpu_custom_call.1} parent=5 // pred_fallthru
        _
    $region6: #{tpu_custom_call.1} parent=1 // loop_footer
      %s17 = sadd.s32 1, %s13
    $region7: #{tpu_custom_call.1} parent=1 // loop_footer_branch
      %12 = sbr.rel target = $region3
    $region8: #{tpu_custom_call.1} parent=1 // loop_exit
      _
    %4782 = vsyncpa [#allocation5], 1
    %s4783 = scalar_lea.sflag [#allocation5], 1
    %4784 = vsyncpa %s4783, 1
  %4785 = vsyncmov [#allocation3]
  %s4786 = vpop.sfrf %4785
  %p4787 = scmp.eq.s32.totalorder %s4786, 0
  %p4788 = pneg %p4787
  %4790 = shalt.err (%p4788)
  %s4791 = scalar_lea.sflag [#allocation3], 1
  %4792 = vsyncmov %s4791
  %s4793 = vpop.sfrf %4792
  %p4794 = scmp.eq.s32.totalorder %s4793, 0
  %p4795 = pneg %p4794
  %4797 = shalt.err (%p4795)
  %s4798 = scalar_lea.sflag [#allocation3], 2
  %4799 = vsyncmov %s4798
  %s4800 = vpop.sfrf %4799
  %p4801 = scmp.eq.s32.totalorder %s4800, 0
  %p4802 = pneg %p4801
  %4804 = shalt.err (%p4802)
  %s4805 = scalar_lea.sflag [#allocation3], 3
  %4806 = vsyncmov %s4805
  %s4807 = vpop.sfrf %4806
  %p4808 = scmp.eq.s32.totalorder %s4807, 0
  %p4809 = pneg %p4808
  %4811 = shalt.err (%p4809)

</llo_original>
